<compile_context>
chip_gen: v7x
topology: tpu7x:2x2x1
jax: 0.10.0
libtpu: 0.0.40
codegen_flags: <defaults>
</compile_context>

<pallas_src>
import string

import jax
import jax.numpy as jnp
from jax.experimental import pallas as pl
from jax.experimental.pallas import tpu as pltpu


def _mlp_io_embed_kernel(ids_ref, idx_ref, w1tab_ref, b1_ref, w2_ref, b2_ref,
                         part_ref):
    k = pl.program_id(1)

    @pl.when(k == 0)
    def _():
        part_ref[...] = jnp.zeros_like(part_ref)

    tile_n, n_slots = ids_ref.shape
    h_dim = w1tab_ref.shape[1]
    vpad = w1tab_ref.shape[0] // n_slots
    n_groups = part_ref.shape[1]

    # ---- layer 1: fused embedding gather + Linear as ONE merged matmul ----
    # Per-slot lane-native one-hot compares, concatenated along lanes at
    # 128-column boundaries (free), then a single bf16 MXU dot with
    # K = n_slots * vpad.  Compares use bf16 operands (values < 128 exact).
    ids_bf = ids_ref[...].astype(jnp.float32).astype(jnp.bfloat16)
    vocab_iota = jax.lax.broadcasted_iota(
        jnp.int32, (tile_n, vpad), 1).astype(jnp.float32).astype(jnp.bfloat16)
    onehot = jnp.concatenate(
        [(ids_bf[:, p:p + 1] == vocab_iota).astype(jnp.bfloat16)
         for p in range(n_slots)],
        axis=1)                                            # (tile_n, slots*vpad)
    h1 = jnp.dot(onehot, w1tab_ref[...], preferred_element_type=jnp.float32)
    h1 = jnp.maximum(h1 + b1_ref[...], 0.0)                # ReLU

    # ---- layer 2 (tiny) kept in f32: avoids an extra bf16 rounding ----
    h2 = jnp.dot(h1, w2_ref[...], preferred_element_type=jnp.float32)
    h2 = jnp.maximum(h2 + b2_ref[...], 0.0)                # act_last = ReLU

    # ---- scatter-sum by group id as a tiny f32 one-hot matmul ----
    group_iota = jax.lax.broadcasted_iota(jnp.int32, (n_groups, tile_n), 0)
    group_onehot = (group_iota == idx_ref[...]).astype(jnp.float32)
    contrib = jnp.dot(group_onehot, h2, preferred_element_type=jnp.float32)
    part_ref[...] += contrib[None, :, :]


def mlp_io_embed_forward(params, padded_i, padded_o, scatter_idx, num_groups,
                         tile_n=1024):
    """JAX wrapper: fold tables into W1, pad/tile rows, launch the kernel."""
    n, li = padded_i.shape
    lo = padded_o.shape[1]
    n_slots = li + lo
    h_dim = params["w2"].shape[1]
    vocab, tok_dim = params["input_tok_embed"].shape
    vpad = 128 * ((vocab + 127) // 128)       # lane-dense one-hot columns

    # --- fold the two tiny embedding tables into W1 (exact in f32), one
    #     vpad-row block per token slot, flattened for the merged layer-1 dot.
    w1 = params["w1"].astype(jnp.float32).reshape(n_slots, tok_dim, h_dim)
    tab_i = params["input_tok_embed"].astype(jnp.float32)
    tab_o = params["output_tok_embed"].astype(jnp.float32)
    tables = jnp.concatenate(
        [jnp.broadcast_to(tab_i[None], (li, vocab, tok_dim)),
         jnp.broadcast_to(tab_o[None], (lo, vocab, tok_dim))], axis=0)
    w1tab = jnp.einsum("pvd,pdh->pvh", tables, w1)          # (slots, vocab, H)
    w1tab = jnp.pad(w1tab, ((0, 0), (0, vpad - vocab), (0, 0)))
    w1tab = w1tab.reshape(n_slots * vpad, h_dim).astype(jnp.bfloat16)
    kdim = n_slots * vpad

    # --- row tiling: tiles are always a multiple of 128 lanes so the (1, tn)
    #     group-id BlockSpec lowers for any caller-supplied tile size.
    tile_n = max(128, 128 * (tile_n // 128))
    tn = min(tile_n, 128 * ((n + 127) // 128))
    n_tiles = -(-n // tn)
    # Leading "parallel" axis lets multi-TensorCore chips (v7x / megacore)
    # split row tiles across cores; each split owns a disjoint partial output.
    num_splits = 2 if n_tiles >= 2 else 1
    n_inner = -(-n_tiles // num_splits)
    n_pad = num_splits * n_inner * tn

    ids = jnp.concatenate([padded_i, padded_o], axis=1).astype(jnp.int32)
    ids = jnp.pad(ids, ((0, n_pad - n), (0, 0)))
    # padding rows get group id == num_groups -> matched by no one-hot row.
    idx = jnp.pad(scatter_idx.astype(jnp.int32), (0, n_pad - n),
                  constant_values=num_groups).reshape(1, n_pad)

    b1 = params["b1"].reshape(1, h_dim).astype(jnp.float32)
    b2 = params["b2"].reshape(1, h_dim).astype(jnp.float32)
    w2 = params["w2"].astype(jnp.float32)

    cost = pl.CostEstimate(
        flops=2 * n_pad * (kdim * h_dim + h_dim * h_dim + num_groups * h_dim),
        transcendentals=0,
        bytes_accessed=int(n_pad * n_slots * 4 + n_pad * 4 + kdim * h_dim * 2
                           + h_dim * h_dim * 4 + 2 * h_dim * 4
                           + num_splits * num_groups * h_dim * 4),
    )

    partials = pl.pallas_call(
        _mlp_io_embed_kernel,
        out_shape=jax.ShapeDtypeStruct((num_splits, num_groups, h_dim),
                                       jnp.float32),
        grid_spec=pltpu.PrefetchScalarGridSpec(
            num_scalar_prefetch=0,
            grid=(num_splits, n_inner),
            in_specs=[
                pl.BlockSpec((tn, n_slots),
                             lambda c, k: (c * n_inner + k, 0)),      # ids tile
                pl.BlockSpec((1, tn),
                             lambda c, k: (0, c * n_inner + k)),      # group ids
                pl.BlockSpec((kdim, h_dim), lambda c, k: (0, 0)),     # folded W1
                pl.BlockSpec((1, h_dim), lambda c, k: (0, 0)),        # b1
                pl.BlockSpec((h_dim, h_dim), lambda c, k: (0, 0)),    # w2
                pl.BlockSpec((1, h_dim), lambda c, k: (0, 0)),        # b2
            ],
            out_specs=pl.BlockSpec((1, num_groups, h_dim),
                                   lambda c, k: (c, 0, 0)),
        ),
        compiler_params=pltpu.CompilerParams(
            dimension_semantics=("parallel", "arbitrary"),
            vmem_limit_bytes=32 * 1024 * 1024,
        ),
        cost_estimate=cost,
    )(ids, idx, w1tab, b1, w2, b2)

    # mean = (sum of per-core partial sums) * (1/count); exact f32 in wrapper.
    counts = jnp.zeros((num_groups,), jnp.float32).at[
        scatter_idx.astype(jnp.int32)].add(1.0)
    inv_counts = (1.0 / jnp.maximum(counts, 1.0)).reshape(num_groups, 1)
    ctx_embed = partials.sum(axis=0) * inv_counts

    # Matches MLPIOEmbed.forward return signature.
    return None, None, ctx_embed


def _reference(params, padded_i, padded_o, scatter_idx, num_groups):
    """Pure-JAX f32 reference for correctness checking."""
    n = padded_i.shape[0]
    emb_i = params["input_tok_embed"][padded_i].reshape(n, -1)
    emb_o = params["output_tok_embed"][padded_o].reshape(n, -1)
    x = jnp.concatenate([emb_i, emb_o], axis=-1)
    h = jnp.maximum(x @ params["w1"] + params["b1"], 0.0)
    h = jnp.maximum(h @ params["w2"] + params["b2"], 0.0)
    onehot = (scatter_idx[None, :] == jnp.arange(num_groups)[:, None]).astype(jnp.float32)
    counts = onehot.sum(axis=1, keepdims=True)
    return onehot @ h / jnp.maximum(counts, 1.0)


if __name__ == "__main__":
    # Hyperparameters implied by MLPIOEmbed.__init__ (synthetic, deterministic).
    STR_VOCAB = string.printable[:-6]        # 94 visible characters
    vocab_size = len(STR_VOCAB) + 1          # + 'unk'
    tok_dim = 4                              # nn.Embedding(len(vocab), 4)
    max_input_len = 8
    max_output_len = 8
    embed_dim = 32                           # args.embed_dim, n_hidden=2
    batch = 2                                # number of programs
    num_public_io = 4                        # args.numPublicIO
    n_pairs = batch * num_public_io          # rows produced by cook_raw_io

    key = jax.random.PRNGKey(0)
    keys = jax.random.split(key, 8)
    d_in = tok_dim * (max_input_len + max_output_len)

    params = {
        "input_tok_embed": 0.1 * jax.random.normal(keys[0], (vocab_size, tok_dim), jnp.float32),
        "output_tok_embed": 0.1 * jax.random.normal(keys[1], (vocab_size, tok_dim), jnp.float32),
        "w1": 0.1 * jax.random.normal(keys[2], (d_in, embed_dim), jnp.float32),
        "b1": 0.1 * jax.random.normal(keys[3], (1, embed_dim), jnp.float32),
        "w2": 0.1 * jax.random.normal(keys[4], (embed_dim, embed_dim), jnp.float32),
        "b2": 0.1 * jax.random.normal(keys[5], (1, embed_dim), jnp.float32),
    }

    # Deterministic "cooked" data: padded token ids + per-row sample index.
    padded_i = jax.random.randint(keys[6], (n_pairs, max_input_len), 0, vocab_size, jnp.int32)
    padded_o = jax.random.randint(keys[7], (n_pairs, max_output_len), 0, vocab_size, jnp.int32)
    scatter_idx = jnp.repeat(jnp.arange(batch, dtype=jnp.int32), num_public_io)

    _, _, ctx = mlp_io_embed_forward(params, padded_i, padded_o, scatter_idx, batch)
    ctx = jax.block_until_ready(ctx)

    ref = _reference(params, padded_i, padded_o, scatter_idx, batch)
    assert ctx.shape == (batch, embed_dim)
    # bf16 layer-1 operands (f32 accumulation, f32 epilogue) -> small tolerance.
    assert jnp.allclose(ctx, ref, atol=5e-3, rtol=2e-2), (
        f"max abs err {float(jnp.max(jnp.abs(ctx - ref)))}")
    print("KERNEL_OK")
</pallas_src>

<mosaic_0001>
module attributes {stable_mosaic.version = 11 : i64} {
  func.func @_mlp_io_embed_kernel(%arg0: i32, %arg1: i32, %arg2: memref<128x16xi32, #tpu.memory_space<vmem>>, %arg3: memref<1x128xi32, #tpu.memory_space<vmem>>, %arg4: memref<2048x32xbf16, #tpu.memory_space<vmem>>, %arg5: memref<1x32xf32, #tpu.memory_space<vmem>>, %arg6: memref<32x32xf32, #tpu.memory_space<vmem>>, %arg7: memref<1x32xf32, #tpu.memory_space<vmem>>, %arg8: memref<1x2x32xf32, #tpu.memory_space<vmem>>) attributes {dimension_semantics = [#tpu.dimension_semantics<parallel>, #tpu.dimension_semantics<arbitrary>], iteration_bounds = array<i64: 1, 1>, scalar_prefetch = 0 : i64, scratch_operands = 0 : i64, tpu.core_type = #tpu.core_type<tc>, window_params = [{transform_indices = @transform_0, window_bounds = array<i64: 128, 16>}, {transform_indices = @transform_1, window_bounds = array<i64: 1, 128>}, {pipeline_mode = #tpu.pipeline_mode<synchronous>, transform_indices = @transform_2, window_bounds = array<i64: 2048, 32>}, {pipeline_mode = #tpu.pipeline_mode<synchronous>, transform_indices = @transform_3, window_bounds = array<i64: 1, 32>}, {pipeline_mode = #tpu.pipeline_mode<synchronous>, transform_indices = @transform_4, window_bounds = array<i64: 32, 32>}, {pipeline_mode = #tpu.pipeline_mode<synchronous>, transform_indices = @transform_5, window_bounds = array<i64: 1, 32>}, {transform_indices = @transform_6, window_bounds = array<i64: 1, 2, 32>}]} {
    %c0_i32 = arith.constant 0 : i32
    %0 = arith.cmpi eq, %arg1, %c0_i32 : i32
    %1 = arith.extui %0 : i1 to i32
    %c0_i32_0 = arith.constant 0 : i32
    %2 = arith.cmpi ne, %1, %c0_i32_0 : i32
    scf.if %2 {
      %cst_22 = arith.constant 0.000000e+00 : f32
      %131 = vector.broadcast %cst_22 : f32 to vector<1x2x32xf32>
      %c0_23 = arith.constant 0 : index
      %c0_24 = arith.constant 0 : index
      %c0_25 = arith.constant 0 : index
      %132 = vector.load %arg8[%c0_23, %c0_24, %c0_25] : memref<1x2x32xf32, #tpu.memory_space<vmem>>, vector<1x2x32xf32>
      tpu.vector_store %arg8[%c0_23, %c0_24, %c0_25], %131 {strides = array<i32>} : memref<1x2x32xf32, #tpu.memory_space<vmem>>, vector<1x2x32xf32>,
    } else {
    }
    %c0 = arith.constant 0 : index
    %c0_1 = arith.constant 0 : index
    %3 = vector.load %arg2[%c0, %c0_1] : memref<128x16xi32, #tpu.memory_space<vmem>>, vector<128x16xi32>
    %4 = arith.sitofp %3 : vector<128x16xi32> to vector<128x16xf32>
    %5 = arith.truncf %4 : vector<128x16xf32> to vector<128x16xbf16>
    %6 = tpu.iota {dimensions = array<i32: 1>} : vector<128x128xi32>
    %7 = arith.sitofp %6 : vector<128x128xi32> to vector<128x128xf32>
    %8 = arith.truncf %7 : vector<128x128xf32> to vector<128x128xbf16>
    %9 = vector.extract_strided_slice %5 {offsets = [0, 0], sizes = [128, 1], strides = [1, 1]} : vector<128x16xbf16> to vector<128x1xbf16>
    %10 = vector.broadcast %9 : vector<128x1xbf16> to vector<128x128xbf16>
    %11 = arith.cmpf oeq, %10, %8 : vector<128x128xbf16>
    %12 = arith.extui %11 : vector<128x128xi1> to vector<128x128xi32>
    %13 = arith.sitofp %12 : vector<128x128xi32> to vector<128x128xf32>
    %14 = arith.truncf %13 : vector<128x128xf32> to vector<128x128xbf16>
    %15 = vector.extract_strided_slice %5 {offsets = [0, 1], sizes = [128, 1], strides = [1, 1]} : vector<128x16xbf16> to vector<128x1xbf16>
    %16 = vector.broadcast %15 : vector<128x1xbf16> to vector<128x128xbf16>
    %17 = arith.cmpf oeq, %16, %8 : vector<128x128xbf16>
    %18 = arith.extui %17 : vector<128x128xi1> to vector<128x128xi32>
    %19 = arith.sitofp %18 : vector<128x128xi32> to vector<128x128xf32>
    %20 = arith.truncf %19 : vector<128x128xf32> to vector<128x128xbf16>
    %21 = vector.extract_strided_slice %5 {offsets = [0, 2], sizes = [128, 1], strides = [1, 1]} : vector<128x16xbf16> to vector<128x1xbf16>
    %22 = vector.broadcast %21 : vector<128x1xbf16> to vector<128x128xbf16>
    %23 = arith.cmpf oeq, %22, %8 : vector<128x128xbf16>
    %24 = arith.extui %23 : vector<128x128xi1> to vector<128x128xi32>
    %25 = arith.sitofp %24 : vector<128x128xi32> to vector<128x128xf32>
    %26 = arith.truncf %25 : vector<128x128xf32> to vector<128x128xbf16>
    %27 = vector.extract_strided_slice %5 {offsets = [0, 3], sizes = [128, 1], strides = [1, 1]} : vector<128x16xbf16> to vector<128x1xbf16>
    %28 = vector.broadcast %27 : vector<128x1xbf16> to vector<128x128xbf16>
    %29 = arith.cmpf oeq, %28, %8 : vector<128x128xbf16>
    %30 = arith.extui %29 : vector<128x128xi1> to vector<128x128xi32>
    %31 = arith.sitofp %30 : vector<128x128xi32> to vector<128x128xf32>
    %32 = arith.truncf %31 : vector<128x128xf32> to vector<128x128xbf16>
    %33 = vector.extract_strided_slice %5 {offsets = [0, 4], sizes = [128, 1], strides = [1, 1]} : vector<128x16xbf16> to vector<128x1xbf16>
    %34 = vector.broadcast %33 : vector<128x1xbf16> to vector<128x128xbf16>
    %35 = arith.cmpf oeq, %34, %8 : vector<128x128xbf16>
    %36 = arith.extui %35 : vector<128x128xi1> to vector<128x128xi32>
    %37 = arith.sitofp %36 : vector<128x128xi32> to vector<128x128xf32>
    %38 = arith.truncf %37 : vector<128x128xf32> to vector<128x128xbf16>
    %39 = vector.extract_strided_slice %5 {offsets = [0, 5], sizes = [128, 1], strides = [1, 1]} : vector<128x16xbf16> to vector<128x1xbf16>
    %40 = vector.broadcast %39 : vector<128x1xbf16> to vector<128x128xbf16>
    %41 = arith.cmpf oeq, %40, %8 : vector<128x128xbf16>
    %42 = arith.extui %41 : vector<128x128xi1> to vector<128x128xi32>
    %43 = arith.sitofp %42 : vector<128x128xi32> to vector<128x128xf32>
    %44 = arith.truncf %43 : vector<128x128xf32> to vector<128x128xbf16>
    %45 = vector.extract_strided_slice %5 {offsets = [0, 6], sizes = [128, 1], strides = [1, 1]} : vector<128x16xbf16> to vector<128x1xbf16>
    %46 = vector.broadcast %45 : vector<128x1xbf16> to vector<128x128xbf16>
    %47 = arith.cmpf oeq, %46, %8 : vector<128x128xbf16>
    %48 = arith.extui %47 : vector<128x128xi1> to vector<128x128xi32>
    %49 = arith.sitofp %48 : vector<128x128xi32> to vector<128x128xf32>
    %50 = arith.truncf %49 : vector<128x128xf32> to vector<128x128xbf16>
    %51 = vector.extract_strided_slice %5 {offsets = [0, 7], sizes = [128, 1], strides = [1, 1]} : vector<128x16xbf16> to vector<128x1xbf16>
    %52 = vector.broadcast %51 : vector<128x1xbf16> to vector<128x128xbf16>
    %53 = arith.cmpf oeq, %52, %8 : vector<128x128xbf16>
    %54 = arith.extui %53 : vector<128x128xi1> to vector<128x128xi32>
    %55 = arith.sitofp %54 : vector<128x128xi32> to vector<128x128xf32>
    %56 = arith.truncf %55 : vector<128x128xf32> to vector<128x128xbf16>
    %57 = vector.extract_strided_slice %5 {offsets = [0, 8], sizes = [128, 1], strides = [1, 1]} : vector<128x16xbf16> to vector<128x1xbf16>
    %58 = vector.broadcast %57 : vector<128x1xbf16> to vector<128x128xbf16>
    %59 = arith.cmpf oeq, %58, %8 : vector<128x128xbf16>
    %60 = arith.extui %59 : vector<128x128xi1> to vector<128x128xi32>
    %61 = arith.sitofp %60 : vector<128x128xi32> to vector<128x128xf32>
    %62 = arith.truncf %61 : vector<128x128xf32> to vector<128x128xbf16>
    %63 = vector.extract_strided_slice %5 {offsets = [0, 9], sizes = [128, 1], strides = [1, 1]} : vector<128x16xbf16> to vector<128x1xbf16>
    %64 = vector.broadcast %63 : vector<128x1xbf16> to vector<128x128xbf16>
    %65 = arith.cmpf oeq, %64, %8 : vector<128x128xbf16>
    %66 = arith.extui %65 : vector<128x128xi1> to vector<128x128xi32>
    %67 = arith.sitofp %66 : vector<128x128xi32> to vector<128x128xf32>
    %68 = arith.truncf %67 : vector<128x128xf32> to vector<128x128xbf16>
    %69 = vector.extract_strided_slice %5 {offsets = [0, 10], sizes = [128, 1], strides = [1, 1]} : vector<128x16xbf16> to vector<128x1xbf16>
    %70 = vector.broadcast %69 : vector<128x1xbf16> to vector<128x128xbf16>
    %71 = arith.cmpf oeq, %70, %8 : vector<128x128xbf16>
    %72 = arith.extui %71 : vector<128x128xi1> to vector<128x128xi32>
    %73 = arith.sitofp %72 : vector<128x128xi32> to vector<128x128xf32>
    %74 = arith.truncf %73 : vector<128x128xf32> to vector<128x128xbf16>
    %75 = vector.extract_strided_slice %5 {offsets = [0, 11], sizes = [128, 1], strides = [1, 1]} : vector<128x16xbf16> to vector<128x1xbf16>
    %76 = vector.broadcast %75 : vector<128x1xbf16> to vector<128x128xbf16>
    %77 = arith.cmpf oeq, %76, %8 : vector<128x128xbf16>
    %78 = arith.extui %77 : vector<128x128xi1> to vector<128x128xi32>
    %79 = arith.sitofp %78 : vector<128x128xi32> to vector<128x128xf32>
    %80 = arith.truncf %79 : vector<128x128xf32> to vector<128x128xbf16>
    %81 = vector.extract_strided_slice %5 {offsets = [0, 12], sizes = [128, 1], strides = [1, 1]} : vector<128x16xbf16> to vector<128x1xbf16>
    %82 = vector.broadcast %81 : vector<128x1xbf16> to vector<128x128xbf16>
    %83 = arith.cmpf oeq, %82, %8 : vector<128x128xbf16>
    %84 = arith.extui %83 : vector<128x128xi1> to vector<128x128xi32>
    %85 = arith.sitofp %84 : vector<128x128xi32> to vector<128x128xf32>
    %86 = arith.truncf %85 : vector<128x128xf32> to vector<128x128xbf16>
    %87 = vector.extract_strided_slice %5 {offsets = [0, 13], sizes = [128, 1], strides = [1, 1]} : vector<128x16xbf16> to vector<128x1xbf16>
    %88 = vector.broadcast %87 : vector<128x1xbf16> to vector<128x128xbf16>
    %89 = arith.cmpf oeq, %88, %8 : vector<128x128xbf16>
    %90 = arith.extui %89 : vector<128x128xi1> to vector<128x128xi32>
    %91 = arith.sitofp %90 : vector<128x128xi32> to vector<128x128xf32>
    %92 = arith.truncf %91 : vector<128x128xf32> to vector<128x128xbf16>
    %93 = vector.extract_strided_slice %5 {offsets = [0, 14], sizes = [128, 1], strides = [1, 1]} : vector<128x16xbf16> to vector<128x1xbf16>
    %94 = vector.broadcast %93 : vector<128x1xbf16> to vector<128x128xbf16>
    %95 = arith.cmpf oeq, %94, %8 : vector<128x128xbf16>
    %96 = arith.extui %95 : vector<128x128xi1> to vector<128x128xi32>
    %97 = arith.sitofp %96 : vector<128x128xi32> to vector<128x128xf32>
    %98 = arith.truncf %97 : vector<128x128xf32> to vector<128x128xbf16>
    %99 = vector.extract_strided_slice %5 {offsets = [0, 15], sizes = [128, 1], strides = [1, 1]} : vector<128x16xbf16> to vector<128x1xbf16>
    %100 = vector.broadcast %99 : vector<128x1xbf16> to vector<128x128xbf16>
    %101 = arith.cmpf oeq, %100, %8 : vector<128x128xbf16>
    %102 = arith.extui %101 : vector<128x128xi1> to vector<128x128xi32>
    %103 = arith.sitofp %102 : vector<128x128xi32> to vector<128x128xf32>
    %104 = arith.truncf %103 : vector<128x128xf32> to vector<128x128xbf16>
    %105 = tpu.concatenate %14, %20, %26, %32, %38, %44, %50, %56, %62, %68, %74, %80, %86, %92, %98, %104 in 1 : vector<128x128xbf16>, vector<128x128xbf16>, vector<128x128xbf16>, vector<128x128xbf16>, vector<128x128xbf16>, vector<128x128xbf16>, vector<128x128xbf16>, vector<128x128xbf16>, vector<128x128xbf16>, vector<128x128xbf16>, vector<128x128xbf16>, vector<128x128xbf16>, vector<128x128xbf16>, vector<128x128xbf16>, vector<128x128xbf16>, vector<128x128xbf16> -> vector<128x2048xbf16>
    %c0_2 = arith.constant 0 : index
    %c0_3 = arith.constant 0 : index
    %106 = vector.load %arg4[%c0_2, %c0_3] : memref<2048x32xbf16, #tpu.memory_space<vmem>>, vector<2048x32xbf16>
    %cst = arith.constant dense<0.000000e+00> : vector<128x32xf32>
    %107 = tpu.matmul %105, %106, %cst {dimension_numbers = #tpu.dot_dimension_numbers<[1], [0], [0], [1], [0, 0, 1, 1], [], []>} : vector<128x2048xbf16>, vector<2048x32xbf16>, vector<128x32xf32> -> vector<128x32xf32>
    %c0_4 = arith.constant 0 : index
    %c0_5 = arith.constant 0 : index
    %108 = vector.load %arg5[%c0_4, %c0_5] : memref<1x32xf32, #tpu.memory_space<vmem>>, vector<1x32xf32>
    %109 = vector.broadcast %108 : vector<1x32xf32> to vector<128x32xf32>
    %110 = arith.addf %107, %109 : vector<128x32xf32>
    %cst_6 = arith.constant 0.000000e+00 : f32
    %111 = vector.broadcast %cst_6 : f32 to vector<128x32xf32>
    %112 = arith.maximumf %110, %111 : vector<128x32xf32>
    %c0_7 = arith.constant 0 : index
    %c0_8 = arith.constant 0 : index
    %113 = vector.load %arg6[%c0_7, %c0_8] : memref<32x32xf32, #tpu.memory_space<vmem>>, vector<32x32xf32>
    %cst_9 = arith.constant dense<0.000000e+00> : vector<128x32xf32>
    %114 = tpu.matmul %112, %113, %cst_9 {dimension_numbers = #tpu.dot_dimension_numbers<[1], [0], [0], [1], [0, 0, 1, 1], [], []>} : vector<128x32xf32>, vector<32x32xf32>, vector<128x32xf32> -> vector<128x32xf32>
    %c0_10 = arith.constant 0 : index
    %c0_11 = arith.constant 0 : index
    %115 = vector.load %arg7[%c0_10, %c0_11] : memref<1x32xf32, #tpu.memory_space<vmem>>, vector<1x32xf32>
    %116 = vector.broadcast %115 : vector<1x32xf32> to vector<128x32xf32>
    %117 = arith.addf %114, %116 : vector<128x32xf32>
    %cst_12 = arith.constant 0.000000e+00 : f32
    %118 = vector.broadcast %cst_12 : f32 to vector<128x32xf32>
    %119 = arith.maximumf %117, %118 : vector<128x32xf32>
    %120 = tpu.iota {dimensions = array<i32: 0>} : vector<2x128xi32>
    %c0_13 = arith.constant 0 : index
    %c0_14 = arith.constant 0 : index
    %121 = vector.load %arg3[%c0_13, %c0_14] : memref<1x128xi32, #tpu.memory_space<vmem>>, vector<1x128xi32>
    %122 = vector.broadcast %121 : vector<1x128xi32> to vector<2x128xi32>
    %123 = arith.cmpi eq, %120, %122 : vector<2x128xi32>
    %124 = arith.extui %123 : vector<2x128xi1> to vector<2x128xi32>
    %125 = arith.sitofp %124 : vector<2x128xi32> to vector<2x128xf32>
    %cst_15 = arith.constant dense<0.000000e+00> : vector<2x32xf32>
    %126 = tpu.matmul %125, %119, %cst_15 {dimension_numbers = #tpu.dot_dimension_numbers<[1], [0], [0], [1], [0, 0, 1, 1], [], []>} : vector<2x128xf32>, vector<128x32xf32>, vector<2x32xf32> -> vector<2x32xf32>
    %c0_16 = arith.constant 0 : index
    %c0_17 = arith.constant 0 : index
    %c0_18 = arith.constant 0 : index
    %127 = vector.load %arg8[%c0_16, %c0_17, %c0_18] : memref<1x2x32xf32, #tpu.memory_space<vmem>>, vector<1x2x32xf32>
    %128 = vector.shape_cast %126 : vector<2x32xf32> to vector<1x2x32xf32>
    %129 = arith.addf %127, %128 : vector<1x2x32xf32>
    %c0_19 = arith.constant 0 : index
    %c0_20 = arith.constant 0 : index
    %c0_21 = arith.constant 0 : index
    %130 = vector.load %arg8[%c0_19, %c0_20, %c0_21] : memref<1x2x32xf32, #tpu.memory_space<vmem>>, vector<1x2x32xf32>
    tpu.vector_store %arg8[%c0_19, %c0_20, %c0_21], %129 {strides = array<i32>} : memref<1x2x32xf32, #tpu.memory_space<vmem>>, vector<1x2x32xf32>,
    return
  }
  func.func @transform_0(%arg0: i32, %arg1: i32) -> (i32, i32) {
    %c1_i32 = arith.constant 1 : i32
    %0 = arith.muli %arg0, %c1_i32 : i32
    %1 = arith.addi %0, %arg1 : i32
    %c0_i32 = arith.constant 0 : i32
    %c0_i32_0 = arith.constant 0 : i32
    return %1, %c0_i32 : i32, i32
  }
  func.func @transform_1(%arg0: i32, %arg1: i32) -> (i32, i32) {
    %c1_i32 = arith.constant 1 : i32
    %0 = arith.muli %arg0, %c1_i32 : i32
    %1 = arith.addi %0, %arg1 : i32
    %c0_i32 = arith.constant 0 : i32
    %c0_i32_0 = arith.constant 0 : i32
    return %c0_i32, %1 : i32, i32
  }
  func.func @transform_2(%arg0: i32, %arg1: i32) -> (i32, i32) {
    %c0_i32 = arith.constant 0 : i32
    %c0_i32_0 = arith.constant 0 : i32
    %c0_i32_1 = arith.constant 0 : i32
    return %c0_i32, %c0_i32_0 : i32, i32
  }
  func.func @transform_3(%arg0: i32, %arg1: i32) -> (i32, i32) {
    %c0_i32 = arith.constant 0 : i32
    %c0_i32_0 = arith.constant 0 : i32
    %c0_i32_1 = arith.constant 0 : i32
    return %c0_i32, %c0_i32_0 : i32, i32
  }
  func.func @transform_4(%arg0: i32, %arg1: i32) -> (i32, i32) {
    %c0_i32 = arith.constant 0 : i32
    %c0_i32_0 = arith.constant 0 : i32
    %c0_i32_1 = arith.constant 0 : i32
    return %c0_i32, %c0_i32_0 : i32, i32
  }
  func.func @transform_5(%arg0: i32, %arg1: i32) -> (i32, i32) {
    %c0_i32 = arith.constant 0 : i32
    %c0_i32_0 = arith.constant 0 : i32
    %c0_i32_1 = arith.constant 0 : i32
    return %c0_i32, %c0_i32_0 : i32, i32
  }
  func.func @transform_6(%arg0: i32, %arg1: i32) -> (i32, i32, i32) {
    %c0_i32 = arith.constant 0 : i32
    %c0_i32_0 = arith.constant 0 : i32
    %c0_i32_1 = arith.constant 0 : i32
    return %arg0, %c0_i32, %c0_i32_0 : i32, i32, i32
  }
}

</mosaic_0001>

<llo_original>
// kernel: tpu_custom_call.1
$region0: #{tpu_custom_call.1}
  #allocation0 [shape = 'u32[]', space=smem, size = 0x4, offset = 0x4, fixed_abs, tag = 'smem constant byte address 0x4 - core index']
  #allocation1 [shape = 'u32[144,128]{1,0:T(1,128)}', space=vmem, size = 0x12000, scoped, tag = 'internal scratch']
  %s0 = inlined_call_operand.vmem [shape: s32[128,16], index: 0, kind: input, shape index: {}]
  %s1 = inlined_call_operand.vmem [shape: s32[1,128], index: 1, kind: input, shape index: {}]
  %s2 = inlined_call_operand.vmem [shape: bf16[2048,32], index: 2, kind: input, shape index: {}]
  %s3 = inlined_call_operand.vmem [shape: f32[1,32], index: 3, kind: input, shape index: {}]
  %s4 = inlined_call_operand.vmem [shape: f32[32,32], index: 4, kind: input, shape index: {}]
  %s5 = inlined_call_operand.vmem [shape: f32[1,32], index: 5, kind: input, shape index: {}]
  %s6 = inlined_call_operand.hbm [shape: f32[1,2,32], index: 6, kind: output, shape index: {}]
  %s7 = sld [smem:[#allocation0]]
  $region38: #{tpu_custom_call.1} parent=0
    _
  %s9 = ssub.s32 1, %s7
  %s10 = scalar_select 0, %s9, %s7
  $region1: #{tpu_custom_call.1} parent=0
    #allocation2 [shape = 'u8[1024]{0}', space=vmem, size = 0x400, scoped, tag = 'output window, operand 0, single buffered']
    #allocation3 [shape = 's32[1]{0}', space=sflag, size = 0x4, scoped, tag = 'scoped memory for tpu_custom_call.1']
    %11 = vsyncpa [#allocation3], 0
    // Predicated region
    $region2: #{tpu_custom_call.1} parent=1 // pred_check
      _
    $region3: #{tpu_custom_call.1} parent=1 // pred_check_branch
      %13 = sbr.rel (0) target = $region5
    $region4: #{tpu_custom_call.1} parent=1 // pred_region
      %s14 = sadd.s32 0, 0
      %s15 = smul.u32 16, %s14
      %p16 = scmp.lt.s32.totalorder %s15, 15
      %s17 = scalar_select %p16, %s15, 15
      %s18 = smul.addr %s17, 8
      %s19 = scalar_lea.vmem %s0, %s18
      %s20 = sadd.s32 0, 0
      %s21 = smul.u32 16, %s20
    $region5: #{tpu_custom_call.1} parent=1 // pred_fallthru
      _
    // Predicated region
    $region6: #{tpu_custom_call.1} parent=1 // pred_check
      _
    $region7: #{tpu_custom_call.1} parent=1 // pred_check_branch
      %23 = sbr.rel (0) target = $region9
    $region8: #{tpu_custom_call.1} parent=1 // pred_region
      %s24 = sadd.s32 0, 0
      %p25 = scmp.lt.s32.totalorder %s24, 0
      %s26 = scalar_select %p25, %s24, 0
      %s27 = scalar_lea.vmem %s1, %s26
      %s28 = sadd.s32 0, 0
    $region9: #{tpu_custom_call.1} parent=1 // pred_fallthru
      _
    // Predicated region
    $region10: #{tpu_custom_call.1} parent=1 // pred_check
      _
    $region11: #{tpu_custom_call.1} parent=1 // pred_check_branch
      %30 = sbr.rel (0) target = $region13
    $region12: #{tpu_custom_call.1} parent=1 // pred_region
      _
    $region13: #{tpu_custom_call.1} parent=1 // pred_fallthru
      _
    // Predicated region
    $region14: #{tpu_custom_call.1} parent=1 // pred_check
      _
    $region15: #{tpu_custom_call.1} parent=1 // pred_check_branch
      %32 = sbr.rel (0) target = $region17
    $region16: #{tpu_custom_call.1} parent=1 // pred_region
      _
    $region17: #{tpu_custom_call.1} parent=1 // pred_fallthru
      _
    // Predicated region
    $region18: #{tpu_custom_call.1} parent=1 // pred_check
      _
    $region19: #{tpu_custom_call.1} parent=1 // pred_check_branch
      %34 = sbr.rel (0) target = $region21
    $region20: #{tpu_custom_call.1} parent=1 // pred_region
      _
    $region21: #{tpu_custom_call.1} parent=1 // pred_fallthru
      _
    // Predicated region
    $region22: #{tpu_custom_call.1} parent=1 // pred_check
      _
    $region23: #{tpu_custom_call.1} parent=1 // pred_check_branch
      %36 = sbr.rel (0) target = $region25
    $region24: #{tpu_custom_call.1} parent=1 // pred_region
      _
    $region25: #{tpu_custom_call.1} parent=1 // pred_fallthru
      _
    %s37 = sadd.s32 0, 0
    %s38 = smul.u32 16, %s37
    %p39 = scmp.lt.s32.totalorder %s38, 15
    %s40 = scalar_select %p39, %s38, 15
    %s41 = smul.addr %s40, 8
    %s42 = scalar_lea.vmem %s0, %s41
    %s43 = sadd.s32 0, 0
    %p44 = scmp.lt.s32.totalorder %s43, 0
    %s45 = scalar_select %p44, %s43, 0
    %s46 = scalar_lea.vmem %s1, %s45
    %s47 = sadd.s32 0, 0
    %s48 = smul.u32 16, %s47
    %p49 = scmp.lt.s32.totalorder %s48, 15
    %s50 = scalar_select %p49, %s48, 15
    %s51 = smul.addr %s50, 8
    %s52 = scalar_lea.vmem %s0, %s51
    %s53 = sadd.s32 0, 0
    %s54 = smul.u32 16, %s53
    %s55 = sadd.s32 0, 0
    %p56 = scmp.lt.s32.totalorder %s55, 0
    %s57 = scalar_select %p56, %s55, 0
    %s58 = scalar_lea.vmem %s1, %s57
    %s59 = sadd.s32 0, 0
    %p63 = scmp.eq.s32.totalorder 0, 0
    // Predicated region
    $region26: #{tpu_custom_call.1} parent=1 // pred_check
      %p64 = pneg %p63
    $region27: #{tpu_custom_call.1} parent=1 // pred_check_branch
      %66 = sbr.rel (%p64) target = $region29
    $region28: #{tpu_custom_call.1} parent=1 // pred_region
      %vm67 = vcmask 254976
      %68 = vst.msk [vmem:[#allocation2] sm:$0x3] %vm67, 0.0
    $region29: #{tpu_custom_call.1} parent=1 // pred_fallthru
      _
    %v69 = vld [vmem:[%s52] sm:$0xff]
    %v70 = vld [vmem:[%s52 + $0x8] sm:$0xff]
    %v71 = vld [vmem:[%s52 + $0x10] sm:$0xff]
    %v72 = vld [vmem:[%s52 + $0x18] sm:$0xff]
    %v73 = vld [vmem:[%s52 + $0x20] sm:$0xff]
    %v74 = vld [vmem:[%s52 + $0x28] sm:$0xff]
    %v75 = vld [vmem:[%s52 + $0x30] sm:$0xff]
    %v76 = vld [vmem:[%s52 + $0x38] sm:$0xff]
    %v77 = vld [vmem:[%s52 + $0x40] sm:$0xff]
    %v78 = vld [vmem:[%s52 + $0x48] sm:$0xff]
    %v79 = vld [vmem:[%s52 + $0x50] sm:$0xff]
    %v80 = vld [vmem:[%s52 + $0x58] sm:$0xff]
    %v81 = vld [vmem:[%s52 + $0x60] sm:$0xff]
    %v82 = vld [vmem:[%s52 + $0x68] sm:$0xff]
    %v83 = vld [vmem:[%s52 + $0x70] sm:$0xff]
    %v84 = vld [vmem:[%s52 + $0x78] sm:$0xff]
    %v85 = vcvt.s32.f32 %v69
    %v86 = vcvt.s32.f32 %v70
    %v87 = vcvt.s32.f32 %v71
    %v88 = vcvt.s32.f32 %v72
    %v89 = vcvt.s32.f32 %v73
    %v90 = vcvt.s32.f32 %v74
    %v91 = vcvt.s32.f32 %v75
    %v92 = vcvt.s32.f32 %v76
    %v93 = vcvt.s32.f32 %v77
    %v94 = vcvt.s32.f32 %v78
    %v95 = vcvt.s32.f32 %v79
    %v96 = vcvt.s32.f32 %v80
    %v97 = vcvt.s32.f32 %v81
    %v98 = vcvt.s32.f32 %v82
    %v99 = vcvt.s32.f32 %v83
    %v100 = vcvt.s32.f32 %v84
    %v101 = vpack.c.bf16 %v86, %v85
    %v102 = vpack.c.bf16 %v88, %v87
    %v103 = vpack.c.bf16 %v90, %v89
    %v104 = vpack.c.bf16 %v92, %v91
    %v105 = vpack.c.bf16 %v94, %v93
    %v106 = vpack.c.bf16 %v96, %v95
    %v107 = vpack.c.bf16 %v98, %v97
    %v108 = vpack.c.bf16 %v100, %v99
    %v109 = vlaneseq
    %v110 = vand.u32 %v109, 127
    %v111 = vcvt.s32.f32 %v110
    %v112 = vpack.c.bf16 %v111, %v111
    %114 = vset.pattern.permute.xlu0 0
    %115 = vperm.xlu0 %114, %v101
    %v116 = vpop.permute.xlu0 %115
    %119 = vset.pattern.permute.xlu0 0
    %120 = vperm.xlu0 %119, %v102
    %v121 = vpop.permute.xlu0 %120
    %124 = vset.pattern.permute.xlu0 0
    %125 = vperm.xlu0 %124, %v103
    %v126 = vpop.permute.xlu0 %125
    %129 = vset.pattern.permute.xlu0 0
    %130 = vperm.xlu0 %129, %v104
    %v131 = vpop.permute.xlu0 %130
    %134 = vset.pattern.permute.xlu0 0
    %135 = vperm.xlu0 %134, %v105
    %v136 = vpop.permute.xlu0 %135
    %139 = vset.pattern.permute.xlu0 0
    %140 = vperm.xlu0 %139, %v106
    %v141 = vpop.permute.xlu0 %140
    %144 = vset.pattern.permute.xlu0 0
    %145 = vperm.xlu0 %144, %v107
    %v146 = vpop.permute.xlu0 %145
    %149 = vset.pattern.permute.xlu0 0
    %150 = vperm.xlu0 %149, %v108
    %v151 = vpop.permute.xlu0 %150
    %vm153 = vcmp.eq.bf16.partialorder %v116, %v112
    %vm154 = vcmp.eq.bf16.partialorder %v121, %v112
    %vm155 = vcmp.eq.bf16.partialorder %v126, %v112
    %vm156 = vcmp.eq.bf16.partialorder %v131, %v112
    %vm157 = vcmp.eq.bf16.partialorder %v136, %v112
    %vm158 = vcmp.eq.bf16.partialorder %v141, %v112
    %vm159 = vcmp.eq.bf16.partialorder %v146, %v112
    %vm160 = vcmp.eq.bf16.partialorder %v151, %v112
    %v161 = vsel %vm153, 65537, 0
    %v162 = vsel %vm154, 65537, 0
    %v163 = vsel %vm155, 65537, 0
    %v164 = vsel %vm156, 65537, 0
    %v165 = vsel %vm157, 65537, 0
    %v166 = vsel %vm158, 65537, 0
    %v167 = vsel %vm159, 65537, 0
    %v168 = vsel %vm160, 65537, 0
    %v169 = vunpack.c.l.b16 %v161
    %v170 = vunpack.c.h.b16 %v161
    %v171 = vunpack.c.l.b16 %v162
    %v172 = vunpack.c.h.b16 %v162
    %v173 = vunpack.c.l.b16 %v163
    %v174 = vunpack.c.h.b16 %v163
    %v175 = vunpack.c.l.b16 %v164
    %v176 = vunpack.c.h.b16 %v164
    %v177 = vunpack.c.l.b16 %v165
    %v178 = vunpack.c.h.b16 %v165
    %v179 = vunpack.c.l.b16 %v166
    %v180 = vunpack.c.h.b16 %v166
    %v181 = vunpack.c.l.b16 %v167
    %v182 = vunpack.c.h.b16 %v167
    %v183 = vunpack.c.l.b16 %v168
    %v184 = vunpack.c.h.b16 %v168
    %v185 = vpack.c.b16 %v169, %v169
    %v186 = vpack.c.b16 %v170, %v170
    %v187 = vpack.c.b16 %v171, %v171
    %v188 = vpack.c.b16 %v172, %v172
    %v189 = vpack.c.b16 %v173, %v173
    %v190 = vpack.c.b16 %v174, %v174
    %v191 = vpack.c.b16 %v175, %v175
    %v192 = vpack.c.b16 %v176, %v176
    %v193 = vpack.c.b16 %v177, %v177
    %v194 = vpack.c.b16 %v178, %v178
    %v195 = vpack.c.b16 %v179, %v179
    %v196 = vpack.c.b16 %v180, %v180
    %v197 = vpack.c.b16 %v181, %v181
    %v198 = vpack.c.b16 %v182, %v182
    %v199 = vpack.c.b16 %v183, %v183
    %v200 = vpack.c.b16 %v184, %v184
    %vm201 = vcmp.ne.s16.totalorder %v185, 0
    %vm202 = vcmp.ne.s16.totalorder %v186, 0
    %vm203 = vcmp.ne.s16.totalorder %v187, 0
    %vm204 = vcmp.ne.s16.totalorder %v188, 0
    %vm205 = vcmp.ne.s16.totalorder %v189, 0
    %vm206 = vcmp.ne.s16.totalorder %v190, 0
    %vm207 = vcmp.ne.s16.totalorder %v191, 0
    %vm208 = vcmp.ne.s16.totalorder %v192, 0
    %vm209 = vcmp.ne.s16.totalorder %v193, 0
    %vm210 = vcmp.ne.s16.totalorder %v194, 0
    %vm211 = vcmp.ne.s16.totalorder %v195, 0
    %vm212 = vcmp.ne.s16.totalorder %v196, 0
    %vm213 = vcmp.ne.s16.totalorder %v197, 0
    %vm214 = vcmp.ne.s16.totalorder %v198, 0
    %vm215 = vcmp.ne.s16.totalorder %v199, 0
    %vm216 = vcmp.ne.s16.totalorder %v200, 0
    %v217 = vsel %vm201, 65537, 0
    %v218 = vsel %vm202, 65537, 0
    %v219 = vsel %vm203, 65537, 0
    %v220 = vsel %vm204, 65537, 0
    %v221 = vsel %vm205, 65537, 0
    %v222 = vsel %vm206, 65537, 0
    %v223 = vsel %vm207, 65537, 0
    %v224 = vsel %vm208, 65537, 0
    %v225 = vsel %vm209, 65537, 0
    %v226 = vsel %vm210, 65537, 0
    %v227 = vsel %vm211, 65537, 0
    %v228 = vsel %vm212, 65537, 0
    %v229 = vsel %vm213, 65537, 0
    %v230 = vsel %vm214, 65537, 0
    %v231 = vsel %vm215, 65537, 0
    %v232 = vsel %vm216, 65537, 0
    %v233 = vunpack.c.l.b16 %v217
    %v234 = vunpack.c.l.b16 %v218
    %v235 = vunpack.c.l.b16 %v219
    %v236 = vunpack.c.l.b16 %v220
    %v237 = vunpack.c.l.b16 %v221
    %v238 = vunpack.c.l.b16 %v222
    %v239 = vunpack.c.l.b16 %v223
    %v240 = vunpack.c.l.b16 %v224
    %v241 = vunpack.c.l.b16 %v225
    %v242 = vunpack.c.l.b16 %v226
    %v243 = vunpack.c.l.b16 %v227
    %v244 = vunpack.c.l.b16 %v228
    %v245 = vunpack.c.l.b16 %v229
    %v246 = vunpack.c.l.b16 %v230
    %v247 = vunpack.c.l.b16 %v231
    %v248 = vunpack.c.l.b16 %v232
    %vm249 = vcmp.ne.s32.totalorder %v233, 0
    %vm250 = vcmp.ne.s32.totalorder %v234, 0
    %vm251 = vcmp.ne.s32.totalorder %v235, 0
    %vm252 = vcmp.ne.s32.totalorder %v236, 0
    %vm253 = vcmp.ne.s32.totalorder %v237, 0
    %vm254 = vcmp.ne.s32.totalorder %v238, 0
    %vm255 = vcmp.ne.s32.totalorder %v239, 0
    %vm256 = vcmp.ne.s32.totalorder %v240, 0
    %vm257 = vcmp.ne.s32.totalorder %v241, 0
    %vm258 = vcmp.ne.s32.totalorder %v242, 0
    %vm259 = vcmp.ne.s32.totalorder %v243, 0
    %vm260 = vcmp.ne.s32.totalorder %v244, 0
    %vm261 = vcmp.ne.s32.totalorder %v245, 0
    %vm262 = vcmp.ne.s32.totalorder %v246, 0
    %vm263 = vcmp.ne.s32.totalorder %v247, 0
    %vm264 = vcmp.ne.s32.totalorder %v248, 0
    %v265 = vsel %vm249, 1, 0
    %v266 = vsel %vm250, 1, 0
    %v267 = vsel %vm251, 1, 0
    %v268 = vsel %vm252, 1, 0
    %v269 = vsel %vm253, 1, 0
    %v270 = vsel %vm254, 1, 0
    %v271 = vsel %vm255, 1, 0
    %v272 = vsel %vm256, 1, 0
    %v273 = vsel %vm257, 1, 0
    %v274 = vsel %vm258, 1, 0
    %v275 = vsel %vm259, 1, 0
    %v276 = vsel %vm260, 1, 0
    %v277 = vsel %vm261, 1, 0
    %v278 = vsel %vm262, 1, 0
    %v279 = vsel %vm263, 1, 0
    %v280 = vsel %vm264, 1, 0
    %v281 = vcvt.s32.f32 %v265
    %v282 = vcvt.s32.f32 %v266
    %v283 = vcvt.s32.f32 %v267
    %v284 = vcvt.s32.f32 %v268
    %v285 = vcvt.s32.f32 %v269
    %v286 = vcvt.s32.f32 %v270
    %v287 = vcvt.s32.f32 %v271
    %v288 = vcvt.s32.f32 %v272
    %v289 = vcvt.s32.f32 %v273
    %v290 = vcvt.s32.f32 %v274
    %v291 = vcvt.s32.f32 %v275
    %v292 = vcvt.s32.f32 %v276
    %v293 = vcvt.s32.f32 %v277
    %v294 = vcvt.s32.f32 %v278
    %v295 = vcvt.s32.f32 %v279
    %v296 = vcvt.s32.f32 %v280
    %v297 = vpack.c.bf16 %v282, %v281
    %v298 = vpack.c.bf16 %v284, %v283
    %v299 = vpack.c.bf16 %v286, %v285
    %v300 = vpack.c.bf16 %v288, %v287
    %v301 = vpack.c.bf16 %v290, %v289
    %v302 = vpack.c.bf16 %v292, %v291
    %v303 = vpack.c.bf16 %v294, %v293
    %v304 = vpack.c.bf16 %v296, %v295
    %305 = vset.pattern.permute.xlu0 1
    %306 = vperm.xlu0 %305, %v101
    %v307 = vpop.permute.xlu0 %306
    %309 = vset.pattern.permute.xlu0 1
    %310 = vperm.xlu0 %309, %v102
    %v311 = vpop.permute.xlu0 %310
    %313 = vset.pattern.permute.xlu0 1
    %314 = vperm.xlu0 %313, %v103
    %v315 = vpop.permute.xlu0 %314
    %317 = vset.pattern.permute.xlu0 1
    %318 = vperm.xlu0 %317, %v104
    %v319 = vpop.permute.xlu0 %318
    %321 = vset.pattern.permute.xlu0 1
    %322 = vperm.xlu0 %321, %v105
    %v323 = vpop.permute.xlu0 %322
    %325 = vset.pattern.permute.xlu0 1
    %326 = vperm.xlu0 %325, %v106
    %v327 = vpop.permute.xlu0 %326
    %329 = vset.pattern.permute.xlu0 1
    %330 = vperm.xlu0 %329, %v107
    %v331 = vpop.permute.xlu0 %330
    %333 = vset.pattern.permute.xlu0 1
    %334 = vperm.xlu0 %333, %v108
    %v335 = vpop.permute.xlu0 %334
    %vm337 = vcmp.eq.bf16.partialorder %v307, %v112
    %vm338 = vcmp.eq.bf16.partialorder %v311, %v112
    %vm339 = vcmp.eq.bf16.partialorder %v315, %v112
    %vm340 = vcmp.eq.bf16.partialorder %v319, %v112
    %vm341 = vcmp.eq.bf16.partialorder %v323, %v112
    %vm342 = vcmp.eq.bf16.partialorder %v327, %v112
    %vm343 = vcmp.eq.bf16.partialorder %v331, %v112
    %vm344 = vcmp.eq.bf16.partialorder %v335, %v112
    %v345 = vsel %vm337, 65537, 0
    %v346 = vsel %vm338, 65537, 0
    %v347 = vsel %vm339, 65537, 0
    %v348 = vsel %vm340, 65537, 0
    %v349 = vsel %vm341, 65537, 0
    %v350 = vsel %vm342, 65537, 0
    %v351 = vsel %vm343, 65537, 0
    %v352 = vsel %vm344, 65537, 0
    %v353 = vunpack.c.l.b16 %v345
    %v354 = vunpack.c.h.b16 %v345
    %v355 = vunpack.c.l.b16 %v346
    %v356 = vunpack.c.h.b16 %v346
    %v357 = vunpack.c.l.b16 %v347
    %v358 = vunpack.c.h.b16 %v347
    %v359 = vunpack.c.l.b16 %v348
    %v360 = vunpack.c.h.b16 %v348
    %v361 = vunpack.c.l.b16 %v349
    %v362 = vunpack.c.h.b16 %v349
    %v363 = vunpack.c.l.b16 %v350
    %v364 = vunpack.c.h.b16 %v350
    %v365 = vunpack.c.l.b16 %v351
    %v366 = vunpack.c.h.b16 %v351
    %v367 = vunpack.c.l.b16 %v352
    %v368 = vunpack.c.h.b16 %v352
    %v369 = vpack.c.b16 %v353, %v353
    %v370 = vpack.c.b16 %v354, %v354
    %v371 = vpack.c.b16 %v355, %v355
    %v372 = vpack.c.b16 %v356, %v356
    %v373 = vpack.c.b16 %v357, %v357
    %v374 = vpack.c.b16 %v358, %v358
    %v375 = vpack.c.b16 %v359, %v359
    %v376 = vpack.c.b16 %v360, %v360
    %v377 = vpack.c.b16 %v361, %v361
    %v378 = vpack.c.b16 %v362, %v362
    %v379 = vpack.c.b16 %v363, %v363
    %v380 = vpack.c.b16 %v364, %v364
    %v381 = vpack.c.b16 %v365, %v365
    %v382 = vpack.c.b16 %v366, %v366
    %v383 = vpack.c.b16 %v367, %v367
    %v384 = vpack.c.b16 %v368, %v368
    %vm385 = vcmp.ne.s16.totalorder %v369, 0
    %vm386 = vcmp.ne.s16.totalorder %v370, 0
    %vm387 = vcmp.ne.s16.totalorder %v371, 0
    %vm388 = vcmp.ne.s16.totalorder %v372, 0
    %vm389 = vcmp.ne.s16.totalorder %v373, 0
    %vm390 = vcmp.ne.s16.totalorder %v374, 0
    %vm391 = vcmp.ne.s16.totalorder %v375, 0
    %vm392 = vcmp.ne.s16.totalorder %v376, 0
    %vm393 = vcmp.ne.s16.totalorder %v377, 0
    %vm394 = vcmp.ne.s16.totalorder %v378, 0
    %vm395 = vcmp.ne.s16.totalorder %v379, 0
    %vm396 = vcmp.ne.s16.totalorder %v380, 0
    %vm397 = vcmp.ne.s16.totalorder %v381, 0
    %vm398 = vcmp.ne.s16.totalorder %v382, 0
    %vm399 = vcmp.ne.s16.totalorder %v383, 0
    %vm400 = vcmp.ne.s16.totalorder %v384, 0
    %v401 = vsel %vm385, 65537, 0
    %v402 = vsel %vm386, 65537, 0
    %v403 = vsel %vm387, 65537, 0
    %v404 = vsel %vm388, 65537, 0
    %v405 = vsel %vm389, 65537, 0
    %v406 = vsel %vm390, 65537, 0
    %v407 = vsel %vm391, 65537, 0
    %v408 = vsel %vm392, 65537, 0
    %v409 = vsel %vm393, 65537, 0
    %v410 = vsel %vm394, 65537, 0
    %v411 = vsel %vm395, 65537, 0
    %v412 = vsel %vm396, 65537, 0
    %v413 = vsel %vm397, 65537, 0
    %v414 = vsel %vm398, 65537, 0
    %v415 = vsel %vm399, 65537, 0
    %v416 = vsel %vm400, 65537, 0
    %v417 = vunpack.c.l.b16 %v401
    %v418 = vunpack.c.l.b16 %v402
    %v419 = vunpack.c.l.b16 %v403
    %v420 = vunpack.c.l.b16 %v404
    %v421 = vunpack.c.l.b16 %v405
    %v422 = vunpack.c.l.b16 %v406
    %v423 = vunpack.c.l.b16 %v407
    %v424 = vunpack.c.l.b16 %v408
    %v425 = vunpack.c.l.b16 %v409
    %v426 = vunpack.c.l.b16 %v410
    %v427 = vunpack.c.l.b16 %v411
    %v428 = vunpack.c.l.b16 %v412
    %v429 = vunpack.c.l.b16 %v413
    %v430 = vunpack.c.l.b16 %v414
    %v431 = vunpack.c.l.b16 %v415
    %v432 = vunpack.c.l.b16 %v416
    %vm433 = vcmp.ne.s32.totalorder %v417, 0
    %vm434 = vcmp.ne.s32.totalorder %v418, 0
    %vm435 = vcmp.ne.s32.totalorder %v419, 0
    %vm436 = vcmp.ne.s32.totalorder %v420, 0
    %vm437 = vcmp.ne.s32.totalorder %v421, 0
    %vm438 = vcmp.ne.s32.totalorder %v422, 0
    %vm439 = vcmp.ne.s32.totalorder %v423, 0
    %vm440 = vcmp.ne.s32.totalorder %v424, 0
    %vm441 = vcmp.ne.s32.totalorder %v425, 0
    %vm442 = vcmp.ne.s32.totalorder %v426, 0
    %vm443 = vcmp.ne.s32.totalorder %v427, 0
    %vm444 = vcmp.ne.s32.totalorder %v428, 0
    %vm445 = vcmp.ne.s32.totalorder %v429, 0
    %vm446 = vcmp.ne.s32.totalorder %v430, 0
    %vm447 = vcmp.ne.s32.totalorder %v431, 0
    %vm448 = vcmp.ne.s32.totalorder %v432, 0
    %v449 = vsel %vm433, 1, 0
    %v450 = vsel %vm434, 1, 0
    %v451 = vsel %vm435, 1, 0
    %v452 = vsel %vm436, 1, 0
    %v453 = vsel %vm437, 1, 0
    %v454 = vsel %vm438, 1, 0
    %v455 = vsel %vm439, 1, 0
    %v456 = vsel %vm440, 1, 0
    %v457 = vsel %vm441, 1, 0
    %v458 = vsel %vm442, 1, 0
    %v459 = vsel %vm443, 1, 0
    %v460 = vsel %vm444, 1, 0
    %v461 = vsel %vm445, 1, 0
    %v462 = vsel %vm446, 1, 0
    %v463 = vsel %vm447, 1, 0
    %v464 = vsel %vm448, 1, 0
    %v465 = vcvt.s32.f32 %v449
    %v466 = vcvt.s32.f32 %v450
    %v467 = vcvt.s32.f32 %v451
    %v468 = vcvt.s32.f32 %v452
    %v469 = vcvt.s32.f32 %v453
    %v470 = vcvt.s32.f32 %v454
    %v471 = vcvt.s32.f32 %v455
    %v472 = vcvt.s32.f32 %v456
    %v473 = vcvt.s32.f32 %v457
    %v474 = vcvt.s32.f32 %v458
    %v475 = vcvt.s32.f32 %v459
    %v476 = vcvt.s32.f32 %v460
    %v477 = vcvt.s32.f32 %v461
    %v478 = vcvt.s32.f32 %v462
    %v479 = vcvt.s32.f32 %v463
    %v480 = vcvt.s32.f32 %v464
    %v481 = vpack.c.bf16 %v466, %v465
    %v482 = vpack.c.bf16 %v468, %v467
    %v483 = vpack.c.bf16 %v470, %v469
    %v484 = vpack.c.bf16 %v472, %v471
    %v485 = vpack.c.bf16 %v474, %v473
    %v486 = vpack.c.bf16 %v476, %v475
    %v487 = vpack.c.bf16 %v478, %v477
    %v488 = vpack.c.bf16 %v480, %v479
    %489 = vset.pattern.permute.xlu0 2
    %490 = vperm.xlu0 %489, %v101
    %v491 = vpop.permute.xlu0 %490
    %493 = vset.pattern.permute.xlu0 2
    %494 = vperm.xlu0 %493, %v102
    %v495 = vpop.permute.xlu0 %494
    %497 = vset.pattern.permute.xlu0 2
    %498 = vperm.xlu0 %497, %v103
    %v499 = vpop.permute.xlu0 %498
    %501 = vset.pattern.permute.xlu0 2
    %502 = vperm.xlu0 %501, %v104
    %v503 = vpop.permute.xlu0 %502
    %505 = vset.pattern.permute.xlu0 2
    %506 = vperm.xlu0 %505, %v105
    %v507 = vpop.permute.xlu0 %506
    %509 = vset.pattern.permute.xlu0 2
    %510 = vperm.xlu0 %509, %v106
    %v511 = vpop.permute.xlu0 %510
    %513 = vset.pattern.permute.xlu0 2
    %514 = vperm.xlu0 %513, %v107
    %v515 = vpop.permute.xlu0 %514
    %517 = vset.pattern.permute.xlu0 2
    %518 = vperm.xlu0 %517, %v108
    %v519 = vpop.permute.xlu0 %518
    %vm521 = vcmp.eq.bf16.partialorder %v491, %v112
    %vm522 = vcmp.eq.bf16.partialorder %v495, %v112
    %vm523 = vcmp.eq.bf16.partialorder %v499, %v112
    %vm524 = vcmp.eq.bf16.partialorder %v503, %v112
    %vm525 = vcmp.eq.bf16.partialorder %v507, %v112
    %vm526 = vcmp.eq.bf16.partialorder %v511, %v112
    %vm527 = vcmp.eq.bf16.partialorder %v515, %v112
    %vm528 = vcmp.eq.bf16.partialorder %v519, %v112
    %v529 = vsel %vm521, 65537, 0
    %v530 = vsel %vm522, 65537, 0
    %v531 = vsel %vm523, 65537, 0
    %v532 = vsel %vm524, 65537, 0
    %v533 = vsel %vm525, 65537, 0
    %v534 = vsel %vm526, 65537, 0
    %v535 = vsel %vm527, 65537, 0
    %v536 = vsel %vm528, 65537, 0
    %v537 = vunpack.c.l.b16 %v529
    %v538 = vunpack.c.h.b16 %v529
    %v539 = vunpack.c.l.b16 %v530
    %v540 = vunpack.c.h.b16 %v530
    %v541 = vunpack.c.l.b16 %v531
    %v542 = vunpack.c.h.b16 %v531
    %v543 = vunpack.c.l.b16 %v532
    %v544 = vunpack.c.h.b16 %v532
    %v545 = vunpack.c.l.b16 %v533
    %v546 = vunpack.c.h.b16 %v533
    %v547 = vunpack.c.l.b16 %v534
    %v548 = vunpack.c.h.b16 %v534
    %v549 = vunpack.c.l.b16 %v535
    %v550 = vunpack.c.h.b16 %v535
    %v551 = vunpack.c.l.b16 %v536
    %v552 = vunpack.c.h.b16 %v536
    %v553 = vpack.c.b16 %v537, %v537
    %v554 = vpack.c.b16 %v538, %v538
    %v555 = vpack.c.b16 %v539, %v539
    %v556 = vpack.c.b16 %v540, %v540
    %v557 = vpack.c.b16 %v541, %v541
    %v558 = vpack.c.b16 %v542, %v542
    %v559 = vpack.c.b16 %v543, %v543
    %v560 = vpack.c.b16 %v544, %v544
    %v561 = vpack.c.b16 %v545, %v545
    %v562 = vpack.c.b16 %v546, %v546
    %v563 = vpack.c.b16 %v547, %v547
    %v564 = vpack.c.b16 %v548, %v548
    %v565 = vpack.c.b16 %v549, %v549
    %v566 = vpack.c.b16 %v550, %v550
    %v567 = vpack.c.b16 %v551, %v551
    %v568 = vpack.c.b16 %v552, %v552
    %vm569 = vcmp.ne.s16.totalorder %v553, 0
    %vm570 = vcmp.ne.s16.totalorder %v554, 0
    %vm571 = vcmp.ne.s16.totalorder %v555, 0
    %vm572 = vcmp.ne.s16.totalorder %v556, 0
    %vm573 = vcmp.ne.s16.totalorder %v557, 0
    %vm574 = vcmp.ne.s16.totalorder %v558, 0
    %vm575 = vcmp.ne.s16.totalorder %v559, 0
    %vm576 = vcmp.ne.s16.totalorder %v560, 0
    %vm577 = vcmp.ne.s16.totalorder %v561, 0
    %vm578 = vcmp.ne.s16.totalorder %v562, 0
    %vm579 = vcmp.ne.s16.totalorder %v563, 0
    %vm580 = vcmp.ne.s16.totalorder %v564, 0
    %vm581 = vcmp.ne.s16.totalorder %v565, 0
    %vm582 = vcmp.ne.s16.totalorder %v566, 0
    %vm583 = vcmp.ne.s16.totalorder %v567, 0
    %vm584 = vcmp.ne.s16.totalorder %v568, 0
    %v585 = vsel %vm569, 65537, 0
    %v586 = vsel %vm570, 65537, 0
    %v587 = vsel %vm571, 65537, 0
    %v588 = vsel %vm572, 65537, 0
    %v589 = vsel %vm573, 65537, 0
    %v590 = vsel %vm574, 65537, 0
    %v591 = vsel %vm575, 65537, 0
    %v592 = vsel %vm576, 65537, 0
    %v593 = vsel %vm577, 65537, 0
    %v594 = vsel %vm578, 65537, 0
    %v595 = vsel %vm579, 65537, 0
    %v596 = vsel %vm580, 65537, 0
    %v597 = vsel %vm581, 65537, 0
    %v598 = vsel %vm582, 65537, 0
    %v599 = vsel %vm583, 65537, 0
    %v600 = vsel %vm584, 65537, 0
    %v601 = vunpack.c.l.b16 %v585
    %v602 = vunpack.c.l.b16 %v586
    %v603 = vunpack.c.l.b16 %v587
    %v604 = vunpack.c.l.b16 %v588
    %v605 = vunpack.c.l.b16 %v589
    %v606 = vunpack.c.l.b16 %v590
    %v607 = vunpack.c.l.b16 %v591
    %v608 = vunpack.c.l.b16 %v592
    %v609 = vunpack.c.l.b16 %v593
    %v610 = vunpack.c.l.b16 %v594
    %v611 = vunpack.c.l.b16 %v595
    %v612 = vunpack.c.l.b16 %v596
    %v613 = vunpack.c.l.b16 %v597
    %v614 = vunpack.c.l.b16 %v598
    %v615 = vunpack.c.l.b16 %v599
    %v616 = vunpack.c.l.b16 %v600
    %vm617 = vcmp.ne.s32.totalorder %v601, 0
    %vm618 = vcmp.ne.s32.totalorder %v602, 0
    %vm619 = vcmp.ne.s32.totalorder %v603, 0
    %vm620 = vcmp.ne.s32.totalorder %v604, 0
    %vm621 = vcmp.ne.s32.totalorder %v605, 0
    %vm622 = vcmp.ne.s32.totalorder %v606, 0
    %vm623 = vcmp.ne.s32.totalorder %v607, 0
    %vm624 = vcmp.ne.s32.totalorder %v608, 0
    %vm625 = vcmp.ne.s32.totalorder %v609, 0
    %vm626 = vcmp.ne.s32.totalorder %v610, 0
    %vm627 = vcmp.ne.s32.totalorder %v611, 0
    %vm628 = vcmp.ne.s32.totalorder %v612, 0
    %vm629 = vcmp.ne.s32.totalorder %v613, 0
    %vm630 = vcmp.ne.s32.totalorder %v614, 0
    %vm631 = vcmp.ne.s32.totalorder %v615, 0
    %vm632 = vcmp.ne.s32.totalorder %v616, 0
    %v633 = vsel %vm617, 1, 0
    %v634 = vsel %vm618, 1, 0
    %v635 = vsel %vm619, 1, 0
    %v636 = vsel %vm620, 1, 0
    %v637 = vsel %vm621, 1, 0
    %v638 = vsel %vm622, 1, 0
    %v639 = vsel %vm623, 1, 0
    %v640 = vsel %vm624, 1, 0
    %v641 = vsel %vm625, 1, 0
    %v642 = vsel %vm626, 1, 0
    %v643 = vsel %vm627, 1, 0
    %v644 = vsel %vm628, 1, 0
    %v645 = vsel %vm629, 1, 0
    %v646 = vsel %vm630, 1, 0
    %v647 = vsel %vm631, 1, 0
    %v648 = vsel %vm632, 1, 0
    %v649 = vcvt.s32.f32 %v633
    %v650 = vcvt.s32.f32 %v634
    %v651 = vcvt.s32.f32 %v635
    %v652 = vcvt.s32.f32 %v636
    %v653 = vcvt.s32.f32 %v637
    %v654 = vcvt.s32.f32 %v638
    %v655 = vcvt.s32.f32 %v639
    %v656 = vcvt.s32.f32 %v640
    %v657 = vcvt.s32.f32 %v641
    %v658 = vcvt.s32.f32 %v642
    %v659 = vcvt.s32.f32 %v643
    %v660 = vcvt.s32.f32 %v644
    %v661 = vcvt.s32.f32 %v645
    %v662 = vcvt.s32.f32 %v646
    %v663 = vcvt.s32.f32 %v647
    %v664 = vcvt.s32.f32 %v648
    %v665 = vpack.c.bf16 %v650, %v649
    %v666 = vpack.c.bf16 %v652, %v651
    %v667 = vpack.c.bf16 %v654, %v653
    %v668 = vpack.c.bf16 %v656, %v655
    %v669 = vpack.c.bf16 %v658, %v657
    %v670 = vpack.c.bf16 %v660, %v659
    %v671 = vpack.c.bf16 %v662, %v661
    %v672 = vpack.c.bf16 %v664, %v663
    %673 = vset.pattern.permute.xlu0 3
    %674 = vperm.xlu0 %673, %v101
    %v675 = vpop.permute.xlu0 %674
    %677 = vset.pattern.permute.xlu0 3
    %678 = vperm.xlu0 %677, %v102
    %v679 = vpop.permute.xlu0 %678
    %681 = vset.pattern.permute.xlu0 3
    %682 = vperm.xlu0 %681, %v103
    %v683 = vpop.permute.xlu0 %682
    %685 = vset.pattern.permute.xlu0 3
    %686 = vperm.xlu0 %685, %v104
    %v687 = vpop.permute.xlu0 %686
    %689 = vset.pattern.permute.xlu0 3
    %690 = vperm.xlu0 %689, %v105
    %v691 = vpop.permute.xlu0 %690
    %693 = vset.pattern.permute.xlu0 3
    %694 = vperm.xlu0 %693, %v106
    %v695 = vpop.permute.xlu0 %694
    %697 = vset.pattern.permute.xlu0 3
    %698 = vperm.xlu0 %697, %v107
    %v699 = vpop.permute.xlu0 %698
    %701 = vset.pattern.permute.xlu0 3
    %702 = vperm.xlu0 %701, %v108
    %v703 = vpop.permute.xlu0 %702
    %vm705 = vcmp.eq.bf16.partialorder %v675, %v112
    %vm706 = vcmp.eq.bf16.partialorder %v679, %v112
    %vm707 = vcmp.eq.bf16.partialorder %v683, %v112
    %vm708 = vcmp.eq.bf16.partialorder %v687, %v112
    %vm709 = vcmp.eq.bf16.partialorder %v691, %v112
    %vm710 = vcmp.eq.bf16.partialorder %v695, %v112
    %vm711 = vcmp.eq.bf16.partialorder %v699, %v112
    %vm712 = vcmp.eq.bf16.partialorder %v703, %v112
    %v713 = vsel %vm705, 65537, 0
    %v714 = vsel %vm706, 65537, 0
    %v715 = vsel %vm707, 65537, 0
    %v716 = vsel %vm708, 65537, 0
    %v717 = vsel %vm709, 65537, 0
    %v718 = vsel %vm710, 65537, 0
    %v719 = vsel %vm711, 65537, 0
    %v720 = vsel %vm712, 65537, 0
    %v721 = vunpack.c.l.b16 %v713
    %v722 = vunpack.c.h.b16 %v713
    %v723 = vunpack.c.l.b16 %v714
    %v724 = vunpack.c.h.b16 %v714
    %v725 = vunpack.c.l.b16 %v715
    %v726 = vunpack.c.h.b16 %v715
    %v727 = vunpack.c.l.b16 %v716
    %v728 = vunpack.c.h.b16 %v716
    %v729 = vunpack.c.l.b16 %v717
    %v730 = vunpack.c.h.b16 %v717
    %v731 = vunpack.c.l.b16 %v718
    %v732 = vunpack.c.h.b16 %v718
    %v733 = vunpack.c.l.b16 %v719
    %v734 = vunpack.c.h.b16 %v719
    %v735 = vunpack.c.l.b16 %v720
    %v736 = vunpack.c.h.b16 %v720
    %v737 = vpack.c.b16 %v721, %v721
    %v738 = vpack.c.b16 %v722, %v722
    %v739 = vpack.c.b16 %v723, %v723
    %v740 = vpack.c.b16 %v724, %v724
    %v741 = vpack.c.b16 %v725, %v725
    %v742 = vpack.c.b16 %v726, %v726
    %v743 = vpack.c.b16 %v727, %v727
    %v744 = vpack.c.b16 %v728, %v728
    %v745 = vpack.c.b16 %v729, %v729
    %v746 = vpack.c.b16 %v730, %v730
    %v747 = vpack.c.b16 %v731, %v731
    %v748 = vpack.c.b16 %v732, %v732
    %v749 = vpack.c.b16 %v733, %v733
    %v750 = vpack.c.b16 %v734, %v734
    %v751 = vpack.c.b16 %v735, %v735
    %v752 = vpack.c.b16 %v736, %v736
    %vm753 = vcmp.ne.s16.totalorder %v737, 0
    %vm754 = vcmp.ne.s16.totalorder %v738, 0
    %vm755 = vcmp.ne.s16.totalorder %v739, 0
    %vm756 = vcmp.ne.s16.totalorder %v740, 0
    %vm757 = vcmp.ne.s16.totalorder %v741, 0
    %vm758 = vcmp.ne.s16.totalorder %v742, 0
    %vm759 = vcmp.ne.s16.totalorder %v743, 0
    %vm760 = vcmp.ne.s16.totalorder %v744, 0
    %vm761 = vcmp.ne.s16.totalorder %v745, 0
    %vm762 = vcmp.ne.s16.totalorder %v746, 0
    %vm763 = vcmp.ne.s16.totalorder %v747, 0
    %vm764 = vcmp.ne.s16.totalorder %v748, 0
    %vm765 = vcmp.ne.s16.totalorder %v749, 0
    %vm766 = vcmp.ne.s16.totalorder %v750, 0
    %vm767 = vcmp.ne.s16.totalorder %v751, 0
    %vm768 = vcmp.ne.s16.totalorder %v752, 0
    %v769 = vsel %vm753, 65537, 0
    %v770 = vsel %vm754, 65537, 0
    %v771 = vsel %vm755, 65537, 0
    %v772 = vsel %vm756, 65537, 0
    %v773 = vsel %vm757, 65537, 0
    %v774 = vsel %vm758, 65537, 0
    %v775 = vsel %vm759, 65537, 0
    %v776 = vsel %vm760, 65537, 0
    %v777 = vsel %vm761, 65537, 0
    %v778 = vsel %vm762, 65537, 0
    %v779 = vsel %vm763, 65537, 0
    %v780 = vsel %vm764, 65537, 0
    %v781 = vsel %vm765, 65537, 0
    %v782 = vsel %vm766, 65537, 0
    %v783 = vsel %vm767, 65537, 0
    %v784 = vsel %vm768, 65537, 0
    %v785 = vunpack.c.l.b16 %v769
    %v786 = vunpack.c.l.b16 %v770
    %v787 = vunpack.c.l.b16 %v771
    %v788 = vunpack.c.l.b16 %v772
    %v789 = vunpack.c.l.b16 %v773
    %v790 = vunpack.c.l.b16 %v774
    %v791 = vunpack.c.l.b16 %v775
    %v792 = vunpack.c.l.b16 %v776
    %v793 = vunpack.c.l.b16 %v777
    %v794 = vunpack.c.l.b16 %v778
    %v795 = vunpack.c.l.b16 %v779
    %v796 = vunpack.c.l.b16 %v780
    %v797 = vunpack.c.l.b16 %v781
    %v798 = vunpack.c.l.b16 %v782
    %v799 = vunpack.c.l.b16 %v783
    %v800 = vunpack.c.l.b16 %v784
    %vm801 = vcmp.ne.s32.totalorder %v785, 0
    %vm802 = vcmp.ne.s32.totalorder %v786, 0
    %vm803 = vcmp.ne.s32.totalorder %v787, 0
    %vm804 = vcmp.ne.s32.totalorder %v788, 0
    %vm805 = vcmp.ne.s32.totalorder %v789, 0
    %vm806 = vcmp.ne.s32.totalorder %v790, 0
    %vm807 = vcmp.ne.s32.totalorder %v791, 0
    %vm808 = vcmp.ne.s32.totalorder %v792, 0
    %vm809 = vcmp.ne.s32.totalorder %v793, 0
    %vm810 = vcmp.ne.s32.totalorder %v794, 0
    %vm811 = vcmp.ne.s32.totalorder %v795, 0
    %vm812 = vcmp.ne.s32.totalorder %v796, 0
    %vm813 = vcmp.ne.s32.totalorder %v797, 0
    %vm814 = vcmp.ne.s32.totalorder %v798, 0
    %vm815 = vcmp.ne.s32.totalorder %v799, 0
    %vm816 = vcmp.ne.s32.totalorder %v800, 0
    %v817 = vsel %vm801, 1, 0
    %v818 = vsel %vm802, 1, 0
    %v819 = vsel %vm803, 1, 0
    %v820 = vsel %vm804, 1, 0
    %v821 = vsel %vm805, 1, 0
    %v822 = vsel %vm806, 1, 0
    %v823 = vsel %vm807, 1, 0
    %v824 = vsel %vm808, 1, 0
    %v825 = vsel %vm809, 1, 0
    %v826 = vsel %vm810, 1, 0
    %v827 = vsel %vm811, 1, 0
    %v828 = vsel %vm812, 1, 0
    %v829 = vsel %vm813, 1, 0
    %v830 = vsel %vm814, 1, 0
    %v831 = vsel %vm815, 1, 0
    %v832 = vsel %vm816, 1, 0
    %v833 = vcvt.s32.f32 %v817
    %v834 = vcvt.s32.f32 %v818
    %v835 = vcvt.s32.f32 %v819
    %v836 = vcvt.s32.f32 %v820
    %v837 = vcvt.s32.f32 %v821
    %v838 = vcvt.s32.f32 %v822
    %v839 = vcvt.s32.f32 %v823
    %v840 = vcvt.s32.f32 %v824
    %v841 = vcvt.s32.f32 %v825
    %v842 = vcvt.s32.f32 %v826
    %v843 = vcvt.s32.f32 %v827
    %v844 = vcvt.s32.f32 %v828
    %v845 = vcvt.s32.f32 %v829
    %v846 = vcvt.s32.f32 %v830
    %v847 = vcvt.s32.f32 %v831
    %v848 = vcvt.s32.f32 %v832
    %v849 = vpack.c.bf16 %v834, %v833
    %v850 = vpack.c.bf16 %v836, %v835
    %v851 = vpack.c.bf16 %v838, %v837
    %v852 = vpack.c.bf16 %v840, %v839
    %v853 = vpack.c.bf16 %v842, %v841
    %v854 = vpack.c.bf16 %v844, %v843
    %v855 = vpack.c.bf16 %v846, %v845
    %v856 = vpack.c.bf16 %v848, %v847
    %857 = vset.pattern.permute.xlu0 4
    %858 = vperm.xlu0 %857, %v101
    %v859 = vpop.permute.xlu0 %858
    %861 = vset.pattern.permute.xlu0 4
    %862 = vperm.xlu0 %861, %v102
    %v863 = vpop.permute.xlu0 %862
    %865 = vset.pattern.permute.xlu0 4
    %866 = vperm.xlu0 %865, %v103
    %v867 = vpop.permute.xlu0 %866
    %869 = vset.pattern.permute.xlu0 4
    %870 = vperm.xlu0 %869, %v104
    %v871 = vpop.permute.xlu0 %870
    %873 = vset.pattern.permute.xlu0 4
    %874 = vperm.xlu0 %873, %v105
    %v875 = vpop.permute.xlu0 %874
    %877 = vset.pattern.permute.xlu0 4
    %878 = vperm.xlu0 %877, %v106
    %v879 = vpop.permute.xlu0 %878
    %881 = vset.pattern.permute.xlu0 4
    %882 = vperm.xlu0 %881, %v107
    %v883 = vpop.permute.xlu0 %882
    %885 = vset.pattern.permute.xlu0 4
    %886 = vperm.xlu0 %885, %v108
    %v887 = vpop.permute.xlu0 %886
    %vm889 = vcmp.eq.bf16.partialorder %v859, %v112
    %vm890 = vcmp.eq.bf16.partialorder %v863, %v112
    %vm891 = vcmp.eq.bf16.partialorder %v867, %v112
    %vm892 = vcmp.eq.bf16.partialorder %v871, %v112
    %vm893 = vcmp.eq.bf16.partialorder %v875, %v112
    %vm894 = vcmp.eq.bf16.partialorder %v879, %v112
    %vm895 = vcmp.eq.bf16.partialorder %v883, %v112
    %vm896 = vcmp.eq.bf16.partialorder %v887, %v112
    %v897 = vsel %vm889, 65537, 0
    %v898 = vsel %vm890, 65537, 0
    %v899 = vsel %vm891, 65537, 0
    %v900 = vsel %vm892, 65537, 0
    %v901 = vsel %vm893, 65537, 0
    %v902 = vsel %vm894, 65537, 0
    %v903 = vsel %vm895, 65537, 0
    %v904 = vsel %vm896, 65537, 0
    %v905 = vunpack.c.l.b16 %v897
    %v906 = vunpack.c.h.b16 %v897
    %v907 = vunpack.c.l.b16 %v898
    %v908 = vunpack.c.h.b16 %v898
    %v909 = vunpack.c.l.b16 %v899
    %v910 = vunpack.c.h.b16 %v899
    %v911 = vunpack.c.l.b16 %v900
    %v912 = vunpack.c.h.b16 %v900
    %v913 = vunpack.c.l.b16 %v901
    %v914 = vunpack.c.h.b16 %v901
    %v915 = vunpack.c.l.b16 %v902
    %v916 = vunpack.c.h.b16 %v902
    %v917 = vunpack.c.l.b16 %v903
    %v918 = vunpack.c.h.b16 %v903
    %v919 = vunpack.c.l.b16 %v904
    %v920 = vunpack.c.h.b16 %v904
    %v921 = vpack.c.b16 %v905, %v905
    %v922 = vpack.c.b16 %v906, %v906
    %v923 = vpack.c.b16 %v907, %v907
    %v924 = vpack.c.b16 %v908, %v908
    %v925 = vpack.c.b16 %v909, %v909
    %v926 = vpack.c.b16 %v910, %v910
    %v927 = vpack.c.b16 %v911, %v911
    %v928 = vpack.c.b16 %v912, %v912
    %v929 = vpack.c.b16 %v913, %v913
    %v930 = vpack.c.b16 %v914, %v914
    %v931 = vpack.c.b16 %v915, %v915
    %v932 = vpack.c.b16 %v916, %v916
    %v933 = vpack.c.b16 %v917, %v917
    %v934 = vpack.c.b16 %v918, %v918
    %v935 = vpack.c.b16 %v919, %v919
    %v936 = vpack.c.b16 %v920, %v920
    %vm937 = vcmp.ne.s16.totalorder %v921, 0
    %vm938 = vcmp.ne.s16.totalorder %v922, 0
    %vm939 = vcmp.ne.s16.totalorder %v923, 0
    %vm940 = vcmp.ne.s16.totalorder %v924, 0
    %vm941 = vcmp.ne.s16.totalorder %v925, 0
    %vm942 = vcmp.ne.s16.totalorder %v926, 0
    %vm943 = vcmp.ne.s16.totalorder %v927, 0
    %vm944 = vcmp.ne.s16.totalorder %v928, 0
    %vm945 = vcmp.ne.s16.totalorder %v929, 0
    %vm946 = vcmp.ne.s16.totalorder %v930, 0
    %vm947 = vcmp.ne.s16.totalorder %v931, 0
    %vm948 = vcmp.ne.s16.totalorder %v932, 0
    %vm949 = vcmp.ne.s16.totalorder %v933, 0
    %vm950 = vcmp.ne.s16.totalorder %v934, 0
    %vm951 = vcmp.ne.s16.totalorder %v935, 0
    %vm952 = vcmp.ne.s16.totalorder %v936, 0
    %v953 = vsel %vm937, 65537, 0
    %v954 = vsel %vm938, 65537, 0
    %v955 = vsel %vm939, 65537, 0
    %v956 = vsel %vm940, 65537, 0
    %v957 = vsel %vm941, 65537, 0
    %v958 = vsel %vm942, 65537, 0
    %v959 = vsel %vm943, 65537, 0
    %v960 = vsel %vm944, 65537, 0
    %v961 = vsel %vm945, 65537, 0
    %v962 = vsel %vm946, 65537, 0
    %v963 = vsel %vm947, 65537, 0
    %v964 = vsel %vm948, 65537, 0
    %v965 = vsel %vm949, 65537, 0
    %v966 = vsel %vm950, 65537, 0
    %v967 = vsel %vm951, 65537, 0
    %v968 = vsel %vm952, 65537, 0
    %v969 = vunpack.c.l.b16 %v953
    %v970 = vunpack.c.l.b16 %v954
    %v971 = vunpack.c.l.b16 %v955
    %v972 = vunpack.c.l.b16 %v956
    %v973 = vunpack.c.l.b16 %v957
    %v974 = vunpack.c.l.b16 %v958
    %v975 = vunpack.c.l.b16 %v959
    %v976 = vunpack.c.l.b16 %v960
    %v977 = vunpack.c.l.b16 %v961
    %v978 = vunpack.c.l.b16 %v962
    %v979 = vunpack.c.l.b16 %v963
    %v980 = vunpack.c.l.b16 %v964
    %v981 = vunpack.c.l.b16 %v965
    %v982 = vunpack.c.l.b16 %v966
    %v983 = vunpack.c.l.b16 %v967
    %v984 = vunpack.c.l.b16 %v968
    %vm985 = vcmp.ne.s32.totalorder %v969, 0
    %vm986 = vcmp.ne.s32.totalorder %v970, 0
    %vm987 = vcmp.ne.s32.totalorder %v971, 0
    %vm988 = vcmp.ne.s32.totalorder %v972, 0
    %vm989 = vcmp.ne.s32.totalorder %v973, 0
    %vm990 = vcmp.ne.s32.totalorder %v974, 0
    %vm991 = vcmp.ne.s32.totalorder %v975, 0
    %vm992 = vcmp.ne.s32.totalorder %v976, 0
    %vm993 = vcmp.ne.s32.totalorder %v977, 0
    %vm994 = vcmp.ne.s32.totalorder %v978, 0
    %vm995 = vcmp.ne.s32.totalorder %v979, 0
    %vm996 = vcmp.ne.s32.totalorder %v980, 0
    %vm997 = vcmp.ne.s32.totalorder %v981, 0
    %vm998 = vcmp.ne.s32.totalorder %v982, 0
    %vm999 = vcmp.ne.s32.totalorder %v983, 0
    %vm1000 = vcmp.ne.s32.totalorder %v984, 0
    %v1001 = vsel %vm985, 1, 0
    %v1002 = vsel %vm986, 1, 0
    %v1003 = vsel %vm987, 1, 0
    %v1004 = vsel %vm988, 1, 0
    %v1005 = vsel %vm989, 1, 0
    %v1006 = vsel %vm990, 1, 0
    %v1007 = vsel %vm991, 1, 0
    %v1008 = vsel %vm992, 1, 0
    %v1009 = vsel %vm993, 1, 0
    %v1010 = vsel %vm994, 1, 0
    %v1011 = vsel %vm995, 1, 0
    %v1012 = vsel %vm996, 1, 0
    %v1013 = vsel %vm997, 1, 0
    %v1014 = vsel %vm998, 1, 0
    %v1015 = vsel %vm999, 1, 0
    %v1016 = vsel %vm1000, 1, 0
    %v1017 = vcvt.s32.f32 %v1001
    %v1018 = vcvt.s32.f32 %v1002
    %v1019 = vcvt.s32.f32 %v1003
    %v1020 = vcvt.s32.f32 %v1004
    %v1021 = vcvt.s32.f32 %v1005
    %v1022 = vcvt.s32.f32 %v1006
    %v1023 = vcvt.s32.f32 %v1007
    %v1024 = vcvt.s32.f32 %v1008
    %v1025 = vcvt.s32.f32 %v1009
    %v1026 = vcvt.s32.f32 %v1010
    %v1027 = vcvt.s32.f32 %v1011
    %v1028 = vcvt.s32.f32 %v1012
    %v1029 = vcvt.s32.f32 %v1013
    %v1030 = vcvt.s32.f32 %v1014
    %v1031 = vcvt.s32.f32 %v1015
    %v1032 = vcvt.s32.f32 %v1016
    %v1033 = vpack.c.bf16 %v1018, %v1017
    %v1034 = vpack.c.bf16 %v1020, %v1019
    %v1035 = vpack.c.bf16 %v1022, %v1021
    %v1036 = vpack.c.bf16 %v1024, %v1023
    %v1037 = vpack.c.bf16 %v1026, %v1025
    %v1038 = vpack.c.bf16 %v1028, %v1027
    %v1039 = vpack.c.bf16 %v1030, %v1029
    %v1040 = vpack.c.bf16 %v1032, %v1031
    %1041 = vset.pattern.permute.xlu0 5
    %1042 = vperm.xlu0 %1041, %v101
    %v1043 = vpop.permute.xlu0 %1042
    %1045 = vset.pattern.permute.xlu0 5
    %1046 = vperm.xlu0 %1045, %v102
    %v1047 = vpop.permute.xlu0 %1046
    %1049 = vset.pattern.permute.xlu0 5
    %1050 = vperm.xlu0 %1049, %v103
    %v1051 = vpop.permute.xlu0 %1050
    %1053 = vset.pattern.permute.xlu0 5
    %1054 = vperm.xlu0 %1053, %v104
    %v1055 = vpop.permute.xlu0 %1054
    %1057 = vset.pattern.permute.xlu0 5
    %1058 = vperm.xlu0 %1057, %v105
    %v1059 = vpop.permute.xlu0 %1058
    %1061 = vset.pattern.permute.xlu0 5
    %1062 = vperm.xlu0 %1061, %v106
    %v1063 = vpop.permute.xlu0 %1062
    %1065 = vset.pattern.permute.xlu0 5
    %1066 = vperm.xlu0 %1065, %v107
    %v1067 = vpop.permute.xlu0 %1066
    %1069 = vset.pattern.permute.xlu0 5
    %1070 = vperm.xlu0 %1069, %v108
    %v1071 = vpop.permute.xlu0 %1070
    %vm1073 = vcmp.eq.bf16.partialorder %v1043, %v112
    %vm1074 = vcmp.eq.bf16.partialorder %v1047, %v112
    %vm1075 = vcmp.eq.bf16.partialorder %v1051, %v112
    %vm1076 = vcmp.eq.bf16.partialorder %v1055, %v112
    %vm1077 = vcmp.eq.bf16.partialorder %v1059, %v112
    %vm1078 = vcmp.eq.bf16.partialorder %v1063, %v112
    %vm1079 = vcmp.eq.bf16.partialorder %v1067, %v112
    %vm1080 = vcmp.eq.bf16.partialorder %v1071, %v112
    %v1081 = vsel %vm1073, 65537, 0
    %v1082 = vsel %vm1074, 65537, 0
    %v1083 = vsel %vm1075, 65537, 0
    %v1084 = vsel %vm1076, 65537, 0
    %v1085 = vsel %vm1077, 65537, 0
    %v1086 = vsel %vm1078, 65537, 0
    %v1087 = vsel %vm1079, 65537, 0
    %v1088 = vsel %vm1080, 65537, 0
    %v1089 = vunpack.c.l.b16 %v1081
    %v1090 = vunpack.c.h.b16 %v1081
    %v1091 = vunpack.c.l.b16 %v1082
    %v1092 = vunpack.c.h.b16 %v1082
    %v1093 = vunpack.c.l.b16 %v1083
    %v1094 = vunpack.c.h.b16 %v1083
    %v1095 = vunpack.c.l.b16 %v1084
    %v1096 = vunpack.c.h.b16 %v1084
    %v1097 = vunpack.c.l.b16 %v1085
    %v1098 = vunpack.c.h.b16 %v1085
    %v1099 = vunpack.c.l.b16 %v1086
    %v1100 = vunpack.c.h.b16 %v1086
    %v1101 = vunpack.c.l.b16 %v1087
    %v1102 = vunpack.c.h.b16 %v1087
    %v1103 = vunpack.c.l.b16 %v1088
    %v1104 = vunpack.c.h.b16 %v1088
    %v1105 = vpack.c.b16 %v1089, %v1089
    %v1106 = vpack.c.b16 %v1090, %v1090
    %v1107 = vpack.c.b16 %v1091, %v1091
    %v1108 = vpack.c.b16 %v1092, %v1092
    %v1109 = vpack.c.b16 %v1093, %v1093
    %v1110 = vpack.c.b16 %v1094, %v1094
    %v1111 = vpack.c.b16 %v1095, %v1095
    %v1112 = vpack.c.b16 %v1096, %v1096
    %v1113 = vpack.c.b16 %v1097, %v1097
    %v1114 = vpack.c.b16 %v1098, %v1098
    %v1115 = vpack.c.b16 %v1099, %v1099
    %v1116 = vpack.c.b16 %v1100, %v1100
    %v1117 = vpack.c.b16 %v1101, %v1101
    %v1118 = vpack.c.b16 %v1102, %v1102
    %v1119 = vpack.c.b16 %v1103, %v1103
    %v1120 = vpack.c.b16 %v1104, %v1104
    %vm1121 = vcmp.ne.s16.totalorder %v1105, 0
    %vm1122 = vcmp.ne.s16.totalorder %v1106, 0
    %vm1123 = vcmp.ne.s16.totalorder %v1107, 0
    %vm1124 = vcmp.ne.s16.totalorder %v1108, 0
    %vm1125 = vcmp.ne.s16.totalorder %v1109, 0
    %vm1126 = vcmp.ne.s16.totalorder %v1110, 0
    %vm1127 = vcmp.ne.s16.totalorder %v1111, 0
    %vm1128 = vcmp.ne.s16.totalorder %v1112, 0
    %vm1129 = vcmp.ne.s16.totalorder %v1113, 0
    %vm1130 = vcmp.ne.s16.totalorder %v1114, 0
    %vm1131 = vcmp.ne.s16.totalorder %v1115, 0
    %vm1132 = vcmp.ne.s16.totalorder %v1116, 0
    %vm1133 = vcmp.ne.s16.totalorder %v1117, 0
    %vm1134 = vcmp.ne.s16.totalorder %v1118, 0
    %vm1135 = vcmp.ne.s16.totalorder %v1119, 0
    %vm1136 = vcmp.ne.s16.totalorder %v1120, 0
    %v1137 = vsel %vm1121, 65537, 0
    %v1138 = vsel %vm1122, 65537, 0
    %v1139 = vsel %vm1123, 65537, 0
    %v1140 = vsel %vm1124, 65537, 0
    %v1141 = vsel %vm1125, 65537, 0
    %v1142 = vsel %vm1126, 65537, 0
    %v1143 = vsel %vm1127, 65537, 0
    %v1144 = vsel %vm1128, 65537, 0
    %v1145 = vsel %vm1129, 65537, 0
    %v1146 = vsel %vm1130, 65537, 0
    %v1147 = vsel %vm1131, 65537, 0
    %v1148 = vsel %vm1132, 65537, 0
    %v1149 = vsel %vm1133, 65537, 0
    %v1150 = vsel %vm1134, 65537, 0
    %v1151 = vsel %vm1135, 65537, 0
    %v1152 = vsel %vm1136, 65537, 0
    %v1153 = vunpack.c.l.b16 %v1137
    %v1154 = vunpack.c.l.b16 %v1138
    %v1155 = vunpack.c.l.b16 %v1139
    %v1156 = vunpack.c.l.b16 %v1140
    %v1157 = vunpack.c.l.b16 %v1141
    %v1158 = vunpack.c.l.b16 %v1142
    %v1159 = vunpack.c.l.b16 %v1143
    %v1160 = vunpack.c.l.b16 %v1144
    %v1161 = vunpack.c.l.b16 %v1145
    %v1162 = vunpack.c.l.b16 %v1146
    %v1163 = vunpack.c.l.b16 %v1147
    %v1164 = vunpack.c.l.b16 %v1148
    %v1165 = vunpack.c.l.b16 %v1149
    %v1166 = vunpack.c.l.b16 %v1150
    %v1167 = vunpack.c.l.b16 %v1151
    %v1168 = vunpack.c.l.b16 %v1152
    %vm1169 = vcmp.ne.s32.totalorder %v1153, 0
    %vm1170 = vcmp.ne.s32.totalorder %v1154, 0
    %vm1171 = vcmp.ne.s32.totalorder %v1155, 0
    %vm1172 = vcmp.ne.s32.totalorder %v1156, 0
    %vm1173 = vcmp.ne.s32.totalorder %v1157, 0
    %vm1174 = vcmp.ne.s32.totalorder %v1158, 0
    %vm1175 = vcmp.ne.s32.totalorder %v1159, 0
    %vm1176 = vcmp.ne.s32.totalorder %v1160, 0
    %vm1177 = vcmp.ne.s32.totalorder %v1161, 0
    %vm1178 = vcmp.ne.s32.totalorder %v1162, 0
    %vm1179 = vcmp.ne.s32.totalorder %v1163, 0
    %vm1180 = vcmp.ne.s32.totalorder %v1164, 0
    %vm1181 = vcmp.ne.s32.totalorder %v1165, 0
    %vm1182 = vcmp.ne.s32.totalorder %v1166, 0
    %vm1183 = vcmp.ne.s32.totalorder %v1167, 0
    %vm1184 = vcmp.ne.s32.totalorder %v1168, 0
    %v1185 = vsel %vm1169, 1, 0
    %v1186 = vsel %vm1170, 1, 0
    %v1187 = vsel %vm1171, 1, 0
    %v1188 = vsel %vm1172, 1, 0
    %v1189 = vsel %vm1173, 1, 0
    %v1190 = vsel %vm1174, 1, 0
    %v1191 = vsel %vm1175, 1, 0
    %v1192 = vsel %vm1176, 1, 0
    %v1193 = vsel %vm1177, 1, 0
    %v1194 = vsel %vm1178, 1, 0
    %v1195 = vsel %vm1179, 1, 0
    %v1196 = vsel %vm1180, 1, 0
    %v1197 = vsel %vm1181, 1, 0
    %v1198 = vsel %vm1182, 1, 0
    %v1199 = vsel %vm1183, 1, 0
    %v1200 = vsel %vm1184, 1, 0
    %v1201 = vcvt.s32.f32 %v1185
    %v1202 = vcvt.s32.f32 %v1186
    %v1203 = vcvt.s32.f32 %v1187
    %v1204 = vcvt.s32.f32 %v1188
    %v1205 = vcvt.s32.f32 %v1189
    %v1206 = vcvt.s32.f32 %v1190
    %v1207 = vcvt.s32.f32 %v1191
    %v1208 = vcvt.s32.f32 %v1192
    %v1209 = vcvt.s32.f32 %v1193
    %v1210 = vcvt.s32.f32 %v1194
    %v1211 = vcvt.s32.f32 %v1195
    %v1212 = vcvt.s32.f32 %v1196
    %v1213 = vcvt.s32.f32 %v1197
    %v1214 = vcvt.s32.f32 %v1198
    %v1215 = vcvt.s32.f32 %v1199
    %v1216 = vcvt.s32.f32 %v1200
    %v1217 = vpack.c.bf16 %v1202, %v1201
    %v1218 = vpack.c.bf16 %v1204, %v1203
    %v1219 = vpack.c.bf16 %v1206, %v1205
    %v1220 = vpack.c.bf16 %v1208, %v1207
    %v1221 = vpack.c.bf16 %v1210, %v1209
    %v1222 = vpack.c.bf16 %v1212, %v1211
    %v1223 = vpack.c.bf16 %v1214, %v1213
    %v1224 = vpack.c.bf16 %v1216, %v1215
    %1225 = vset.pattern.permute.xlu0 6
    %1226 = vperm.xlu0 %1225, %v101
    %v1227 = vpop.permute.xlu0 %1226
    %1229 = vset.pattern.permute.xlu0 6
    %1230 = vperm.xlu0 %1229, %v102
    %v1231 = vpop.permute.xlu0 %1230
    %1233 = vset.pattern.permute.xlu0 6
    %1234 = vperm.xlu0 %1233, %v103
    %v1235 = vpop.permute.xlu0 %1234
    %1237 = vset.pattern.permute.xlu0 6
    %1238 = vperm.xlu0 %1237, %v104
    %v1239 = vpop.permute.xlu0 %1238
    %1241 = vset.pattern.permute.xlu0 6
    %1242 = vperm.xlu0 %1241, %v105
    %v1243 = vpop.permute.xlu0 %1242
    %1245 = vset.pattern.permute.xlu0 6
    %1246 = vperm.xlu0 %1245, %v106
    %v1247 = vpop.permute.xlu0 %1246
    %1249 = vset.pattern.permute.xlu0 6
    %1250 = vperm.xlu0 %1249, %v107
    %v1251 = vpop.permute.xlu0 %1250
    %1253 = vset.pattern.permute.xlu0 6
    %1254 = vperm.xlu0 %1253, %v108
    %v1255 = vpop.permute.xlu0 %1254
    %vm1257 = vcmp.eq.bf16.partialorder %v1227, %v112
    %vm1258 = vcmp.eq.bf16.partialorder %v1231, %v112
    %vm1259 = vcmp.eq.bf16.partialorder %v1235, %v112
    %vm1260 = vcmp.eq.bf16.partialorder %v1239, %v112
    %vm1261 = vcmp.eq.bf16.partialorder %v1243, %v112
    %vm1262 = vcmp.eq.bf16.partialorder %v1247, %v112
    %vm1263 = vcmp.eq.bf16.partialorder %v1251, %v112
    %vm1264 = vcmp.eq.bf16.partialorder %v1255, %v112
    %v1265 = vsel %vm1257, 65537, 0
    %v1266 = vsel %vm1258, 65537, 0
    %v1267 = vsel %vm1259, 65537, 0
    %v1268 = vsel %vm1260, 65537, 0
    %v1269 = vsel %vm1261, 65537, 0
    %v1270 = vsel %vm1262, 65537, 0
    %v1271 = vsel %vm1263, 65537, 0
    %v1272 = vsel %vm1264, 65537, 0
    %v1273 = vunpack.c.l.b16 %v1265
    %v1274 = vunpack.c.h.b16 %v1265
    %v1275 = vunpack.c.l.b16 %v1266
    %v1276 = vunpack.c.h.b16 %v1266
    %v1277 = vunpack.c.l.b16 %v1267
    %v1278 = vunpack.c.h.b16 %v1267
    %v1279 = vunpack.c.l.b16 %v1268
    %v1280 = vunpack.c.h.b16 %v1268
    %v1281 = vunpack.c.l.b16 %v1269
    %v1282 = vunpack.c.h.b16 %v1269
    %v1283 = vunpack.c.l.b16 %v1270
    %v1284 = vunpack.c.h.b16 %v1270
    %v1285 = vunpack.c.l.b16 %v1271
    %v1286 = vunpack.c.h.b16 %v1271
    %v1287 = vunpack.c.l.b16 %v1272
    %v1288 = vunpack.c.h.b16 %v1272
    %v1289 = vpack.c.b16 %v1273, %v1273
    %v1290 = vpack.c.b16 %v1274, %v1274
    %v1291 = vpack.c.b16 %v1275, %v1275
    %v1292 = vpack.c.b16 %v1276, %v1276
    %v1293 = vpack.c.b16 %v1277, %v1277
    %v1294 = vpack.c.b16 %v1278, %v1278
    %v1295 = vpack.c.b16 %v1279, %v1279
    %v1296 = vpack.c.b16 %v1280, %v1280
    %v1297 = vpack.c.b16 %v1281, %v1281
    %v1298 = vpack.c.b16 %v1282, %v1282
    %v1299 = vpack.c.b16 %v1283, %v1283
    %v1300 = vpack.c.b16 %v1284, %v1284
    %v1301 = vpack.c.b16 %v1285, %v1285
    %v1302 = vpack.c.b16 %v1286, %v1286
    %v1303 = vpack.c.b16 %v1287, %v1287
    %v1304 = vpack.c.b16 %v1288, %v1288
    %vm1305 = vcmp.ne.s16.totalorder %v1289, 0
    %vm1306 = vcmp.ne.s16.totalorder %v1290, 0
    %vm1307 = vcmp.ne.s16.totalorder %v1291, 0
    %vm1308 = vcmp.ne.s16.totalorder %v1292, 0
    %vm1309 = vcmp.ne.s16.totalorder %v1293, 0
    %vm1310 = vcmp.ne.s16.totalorder %v1294, 0
    %vm1311 = vcmp.ne.s16.totalorder %v1295, 0
    %vm1312 = vcmp.ne.s16.totalorder %v1296, 0
    %vm1313 = vcmp.ne.s16.totalorder %v1297, 0
    %vm1314 = vcmp.ne.s16.totalorder %v1298, 0
    %vm1315 = vcmp.ne.s16.totalorder %v1299, 0
    %vm1316 = vcmp.ne.s16.totalorder %v1300, 0
    %vm1317 = vcmp.ne.s16.totalorder %v1301, 0
    %vm1318 = vcmp.ne.s16.totalorder %v1302, 0
    %vm1319 = vcmp.ne.s16.totalorder %v1303, 0
    %vm1320 = vcmp.ne.s16.totalorder %v1304, 0
    %v1321 = vsel %vm1305, 65537, 0
    %v1322 = vsel %vm1306, 65537, 0
    %v1323 = vsel %vm1307, 65537, 0
    %v1324 = vsel %vm1308, 65537, 0
    %v1325 = vsel %vm1309, 65537, 0
    %v1326 = vsel %vm1310, 65537, 0
    %v1327 = vsel %vm1311, 65537, 0
    %v1328 = vsel %vm1312, 65537, 0
    %v1329 = vsel %vm1313, 65537, 0
    %v1330 = vsel %vm1314, 65537, 0
    %v1331 = vsel %vm1315, 65537, 0
    %v1332 = vsel %vm1316, 65537, 0
    %v1333 = vsel %vm1317, 65537, 0
    %v1334 = vsel %vm1318, 65537, 0
    %v1335 = vsel %vm1319, 65537, 0
    %v1336 = vsel %vm1320, 65537, 0
    %v1337 = vunpack.c.l.b16 %v1321
    %v1338 = vunpack.c.l.b16 %v1322
    %v1339 = vunpack.c.l.b16 %v1323
    %v1340 = vunpack.c.l.b16 %v1324
    %v1341 = vunpack.c.l.b16 %v1325
    %v1342 = vunpack.c.l.b16 %v1326
    %v1343 = vunpack.c.l.b16 %v1327
    %v1344 = vunpack.c.l.b16 %v1328
    %v1345 = vunpack.c.l.b16 %v1329
    %v1346 = vunpack.c.l.b16 %v1330
    %v1347 = vunpack.c.l.b16 %v1331
    %v1348 = vunpack.c.l.b16 %v1332
    %v1349 = vunpack.c.l.b16 %v1333
    %v1350 = vunpack.c.l.b16 %v1334
    %v1351 = vunpack.c.l.b16 %v1335
    %v1352 = vunpack.c.l.b16 %v1336
    %vm1353 = vcmp.ne.s32.totalorder %v1337, 0
    %vm1354 = vcmp.ne.s32.totalorder %v1338, 0
    %vm1355 = vcmp.ne.s32.totalorder %v1339, 0
    %vm1356 = vcmp.ne.s32.totalorder %v1340, 0
    %vm1357 = vcmp.ne.s32.totalorder %v1341, 0
    %vm1358 = vcmp.ne.s32.totalorder %v1342, 0
    %vm1359 = vcmp.ne.s32.totalorder %v1343, 0
    %vm1360 = vcmp.ne.s32.totalorder %v1344, 0
    %vm1361 = vcmp.ne.s32.totalorder %v1345, 0
    %vm1362 = vcmp.ne.s32.totalorder %v1346, 0
    %vm1363 = vcmp.ne.s32.totalorder %v1347, 0
    %vm1364 = vcmp.ne.s32.totalorder %v1348, 0
    %vm1365 = vcmp.ne.s32.totalorder %v1349, 0
    %vm1366 = vcmp.ne.s32.totalorder %v1350, 0
    %vm1367 = vcmp.ne.s32.totalorder %v1351, 0
    %vm1368 = vcmp.ne.s32.totalorder %v1352, 0
    %v1369 = vsel %vm1353, 1, 0
    %v1370 = vsel %vm1354, 1, 0
    %v1371 = vsel %vm1355, 1, 0
    %v1372 = vsel %vm1356, 1, 0
    %v1373 = vsel %vm1357, 1, 0
    %v1374 = vsel %vm1358, 1, 0
    %v1375 = vsel %vm1359, 1, 0
    %v1376 = vsel %vm1360, 1, 0
    %v1377 = vsel %vm1361, 1, 0
    %v1378 = vsel %vm1362, 1, 0
    %v1379 = vsel %vm1363, 1, 0
    %v1380 = vsel %vm1364, 1, 0
    %v1381 = vsel %vm1365, 1, 0
    %v1382 = vsel %vm1366, 1, 0
    %v1383 = vsel %vm1367, 1, 0
    %v1384 = vsel %vm1368, 1, 0
    %v1385 = vcvt.s32.f32 %v1369
    %v1386 = vcvt.s32.f32 %v1370
    %v1387 = vcvt.s32.f32 %v1371
    %v1388 = vcvt.s32.f32 %v1372
    %v1389 = vcvt.s32.f32 %v1373
    %v1390 = vcvt.s32.f32 %v1374
    %v1391 = vcvt.s32.f32 %v1375
    %v1392 = vcvt.s32.f32 %v1376
    %v1393 = vcvt.s32.f32 %v1377
    %v1394 = vcvt.s32.f32 %v1378
    %v1395 = vcvt.s32.f32 %v1379
    %v1396 = vcvt.s32.f32 %v1380
    %v1397 = vcvt.s32.f32 %v1381
    %v1398 = vcvt.s32.f32 %v1382
    %v1399 = vcvt.s32.f32 %v1383
    %v1400 = vcvt.s32.f32 %v1384
    %v1401 = vpack.c.bf16 %v1386, %v1385
    %v1402 = vpack.c.bf16 %v1388, %v1387
    %v1403 = vpack.c.bf16 %v1390, %v1389
    %v1404 = vpack.c.bf16 %v1392, %v1391
    %v1405 = vpack.c.bf16 %v1394, %v1393
    %v1406 = vpack.c.bf16 %v1396, %v1395
    %v1407 = vpack.c.bf16 %v1398, %v1397
    %v1408 = vpack.c.bf16 %v1400, %v1399
    %1409 = vset.pattern.permute.xlu0 7
    %1410 = vperm.xlu0 %1409, %v101
    %v1411 = vpop.permute.xlu0 %1410
    %1413 = vset.pattern.permute.xlu0 7
    %1414 = vperm.xlu0 %1413, %v102
    %v1415 = vpop.permute.xlu0 %1414
    %1417 = vset.pattern.permute.xlu0 7
    %1418 = vperm.xlu0 %1417, %v103
    %v1419 = vpop.permute.xlu0 %1418
    %1421 = vset.pattern.permute.xlu0 7
    %1422 = vperm.xlu0 %1421, %v104
    %v1423 = vpop.permute.xlu0 %1422
    %1425 = vset.pattern.permute.xlu0 7
    %1426 = vperm.xlu0 %1425, %v105
    %v1427 = vpop.permute.xlu0 %1426
    %1429 = vset.pattern.permute.xlu0 7
    %1430 = vperm.xlu0 %1429, %v106
    %v1431 = vpop.permute.xlu0 %1430
    %1433 = vset.pattern.permute.xlu0 7
    %1434 = vperm.xlu0 %1433, %v107
    %v1435 = vpop.permute.xlu0 %1434
    %1437 = vset.pattern.permute.xlu0 7
    %1438 = vperm.xlu0 %1437, %v108
    %v1439 = vpop.permute.xlu0 %1438
    %vm1441 = vcmp.eq.bf16.partialorder %v1411, %v112
    %vm1442 = vcmp.eq.bf16.partialorder %v1415, %v112
    %vm1443 = vcmp.eq.bf16.partialorder %v1419, %v112
    %vm1444 = vcmp.eq.bf16.partialorder %v1423, %v112
    %vm1445 = vcmp.eq.bf16.partialorder %v1427, %v112
    %vm1446 = vcmp.eq.bf16.partialorder %v1431, %v112
    %vm1447 = vcmp.eq.bf16.partialorder %v1435, %v112
    %vm1448 = vcmp.eq.bf16.partialorder %v1439, %v112
    %v1449 = vsel %vm1441, 65537, 0
    %v1450 = vsel %vm1442, 65537, 0
    %v1451 = vsel %vm1443, 65537, 0
    %v1452 = vsel %vm1444, 65537, 0
    %v1453 = vsel %vm1445, 65537, 0
    %v1454 = vsel %vm1446, 65537, 0
    %v1455 = vsel %vm1447, 65537, 0
    %v1456 = vsel %vm1448, 65537, 0
    %v1457 = vunpack.c.l.b16 %v1449
    %v1458 = vunpack.c.h.b16 %v1449
    %v1459 = vunpack.c.l.b16 %v1450
    %v1460 = vunpack.c.h.b16 %v1450
    %v1461 = vunpack.c.l.b16 %v1451
    %v1462 = vunpack.c.h.b16 %v1451
    %v1463 = vunpack.c.l.b16 %v1452
    %v1464 = vunpack.c.h.b16 %v1452
    %v1465 = vunpack.c.l.b16 %v1453
    %v1466 = vunpack.c.h.b16 %v1453
    %v1467 = vunpack.c.l.b16 %v1454
    %v1468 = vunpack.c.h.b16 %v1454
    %v1469 = vunpack.c.l.b16 %v1455
    %v1470 = vunpack.c.h.b16 %v1455
    %v1471 = vunpack.c.l.b16 %v1456
    %v1472 = vunpack.c.h.b16 %v1456
    %v1473 = vpack.c.b16 %v1457, %v1457
    %v1474 = vpack.c.b16 %v1458, %v1458
    %v1475 = vpack.c.b16 %v1459, %v1459
    %v1476 = vpack.c.b16 %v1460, %v1460
    %v1477 = vpack.c.b16 %v1461, %v1461
    %v1478 = vpack.c.b16 %v1462, %v1462
    %v1479 = vpack.c.b16 %v1463, %v1463
    %v1480 = vpack.c.b16 %v1464, %v1464
    %v1481 = vpack.c.b16 %v1465, %v1465
    %v1482 = vpack.c.b16 %v1466, %v1466
    %v1483 = vpack.c.b16 %v1467, %v1467
    %v1484 = vpack.c.b16 %v1468, %v1468
    %v1485 = vpack.c.b16 %v1469, %v1469
    %v1486 = vpack.c.b16 %v1470, %v1470
    %v1487 = vpack.c.b16 %v1471, %v1471
    %v1488 = vpack.c.b16 %v1472, %v1472
    %vm1489 = vcmp.ne.s16.totalorder %v1473, 0
    %vm1490 = vcmp.ne.s16.totalorder %v1474, 0
    %vm1491 = vcmp.ne.s16.totalorder %v1475, 0
    %vm1492 = vcmp.ne.s16.totalorder %v1476, 0
    %vm1493 = vcmp.ne.s16.totalorder %v1477, 0
    %vm1494 = vcmp.ne.s16.totalorder %v1478, 0
    %vm1495 = vcmp.ne.s16.totalorder %v1479, 0
    %vm1496 = vcmp.ne.s16.totalorder %v1480, 0
    %vm1497 = vcmp.ne.s16.totalorder %v1481, 0
    %vm1498 = vcmp.ne.s16.totalorder %v1482, 0
    %vm1499 = vcmp.ne.s16.totalorder %v1483, 0
    %vm1500 = vcmp.ne.s16.totalorder %v1484, 0
    %vm1501 = vcmp.ne.s16.totalorder %v1485, 0
    %vm1502 = vcmp.ne.s16.totalorder %v1486, 0
    %vm1503 = vcmp.ne.s16.totalorder %v1487, 0
    %vm1504 = vcmp.ne.s16.totalorder %v1488, 0
    %v1505 = vsel %vm1489, 65537, 0
    %v1506 = vsel %vm1490, 65537, 0
    %v1507 = vsel %vm1491, 65537, 0
    %v1508 = vsel %vm1492, 65537, 0
    %v1509 = vsel %vm1493, 65537, 0
    %v1510 = vsel %vm1494, 65537, 0
    %v1511 = vsel %vm1495, 65537, 0
    %v1512 = vsel %vm1496, 65537, 0
    %v1513 = vsel %vm1497, 65537, 0
    %v1514 = vsel %vm1498, 65537, 0
    %v1515 = vsel %vm1499, 65537, 0
    %v1516 = vsel %vm1500, 65537, 0
    %v1517 = vsel %vm1501, 65537, 0
    %v1518 = vsel %vm1502, 65537, 0
    %v1519 = vsel %vm1503, 65537, 0
    %v1520 = vsel %vm1504, 65537, 0
    %v1521 = vunpack.c.l.b16 %v1505
    %v1522 = vunpack.c.l.b16 %v1506
    %v1523 = vunpack.c.l.b16 %v1507
    %v1524 = vunpack.c.l.b16 %v1508
    %v1525 = vunpack.c.l.b16 %v1509
    %v1526 = vunpack.c.l.b16 %v1510
    %v1527 = vunpack.c.l.b16 %v1511
    %v1528 = vunpack.c.l.b16 %v1512
    %v1529 = vunpack.c.l.b16 %v1513
    %v1530 = vunpack.c.l.b16 %v1514
    %v1531 = vunpack.c.l.b16 %v1515
    %v1532 = vunpack.c.l.b16 %v1516
    %v1533 = vunpack.c.l.b16 %v1517
    %v1534 = vunpack.c.l.b16 %v1518
    %v1535 = vunpack.c.l.b16 %v1519
    %v1536 = vunpack.c.l.b16 %v1520
    %vm1537 = vcmp.ne.s32.totalorder %v1521, 0
    %vm1538 = vcmp.ne.s32.totalorder %v1522, 0
    %vm1539 = vcmp.ne.s32.totalorder %v1523, 0
    %vm1540 = vcmp.ne.s32.totalorder %v1524, 0
    %vm1541 = vcmp.ne.s32.totalorder %v1525, 0
    %vm1542 = vcmp.ne.s32.totalorder %v1526, 0
    %vm1543 = vcmp.ne.s32.totalorder %v1527, 0
    %vm1544 = vcmp.ne.s32.totalorder %v1528, 0
    %vm1545 = vcmp.ne.s32.totalorder %v1529, 0
    %vm1546 = vcmp.ne.s32.totalorder %v1530, 0
    %vm1547 = vcmp.ne.s32.totalorder %v1531, 0
    %vm1548 = vcmp.ne.s32.totalorder %v1532, 0
    %vm1549 = vcmp.ne.s32.totalorder %v1533, 0
    %vm1550 = vcmp.ne.s32.totalorder %v1534, 0
    %vm1551 = vcmp.ne.s32.totalorder %v1535, 0
    %vm1552 = vcmp.ne.s32.totalorder %v1536, 0
    %v1553 = vsel %vm1537, 1, 0
    %v1554 = vsel %vm1538, 1, 0
    %v1555 = vsel %vm1539, 1, 0
    %v1556 = vsel %vm1540, 1, 0
    %v1557 = vsel %vm1541, 1, 0
    %v1558 = vsel %vm1542, 1, 0
    %v1559 = vsel %vm1543, 1, 0
    %v1560 = vsel %vm1544, 1, 0
    %v1561 = vsel %vm1545, 1, 0
    %v1562 = vsel %vm1546, 1, 0
    %v1563 = vsel %vm1547, 1, 0
    %v1564 = vsel %vm1548, 1, 0
    %v1565 = vsel %vm1549, 1, 0
    %v1566 = vsel %vm1550, 1, 0
    %v1567 = vsel %vm1551, 1, 0
    %v1568 = vsel %vm1552, 1, 0
    %v1569 = vcvt.s32.f32 %v1553
    %v1570 = vcvt.s32.f32 %v1554
    %v1571 = vcvt.s32.f32 %v1555
    %v1572 = vcvt.s32.f32 %v1556
    %v1573 = vcvt.s32.f32 %v1557
    %v1574 = vcvt.s32.f32 %v1558
    %v1575 = vcvt.s32.f32 %v1559
    %v1576 = vcvt.s32.f32 %v1560
    %v1577 = vcvt.s32.f32 %v1561
    %v1578 = vcvt.s32.f32 %v1562
    %v1579 = vcvt.s32.f32 %v1563
    %v1580 = vcvt.s32.f32 %v1564
    %v1581 = vcvt.s32.f32 %v1565
    %v1582 = vcvt.s32.f32 %v1566
    %v1583 = vcvt.s32.f32 %v1567
    %v1584 = vcvt.s32.f32 %v1568
    %v1585 = vpack.c.bf16 %v1570, %v1569
    %v1586 = vpack.c.bf16 %v1572, %v1571
    %v1587 = vpack.c.bf16 %v1574, %v1573
    %v1588 = vpack.c.bf16 %v1576, %v1575
    %v1589 = vpack.c.bf16 %v1578, %v1577
    %v1590 = vpack.c.bf16 %v1580, %v1579
    %v1591 = vpack.c.bf16 %v1582, %v1581
    %v1592 = vpack.c.bf16 %v1584, %v1583
    %1593 = vset.pattern.permute.xlu0 8
    %1594 = vperm.xlu0 %1593, %v101
    %v1595 = vpop.permute.xlu0 %1594
    %1597 = vset.pattern.permute.xlu0 8
    %1598 = vperm.xlu0 %1597, %v102
    %v1599 = vpop.permute.xlu0 %1598
    %1601 = vset.pattern.permute.xlu0 8
    %1602 = vperm.xlu0 %1601, %v103
    %v1603 = vpop.permute.xlu0 %1602
    %1605 = vset.pattern.permute.xlu0 8
    %1606 = vperm.xlu0 %1605, %v104
    %v1607 = vpop.permute.xlu0 %1606
    %1609 = vset.pattern.permute.xlu0 8
    %1610 = vperm.xlu0 %1609, %v105
    %v1611 = vpop.permute.xlu0 %1610
    %1613 = vset.pattern.permute.xlu0 8
    %1614 = vperm.xlu0 %1613, %v106
    %v1615 = vpop.permute.xlu0 %1614
    %1617 = vset.pattern.permute.xlu0 8
    %1618 = vperm.xlu0 %1617, %v107
    %v1619 = vpop.permute.xlu0 %1618
    %1621 = vset.pattern.permute.xlu0 8
    %1622 = vperm.xlu0 %1621, %v108
    %v1623 = vpop.permute.xlu0 %1622
    %vm1625 = vcmp.eq.bf16.partialorder %v1595, %v112
    %vm1626 = vcmp.eq.bf16.partialorder %v1599, %v112
    %vm1627 = vcmp.eq.bf16.partialorder %v1603, %v112
    %vm1628 = vcmp.eq.bf16.partialorder %v1607, %v112
    %vm1629 = vcmp.eq.bf16.partialorder %v1611, %v112
    %vm1630 = vcmp.eq.bf16.partialorder %v1615, %v112
    %vm1631 = vcmp.eq.bf16.partialorder %v1619, %v112
    %vm1632 = vcmp.eq.bf16.partialorder %v1623, %v112
    %v1633 = vsel %vm1625, 65537, 0
    %v1634 = vsel %vm1626, 65537, 0
    %v1635 = vsel %vm1627, 65537, 0
    %v1636 = vsel %vm1628, 65537, 0
    %v1637 = vsel %vm1629, 65537, 0
    %v1638 = vsel %vm1630, 65537, 0
    %v1639 = vsel %vm1631, 65537, 0
    %v1640 = vsel %vm1632, 65537, 0
    %v1641 = vunpack.c.l.b16 %v1633
    %v1642 = vunpack.c.h.b16 %v1633
    %v1643 = vunpack.c.l.b16 %v1634
    %v1644 = vunpack.c.h.b16 %v1634
    %v1645 = vunpack.c.l.b16 %v1635
    %v1646 = vunpack.c.h.b16 %v1635
    %v1647 = vunpack.c.l.b16 %v1636
    %v1648 = vunpack.c.h.b16 %v1636
    %v1649 = vunpack.c.l.b16 %v1637
    %v1650 = vunpack.c.h.b16 %v1637
    %v1651 = vunpack.c.l.b16 %v1638
    %v1652 = vunpack.c.h.b16 %v1638
    %v1653 = vunpack.c.l.b16 %v1639
    %v1654 = vunpack.c.h.b16 %v1639
    %v1655 = vunpack.c.l.b16 %v1640
    %v1656 = vunpack.c.h.b16 %v1640
    %v1657 = vpack.c.b16 %v1641, %v1641
    %v1658 = vpack.c.b16 %v1642, %v1642
    %v1659 = vpack.c.b16 %v1643, %v1643
    %v1660 = vpack.c.b16 %v1644, %v1644
    %v1661 = vpack.c.b16 %v1645, %v1645
    %v1662 = vpack.c.b16 %v1646, %v1646
    %v1663 = vpack.c.b16 %v1647, %v1647
    %v1664 = vpack.c.b16 %v1648, %v1648
    %v1665 = vpack.c.b16 %v1649, %v1649
    %v1666 = vpack.c.b16 %v1650, %v1650
    %v1667 = vpack.c.b16 %v1651, %v1651
    %v1668 = vpack.c.b16 %v1652, %v1652
    %v1669 = vpack.c.b16 %v1653, %v1653
    %v1670 = vpack.c.b16 %v1654, %v1654
    %v1671 = vpack.c.b16 %v1655, %v1655
    %v1672 = vpack.c.b16 %v1656, %v1656
    %vm1673 = vcmp.ne.s16.totalorder %v1657, 0
    %vm1674 = vcmp.ne.s16.totalorder %v1658, 0
    %vm1675 = vcmp.ne.s16.totalorder %v1659, 0
    %vm1676 = vcmp.ne.s16.totalorder %v1660, 0
    %vm1677 = vcmp.ne.s16.totalorder %v1661, 0
    %vm1678 = vcmp.ne.s16.totalorder %v1662, 0
    %vm1679 = vcmp.ne.s16.totalorder %v1663, 0
    %vm1680 = vcmp.ne.s16.totalorder %v1664, 0
    %vm1681 = vcmp.ne.s16.totalorder %v1665, 0
    %vm1682 = vcmp.ne.s16.totalorder %v1666, 0
    %vm1683 = vcmp.ne.s16.totalorder %v1667, 0
    %vm1684 = vcmp.ne.s16.totalorder %v1668, 0
    %vm1685 = vcmp.ne.s16.totalorder %v1669, 0
    %vm1686 = vcmp.ne.s16.totalorder %v1670, 0
    %vm1687 = vcmp.ne.s16.totalorder %v1671, 0
    %vm1688 = vcmp.ne.s16.totalorder %v1672, 0
    %v1689 = vsel %vm1673, 65537, 0
    %v1690 = vsel %vm1674, 65537, 0
    %v1691 = vsel %vm1675, 65537, 0
    %v1692 = vsel %vm1676, 65537, 0
    %v1693 = vsel %vm1677, 65537, 0
    %v1694 = vsel %vm1678, 65537, 0
    %v1695 = vsel %vm1679, 65537, 0
    %v1696 = vsel %vm1680, 65537, 0
    %v1697 = vsel %vm1681, 65537, 0
    %v1698 = vsel %vm1682, 65537, 0
    %v1699 = vsel %vm1683, 65537, 0
    %v1700 = vsel %vm1684, 65537, 0
    %v1701 = vsel %vm1685, 65537, 0
    %v1702 = vsel %vm1686, 65537, 0
    %v1703 = vsel %vm1687, 65537, 0
    %v1704 = vsel %vm1688, 65537, 0
    %v1705 = vunpack.c.l.b16 %v1689
    %v1706 = vunpack.c.l.b16 %v1690
    %v1707 = vunpack.c.l.b16 %v1691
    %v1708 = vunpack.c.l.b16 %v1692
    %v1709 = vunpack.c.l.b16 %v1693
    %v1710 = vunpack.c.l.b16 %v1694
    %v1711 = vunpack.c.l.b16 %v1695
    %v1712 = vunpack.c.l.b16 %v1696
    %v1713 = vunpack.c.l.b16 %v1697
    %v1714 = vunpack.c.l.b16 %v1698
    %v1715 = vunpack.c.l.b16 %v1699
    %v1716 = vunpack.c.l.b16 %v1700
    %v1717 = vunpack.c.l.b16 %v1701
    %v1718 = vunpack.c.l.b16 %v1702
    %v1719 = vunpack.c.l.b16 %v1703
    %v1720 = vunpack.c.l.b16 %v1704
    %vm1721 = vcmp.ne.s32.totalorder %v1705, 0
    %vm1722 = vcmp.ne.s32.totalorder %v1706, 0
    %vm1723 = vcmp.ne.s32.totalorder %v1707, 0
    %vm1724 = vcmp.ne.s32.totalorder %v1708, 0
    %vm1725 = vcmp.ne.s32.totalorder %v1709, 0
    %vm1726 = vcmp.ne.s32.totalorder %v1710, 0
    %vm1727 = vcmp.ne.s32.totalorder %v1711, 0
    %vm1728 = vcmp.ne.s32.totalorder %v1712, 0
    %vm1729 = vcmp.ne.s32.totalorder %v1713, 0
    %vm1730 = vcmp.ne.s32.totalorder %v1714, 0
    %vm1731 = vcmp.ne.s32.totalorder %v1715, 0
    %vm1732 = vcmp.ne.s32.totalorder %v1716, 0
    %vm1733 = vcmp.ne.s32.totalorder %v1717, 0
    %vm1734 = vcmp.ne.s32.totalorder %v1718, 0
    %vm1735 = vcmp.ne.s32.totalorder %v1719, 0
    %vm1736 = vcmp.ne.s32.totalorder %v1720, 0
    %v1737 = vsel %vm1721, 1, 0
    %v1738 = vsel %vm1722, 1, 0
    %v1739 = vsel %vm1723, 1, 0
    %v1740 = vsel %vm1724, 1, 0
    %v1741 = vsel %vm1725, 1, 0
    %v1742 = vsel %vm1726, 1, 0
    %v1743 = vsel %vm1727, 1, 0
    %v1744 = vsel %vm1728, 1, 0
    %v1745 = vsel %vm1729, 1, 0
    %v1746 = vsel %vm1730, 1, 0
    %v1747 = vsel %vm1731, 1, 0
    %v1748 = vsel %vm1732, 1, 0
    %v1749 = vsel %vm1733, 1, 0
    %v1750 = vsel %vm1734, 1, 0
    %v1751 = vsel %vm1735, 1, 0
    %v1752 = vsel %vm1736, 1, 0
    %v1753 = vcvt.s32.f32 %v1737
    %v1754 = vcvt.s32.f32 %v1738
    %v1755 = vcvt.s32.f32 %v1739
    %v1756 = vcvt.s32.f32 %v1740
    %v1757 = vcvt.s32.f32 %v1741
    %v1758 = vcvt.s32.f32 %v1742
    %v1759 = vcvt.s32.f32 %v1743
    %v1760 = vcvt.s32.f32 %v1744
    %v1761 = vcvt.s32.f32 %v1745
    %v1762 = vcvt.s32.f32 %v1746
    %v1763 = vcvt.s32.f32 %v1747
    %v1764 = vcvt.s32.f32 %v1748
    %v1765 = vcvt.s32.f32 %v1749
    %v1766 = vcvt.s32.f32 %v1750
    %v1767 = vcvt.s32.f32 %v1751
    %v1768 = vcvt.s32.f32 %v1752
    %v1769 = vpack.c.bf16 %v1754, %v1753
    %v1770 = vpack.c.bf16 %v1756, %v1755
    %v1771 = vpack.c.bf16 %v1758, %v1757
    %v1772 = vpack.c.bf16 %v1760, %v1759
    %v1773 = vpack.c.bf16 %v1762, %v1761
    %v1774 = vpack.c.bf16 %v1764, %v1763
    %v1775 = vpack.c.bf16 %v1766, %v1765
    %v1776 = vpack.c.bf16 %v1768, %v1767
    %1777 = vset.pattern.permute.xlu0 9
    %1778 = vperm.xlu0 %1777, %v101
    %v1779 = vpop.permute.xlu0 %1778
    %1781 = vset.pattern.permute.xlu0 9
    %1782 = vperm.xlu0 %1781, %v102
    %v1783 = vpop.permute.xlu0 %1782
    %1785 = vset.pattern.permute.xlu0 9
    %1786 = vperm.xlu0 %1785, %v103
    %v1787 = vpop.permute.xlu0 %1786
    %1789 = vset.pattern.permute.xlu0 9
    %1790 = vperm.xlu0 %1789, %v104
    %v1791 = vpop.permute.xlu0 %1790
    %1793 = vset.pattern.permute.xlu0 9
    %1794 = vperm.xlu0 %1793, %v105
    %v1795 = vpop.permute.xlu0 %1794
    %1797 = vset.pattern.permute.xlu0 9
    %1798 = vperm.xlu0 %1797, %v106
    %v1799 = vpop.permute.xlu0 %1798
    %1801 = vset.pattern.permute.xlu0 9
    %1802 = vperm.xlu0 %1801, %v107
    %v1803 = vpop.permute.xlu0 %1802
    %1805 = vset.pattern.permute.xlu0 9
    %1806 = vperm.xlu0 %1805, %v108
    %v1807 = vpop.permute.xlu0 %1806
    %vm1809 = vcmp.eq.bf16.partialorder %v1779, %v112
    %vm1810 = vcmp.eq.bf16.partialorder %v1783, %v112
    %vm1811 = vcmp.eq.bf16.partialorder %v1787, %v112
    %vm1812 = vcmp.eq.bf16.partialorder %v1791, %v112
    %vm1813 = vcmp.eq.bf16.partialorder %v1795, %v112
    %vm1814 = vcmp.eq.bf16.partialorder %v1799, %v112
    %vm1815 = vcmp.eq.bf16.partialorder %v1803, %v112
    %vm1816 = vcmp.eq.bf16.partialorder %v1807, %v112
    %v1817 = vsel %vm1809, 65537, 0
    %v1818 = vsel %vm1810, 65537, 0
    %v1819 = vsel %vm1811, 65537, 0
    %v1820 = vsel %vm1812, 65537, 0
    %v1821 = vsel %vm1813, 65537, 0
    %v1822 = vsel %vm1814, 65537, 0
    %v1823 = vsel %vm1815, 65537, 0
    %v1824 = vsel %vm1816, 65537, 0
    %v1825 = vunpack.c.l.b16 %v1817
    %v1826 = vunpack.c.h.b16 %v1817
    %v1827 = vunpack.c.l.b16 %v1818
    %v1828 = vunpack.c.h.b16 %v1818
    %v1829 = vunpack.c.l.b16 %v1819
    %v1830 = vunpack.c.h.b16 %v1819
    %v1831 = vunpack.c.l.b16 %v1820
    %v1832 = vunpack.c.h.b16 %v1820
    %v1833 = vunpack.c.l.b16 %v1821
    %v1834 = vunpack.c.h.b16 %v1821
    %v1835 = vunpack.c.l.b16 %v1822
    %v1836 = vunpack.c.h.b16 %v1822
    %v1837 = vunpack.c.l.b16 %v1823
    %v1838 = vunpack.c.h.b16 %v1823
    %v1839 = vunpack.c.l.b16 %v1824
    %v1840 = vunpack.c.h.b16 %v1824
    %v1841 = vpack.c.b16 %v1825, %v1825
    %v1842 = vpack.c.b16 %v1826, %v1826
    %v1843 = vpack.c.b16 %v1827, %v1827
    %v1844 = vpack.c.b16 %v1828, %v1828
    %v1845 = vpack.c.b16 %v1829, %v1829
    %v1846 = vpack.c.b16 %v1830, %v1830
    %v1847 = vpack.c.b16 %v1831, %v1831
    %v1848 = vpack.c.b16 %v1832, %v1832
    %v1849 = vpack.c.b16 %v1833, %v1833
    %v1850 = vpack.c.b16 %v1834, %v1834
    %v1851 = vpack.c.b16 %v1835, %v1835
    %v1852 = vpack.c.b16 %v1836, %v1836
    %v1853 = vpack.c.b16 %v1837, %v1837
    %v1854 = vpack.c.b16 %v1838, %v1838
    %v1855 = vpack.c.b16 %v1839, %v1839
    %v1856 = vpack.c.b16 %v1840, %v1840
    %vm1857 = vcmp.ne.s16.totalorder %v1841, 0
    %vm1858 = vcmp.ne.s16.totalorder %v1842, 0
    %vm1859 = vcmp.ne.s16.totalorder %v1843, 0
    %vm1860 = vcmp.ne.s16.totalorder %v1844, 0
    %vm1861 = vcmp.ne.s16.totalorder %v1845, 0
    %vm1862 = vcmp.ne.s16.totalorder %v1846, 0
    %vm1863 = vcmp.ne.s16.totalorder %v1847, 0
    %vm1864 = vcmp.ne.s16.totalorder %v1848, 0
    %vm1865 = vcmp.ne.s16.totalorder %v1849, 0
    %vm1866 = vcmp.ne.s16.totalorder %v1850, 0
    %vm1867 = vcmp.ne.s16.totalorder %v1851, 0
    %vm1868 = vcmp.ne.s16.totalorder %v1852, 0
    %vm1869 = vcmp.ne.s16.totalorder %v1853, 0
    %vm1870 = vcmp.ne.s16.totalorder %v1854, 0
    %vm1871 = vcmp.ne.s16.totalorder %v1855, 0
    %vm1872 = vcmp.ne.s16.totalorder %v1856, 0
    %v1873 = vsel %vm1857, 65537, 0
    %v1874 = vsel %vm1858, 65537, 0
    %v1875 = vsel %vm1859, 65537, 0
    %v1876 = vsel %vm1860, 65537, 0
    %v1877 = vsel %vm1861, 65537, 0
    %v1878 = vsel %vm1862, 65537, 0
    %v1879 = vsel %vm1863, 65537, 0
    %v1880 = vsel %vm1864, 65537, 0
    %v1881 = vsel %vm1865, 65537, 0
    %v1882 = vsel %vm1866, 65537, 0
    %v1883 = vsel %vm1867, 65537, 0
    %v1884 = vsel %vm1868, 65537, 0
    %v1885 = vsel %vm1869, 65537, 0
    %v1886 = vsel %vm1870, 65537, 0
    %v1887 = vsel %vm1871, 65537, 0
    %v1888 = vsel %vm1872, 65537, 0
    %v1889 = vunpack.c.l.b16 %v1873
    %v1890 = vunpack.c.l.b16 %v1874
    %v1891 = vunpack.c.l.b16 %v1875
    %v1892 = vunpack.c.l.b16 %v1876
    %v1893 = vunpack.c.l.b16 %v1877
    %v1894 = vunpack.c.l.b16 %v1878
    %v1895 = vunpack.c.l.b16 %v1879
    %v1896 = vunpack.c.l.b16 %v1880
    %v1897 = vunpack.c.l.b16 %v1881
    %v1898 = vunpack.c.l.b16 %v1882
    %v1899 = vunpack.c.l.b16 %v1883
    %v1900 = vunpack.c.l.b16 %v1884
    %v1901 = vunpack.c.l.b16 %v1885
    %v1902 = vunpack.c.l.b16 %v1886
    %v1903 = vunpack.c.l.b16 %v1887
    %v1904 = vunpack.c.l.b16 %v1888
    %vm1905 = vcmp.ne.s32.totalorder %v1889, 0
    %vm1906 = vcmp.ne.s32.totalorder %v1890, 0
    %vm1907 = vcmp.ne.s32.totalorder %v1891, 0
    %vm1908 = vcmp.ne.s32.totalorder %v1892, 0
    %vm1909 = vcmp.ne.s32.totalorder %v1893, 0
    %vm1910 = vcmp.ne.s32.totalorder %v1894, 0
    %vm1911 = vcmp.ne.s32.totalorder %v1895, 0
    %vm1912 = vcmp.ne.s32.totalorder %v1896, 0
    %vm1913 = vcmp.ne.s32.totalorder %v1897, 0
    %vm1914 = vcmp.ne.s32.totalorder %v1898, 0
    %vm1915 = vcmp.ne.s32.totalorder %v1899, 0
    %vm1916 = vcmp.ne.s32.totalorder %v1900, 0
    %vm1917 = vcmp.ne.s32.totalorder %v1901, 0
    %vm1918 = vcmp.ne.s32.totalorder %v1902, 0
    %vm1919 = vcmp.ne.s32.totalorder %v1903, 0
    %vm1920 = vcmp.ne.s32.totalorder %v1904, 0
    %v1921 = vsel %vm1905, 1, 0
    %v1922 = vsel %vm1906, 1, 0
    %v1923 = vsel %vm1907, 1, 0
    %v1924 = vsel %vm1908, 1, 0
    %v1925 = vsel %vm1909, 1, 0
    %v1926 = vsel %vm1910, 1, 0
    %v1927 = vsel %vm1911, 1, 0
    %v1928 = vsel %vm1912, 1, 0
    %v1929 = vsel %vm1913, 1, 0
    %v1930 = vsel %vm1914, 1, 0
    %v1931 = vsel %vm1915, 1, 0
    %v1932 = vsel %vm1916, 1, 0
    %v1933 = vsel %vm1917, 1, 0
    %v1934 = vsel %vm1918, 1, 0
    %v1935 = vsel %vm1919, 1, 0
    %v1936 = vsel %vm1920, 1, 0
    %v1937 = vcvt.s32.f32 %v1921
    %v1938 = vcvt.s32.f32 %v1922
    %v1939 = vcvt.s32.f32 %v1923
    %v1940 = vcvt.s32.f32 %v1924
    %v1941 = vcvt.s32.f32 %v1925
    %v1942 = vcvt.s32.f32 %v1926
    %v1943 = vcvt.s32.f32 %v1927
    %v1944 = vcvt.s32.f32 %v1928
    %v1945 = vcvt.s32.f32 %v1929
    %v1946 = vcvt.s32.f32 %v1930
    %v1947 = vcvt.s32.f32 %v1931
    %v1948 = vcvt.s32.f32 %v1932
    %v1949 = vcvt.s32.f32 %v1933
    %v1950 = vcvt.s32.f32 %v1934
    %v1951 = vcvt.s32.f32 %v1935
    %v1952 = vcvt.s32.f32 %v1936
    %v1953 = vpack.c.bf16 %v1938, %v1937
    %v1954 = vpack.c.bf16 %v1940, %v1939
    %v1955 = vpack.c.bf16 %v1942, %v1941
    %v1956 = vpack.c.bf16 %v1944, %v1943
    %v1957 = vpack.c.bf16 %v1946, %v1945
    %v1958 = vpack.c.bf16 %v1948, %v1947
    %v1959 = vpack.c.bf16 %v1950, %v1949
    %v1960 = vpack.c.bf16 %v1952, %v1951
    %1961 = vset.pattern.permute.xlu0 10
    %1962 = vperm.xlu0 %1961, %v101
    %v1963 = vpop.permute.xlu0 %1962
    %1965 = vset.pattern.permute.xlu0 10
    %1966 = vperm.xlu0 %1965, %v102
    %v1967 = vpop.permute.xlu0 %1966
    %1969 = vset.pattern.permute.xlu0 10
    %1970 = vperm.xlu0 %1969, %v103
    %v1971 = vpop.permute.xlu0 %1970
    %1973 = vset.pattern.permute.xlu0 10
    %1974 = vperm.xlu0 %1973, %v104
    %v1975 = vpop.permute.xlu0 %1974
    %1977 = vset.pattern.permute.xlu0 10
    %1978 = vperm.xlu0 %1977, %v105
    %v1979 = vpop.permute.xlu0 %1978
    %1981 = vset.pattern.permute.xlu0 10
    %1982 = vperm.xlu0 %1981, %v106
    %v1983 = vpop.permute.xlu0 %1982
    %1985 = vset.pattern.permute.xlu0 10
    %1986 = vperm.xlu0 %1985, %v107
    %v1987 = vpop.permute.xlu0 %1986
    %1989 = vset.pattern.permute.xlu0 10
    %1990 = vperm.xlu0 %1989, %v108
    %v1991 = vpop.permute.xlu0 %1990
    %vm1993 = vcmp.eq.bf16.partialorder %v1963, %v112
    %vm1994 = vcmp.eq.bf16.partialorder %v1967, %v112
    %vm1995 = vcmp.eq.bf16.partialorder %v1971, %v112
    %vm1996 = vcmp.eq.bf16.partialorder %v1975, %v112
    %vm1997 = vcmp.eq.bf16.partialorder %v1979, %v112
    %vm1998 = vcmp.eq.bf16.partialorder %v1983, %v112
    %vm1999 = vcmp.eq.bf16.partialorder %v1987, %v112
    %vm2000 = vcmp.eq.bf16.partialorder %v1991, %v112
    %v2001 = vsel %vm1993, 65537, 0
    %v2002 = vsel %vm1994, 65537, 0
    %v2003 = vsel %vm1995, 65537, 0
    %v2004 = vsel %vm1996, 65537, 0
    %v2005 = vsel %vm1997, 65537, 0
    %v2006 = vsel %vm1998, 65537, 0
    %v2007 = vsel %vm1999, 65537, 0
    %v2008 = vsel %vm2000, 65537, 0
    %v2009 = vunpack.c.l.b16 %v2001
    %v2010 = vunpack.c.h.b16 %v2001
    %v2011 = vunpack.c.l.b16 %v2002
    %v2012 = vunpack.c.h.b16 %v2002
    %v2013 = vunpack.c.l.b16 %v2003
    %v2014 = vunpack.c.h.b16 %v2003
    %v2015 = vunpack.c.l.b16 %v2004
    %v2016 = vunpack.c.h.b16 %v2004
    %v2017 = vunpack.c.l.b16 %v2005
    %v2018 = vunpack.c.h.b16 %v2005
    %v2019 = vunpack.c.l.b16 %v2006
    %v2020 = vunpack.c.h.b16 %v2006
    %v2021 = vunpack.c.l.b16 %v2007
    %v2022 = vunpack.c.h.b16 %v2007
    %v2023 = vunpack.c.l.b16 %v2008
    %v2024 = vunpack.c.h.b16 %v2008
    %v2025 = vpack.c.b16 %v2009, %v2009
    %v2026 = vpack.c.b16 %v2010, %v2010
    %v2027 = vpack.c.b16 %v2011, %v2011
    %v2028 = vpack.c.b16 %v2012, %v2012
    %v2029 = vpack.c.b16 %v2013, %v2013
    %v2030 = vpack.c.b16 %v2014, %v2014
    %v2031 = vpack.c.b16 %v2015, %v2015
    %v2032 = vpack.c.b16 %v2016, %v2016
    %v2033 = vpack.c.b16 %v2017, %v2017
    %v2034 = vpack.c.b16 %v2018, %v2018
    %v2035 = vpack.c.b16 %v2019, %v2019
    %v2036 = vpack.c.b16 %v2020, %v2020
    %v2037 = vpack.c.b16 %v2021, %v2021
    %v2038 = vpack.c.b16 %v2022, %v2022
    %v2039 = vpack.c.b16 %v2023, %v2023
    %v2040 = vpack.c.b16 %v2024, %v2024
    %vm2041 = vcmp.ne.s16.totalorder %v2025, 0
    %vm2042 = vcmp.ne.s16.totalorder %v2026, 0
    %vm2043 = vcmp.ne.s16.totalorder %v2027, 0
    %vm2044 = vcmp.ne.s16.totalorder %v2028, 0
    %vm2045 = vcmp.ne.s16.totalorder %v2029, 0
    %vm2046 = vcmp.ne.s16.totalorder %v2030, 0
    %vm2047 = vcmp.ne.s16.totalorder %v2031, 0
    %vm2048 = vcmp.ne.s16.totalorder %v2032, 0
    %vm2049 = vcmp.ne.s16.totalorder %v2033, 0
    %vm2050 = vcmp.ne.s16.totalorder %v2034, 0
    %vm2051 = vcmp.ne.s16.totalorder %v2035, 0
    %vm2052 = vcmp.ne.s16.totalorder %v2036, 0
    %vm2053 = vcmp.ne.s16.totalorder %v2037, 0
    %vm2054 = vcmp.ne.s16.totalorder %v2038, 0
    %vm2055 = vcmp.ne.s16.totalorder %v2039, 0
    %vm2056 = vcmp.ne.s16.totalorder %v2040, 0
    %v2057 = vsel %vm2041, 65537, 0
    %v2058 = vsel %vm2042, 65537, 0
    %v2059 = vsel %vm2043, 65537, 0
    %v2060 = vsel %vm2044, 65537, 0
    %v2061 = vsel %vm2045, 65537, 0
    %v2062 = vsel %vm2046, 65537, 0
    %v2063 = vsel %vm2047, 65537, 0
    %v2064 = vsel %vm2048, 65537, 0
    %v2065 = vsel %vm2049, 65537, 0
    %v2066 = vsel %vm2050, 65537, 0
    %v2067 = vsel %vm2051, 65537, 0
    %v2068 = vsel %vm2052, 65537, 0
    %v2069 = vsel %vm2053, 65537, 0
    %v2070 = vsel %vm2054, 65537, 0
    %v2071 = vsel %vm2055, 65537, 0
    %v2072 = vsel %vm2056, 65537, 0
    %v2073 = vunpack.c.l.b16 %v2057
    %v2074 = vunpack.c.l.b16 %v2058
    %v2075 = vunpack.c.l.b16 %v2059
    %v2076 = vunpack.c.l.b16 %v2060
    %v2077 = vunpack.c.l.b16 %v2061
    %v2078 = vunpack.c.l.b16 %v2062
    %v2079 = vunpack.c.l.b16 %v2063
    %v2080 = vunpack.c.l.b16 %v2064
    %v2081 = vunpack.c.l.b16 %v2065
    %v2082 = vunpack.c.l.b16 %v2066
    %v2083 = vunpack.c.l.b16 %v2067
    %v2084 = vunpack.c.l.b16 %v2068
    %v2085 = vunpack.c.l.b16 %v2069
    %v2086 = vunpack.c.l.b16 %v2070
    %v2087 = vunpack.c.l.b16 %v2071
    %v2088 = vunpack.c.l.b16 %v2072
    %vm2089 = vcmp.ne.s32.totalorder %v2073, 0
    %vm2090 = vcmp.ne.s32.totalorder %v2074, 0
    %vm2091 = vcmp.ne.s32.totalorder %v2075, 0
    %vm2092 = vcmp.ne.s32.totalorder %v2076, 0
    %vm2093 = vcmp.ne.s32.totalorder %v2077, 0
    %vm2094 = vcmp.ne.s32.totalorder %v2078, 0
    %vm2095 = vcmp.ne.s32.totalorder %v2079, 0
    %vm2096 = vcmp.ne.s32.totalorder %v2080, 0
    %vm2097 = vcmp.ne.s32.totalorder %v2081, 0
    %vm2098 = vcmp.ne.s32.totalorder %v2082, 0
    %vm2099 = vcmp.ne.s32.totalorder %v2083, 0
    %vm2100 = vcmp.ne.s32.totalorder %v2084, 0
    %vm2101 = vcmp.ne.s32.totalorder %v2085, 0
    %vm2102 = vcmp.ne.s32.totalorder %v2086, 0
    %vm2103 = vcmp.ne.s32.totalorder %v2087, 0
    %vm2104 = vcmp.ne.s32.totalorder %v2088, 0
    %v2105 = vsel %vm2089, 1, 0
    %v2106 = vsel %vm2090, 1, 0
    %v2107 = vsel %vm2091, 1, 0
    %v2108 = vsel %vm2092, 1, 0
    %v2109 = vsel %vm2093, 1, 0
    %v2110 = vsel %vm2094, 1, 0
    %v2111 = vsel %vm2095, 1, 0
    %v2112 = vsel %vm2096, 1, 0
    %v2113 = vsel %vm2097, 1, 0
    %v2114 = vsel %vm2098, 1, 0
    %v2115 = vsel %vm2099, 1, 0
    %v2116 = vsel %vm2100, 1, 0
    %v2117 = vsel %vm2101, 1, 0
    %v2118 = vsel %vm2102, 1, 0
    %v2119 = vsel %vm2103, 1, 0
    %v2120 = vsel %vm2104, 1, 0
    %v2121 = vcvt.s32.f32 %v2105
    %v2122 = vcvt.s32.f32 %v2106
    %v2123 = vcvt.s32.f32 %v2107
    %v2124 = vcvt.s32.f32 %v2108
    %v2125 = vcvt.s32.f32 %v2109
    %v2126 = vcvt.s32.f32 %v2110
    %v2127 = vcvt.s32.f32 %v2111
    %v2128 = vcvt.s32.f32 %v2112
    %v2129 = vcvt.s32.f32 %v2113
    %v2130 = vcvt.s32.f32 %v2114
    %v2131 = vcvt.s32.f32 %v2115
    %v2132 = vcvt.s32.f32 %v2116
    %v2133 = vcvt.s32.f32 %v2117
    %v2134 = vcvt.s32.f32 %v2118
    %v2135 = vcvt.s32.f32 %v2119
    %v2136 = vcvt.s32.f32 %v2120
    %v2137 = vpack.c.bf16 %v2122, %v2121
    %v2138 = vpack.c.bf16 %v2124, %v2123
    %v2139 = vpack.c.bf16 %v2126, %v2125
    %v2140 = vpack.c.bf16 %v2128, %v2127
    %v2141 = vpack.c.bf16 %v2130, %v2129
    %v2142 = vpack.c.bf16 %v2132, %v2131
    %v2143 = vpack.c.bf16 %v2134, %v2133
    %v2144 = vpack.c.bf16 %v2136, %v2135
    %2145 = vset.pattern.permute.xlu0 11
    %2146 = vperm.xlu0 %2145, %v101
    %v2147 = vpop.permute.xlu0 %2146
    %2149 = vset.pattern.permute.xlu0 11
    %2150 = vperm.xlu0 %2149, %v102
    %v2151 = vpop.permute.xlu0 %2150
    %2153 = vset.pattern.permute.xlu0 11
    %2154 = vperm.xlu0 %2153, %v103
    %v2155 = vpop.permute.xlu0 %2154
    %2157 = vset.pattern.permute.xlu0 11
    %2158 = vperm.xlu0 %2157, %v104
    %v2159 = vpop.permute.xlu0 %2158
    %2161 = vset.pattern.permute.xlu0 11
    %2162 = vperm.xlu0 %2161, %v105
    %v2163 = vpop.permute.xlu0 %2162
    %2165 = vset.pattern.permute.xlu0 11
    %2166 = vperm.xlu0 %2165, %v106
    %v2167 = vpop.permute.xlu0 %2166
    %2169 = vset.pattern.permute.xlu0 11
    %2170 = vperm.xlu0 %2169, %v107
    %v2171 = vpop.permute.xlu0 %2170
    %2173 = vset.pattern.permute.xlu0 11
    %2174 = vperm.xlu0 %2173, %v108
    %v2175 = vpop.permute.xlu0 %2174
    %vm2177 = vcmp.eq.bf16.partialorder %v2147, %v112
    %vm2178 = vcmp.eq.bf16.partialorder %v2151, %v112
    %vm2179 = vcmp.eq.bf16.partialorder %v2155, %v112
    %vm2180 = vcmp.eq.bf16.partialorder %v2159, %v112
    %vm2181 = vcmp.eq.bf16.partialorder %v2163, %v112
    %vm2182 = vcmp.eq.bf16.partialorder %v2167, %v112
    %vm2183 = vcmp.eq.bf16.partialorder %v2171, %v112
    %vm2184 = vcmp.eq.bf16.partialorder %v2175, %v112
    %v2185 = vsel %vm2177, 65537, 0
    %v2186 = vsel %vm2178, 65537, 0
    %v2187 = vsel %vm2179, 65537, 0
    %v2188 = vsel %vm2180, 65537, 0
    %v2189 = vsel %vm2181, 65537, 0
    %v2190 = vsel %vm2182, 65537, 0
    %v2191 = vsel %vm2183, 65537, 0
    %v2192 = vsel %vm2184, 65537, 0
    %v2193 = vunpack.c.l.b16 %v2185
    %v2194 = vunpack.c.h.b16 %v2185
    %v2195 = vunpack.c.l.b16 %v2186
    %v2196 = vunpack.c.h.b16 %v2186
    %v2197 = vunpack.c.l.b16 %v2187
    %v2198 = vunpack.c.h.b16 %v2187
    %v2199 = vunpack.c.l.b16 %v2188
    %v2200 = vunpack.c.h.b16 %v2188
    %v2201 = vunpack.c.l.b16 %v2189
    %v2202 = vunpack.c.h.b16 %v2189
    %v2203 = vunpack.c.l.b16 %v2190
    %v2204 = vunpack.c.h.b16 %v2190
    %v2205 = vunpack.c.l.b16 %v2191
    %v2206 = vunpack.c.h.b16 %v2191
    %v2207 = vunpack.c.l.b16 %v2192
    %v2208 = vunpack.c.h.b16 %v2192
    %v2209 = vpack.c.b16 %v2193, %v2193
    %v2210 = vpack.c.b16 %v2194, %v2194
    %v2211 = vpack.c.b16 %v2195, %v2195
    %v2212 = vpack.c.b16 %v2196, %v2196
    %v2213 = vpack.c.b16 %v2197, %v2197
    %v2214 = vpack.c.b16 %v2198, %v2198
    %v2215 = vpack.c.b16 %v2199, %v2199
    %v2216 = vpack.c.b16 %v2200, %v2200
    %v2217 = vpack.c.b16 %v2201, %v2201
    %v2218 = vpack.c.b16 %v2202, %v2202
    %v2219 = vpack.c.b16 %v2203, %v2203
    %v2220 = vpack.c.b16 %v2204, %v2204
    %v2221 = vpack.c.b16 %v2205, %v2205
    %v2222 = vpack.c.b16 %v2206, %v2206
    %v2223 = vpack.c.b16 %v2207, %v2207
    %v2224 = vpack.c.b16 %v2208, %v2208
    %vm2225 = vcmp.ne.s16.totalorder %v2209, 0
    %vm2226 = vcmp.ne.s16.totalorder %v2210, 0
    %vm2227 = vcmp.ne.s16.totalorder %v2211, 0
    %vm2228 = vcmp.ne.s16.totalorder %v2212, 0
    %vm2229 = vcmp.ne.s16.totalorder %v2213, 0
    %vm2230 = vcmp.ne.s16.totalorder %v2214, 0
    %vm2231 = vcmp.ne.s16.totalorder %v2215, 0
    %vm2232 = vcmp.ne.s16.totalorder %v2216, 0
    %vm2233 = vcmp.ne.s16.totalorder %v2217, 0
    %vm2234 = vcmp.ne.s16.totalorder %v2218, 0
    %vm2235 = vcmp.ne.s16.totalorder %v2219, 0
    %vm2236 = vcmp.ne.s16.totalorder %v2220, 0
    %vm2237 = vcmp.ne.s16.totalorder %v2221, 0
    %vm2238 = vcmp.ne.s16.totalorder %v2222, 0
    %vm2239 = vcmp.ne.s16.totalorder %v2223, 0
    %vm2240 = vcmp.ne.s16.totalorder %v2224, 0
    %v2241 = vsel %vm2225, 65537, 0
    %v2242 = vsel %vm2226, 65537, 0
    %v2243 = vsel %vm2227, 65537, 0
    %v2244 = vsel %vm2228, 65537, 0
    %v2245 = vsel %vm2229, 65537, 0
    %v2246 = vsel %vm2230, 65537, 0
    %v2247 = vsel %vm2231, 65537, 0
    %v2248 = vsel %vm2232, 65537, 0
    %v2249 = vsel %vm2233, 65537, 0
    %v2250 = vsel %vm2234, 65537, 0
    %v2251 = vsel %vm2235, 65537, 0
    %v2252 = vsel %vm2236, 65537, 0
    %v2253 = vsel %vm2237, 65537, 0
    %v2254 = vsel %vm2238, 65537, 0
    %v2255 = vsel %vm2239, 65537, 0
    %v2256 = vsel %vm2240, 65537, 0
    %v2257 = vunpack.c.l.b16 %v2241
    %v2258 = vunpack.c.l.b16 %v2242
    %v2259 = vunpack.c.l.b16 %v2243
    %v2260 = vunpack.c.l.b16 %v2244
    %v2261 = vunpack.c.l.b16 %v2245
    %v2262 = vunpack.c.l.b16 %v2246
    %v2263 = vunpack.c.l.b16 %v2247
    %v2264 = vunpack.c.l.b16 %v2248
    %v2265 = vunpack.c.l.b16 %v2249
    %v2266 = vunpack.c.l.b16 %v2250
    %v2267 = vunpack.c.l.b16 %v2251
    %v2268 = vunpack.c.l.b16 %v2252
    %v2269 = vunpack.c.l.b16 %v2253
    %v2270 = vunpack.c.l.b16 %v2254
    %v2271 = vunpack.c.l.b16 %v2255
    %v2272 = vunpack.c.l.b16 %v2256
    %vm2273 = vcmp.ne.s32.totalorder %v2257, 0
    %vm2274 = vcmp.ne.s32.totalorder %v2258, 0
    %vm2275 = vcmp.ne.s32.totalorder %v2259, 0
    %vm2276 = vcmp.ne.s32.totalorder %v2260, 0
    %vm2277 = vcmp.ne.s32.totalorder %v2261, 0
    %vm2278 = vcmp.ne.s32.totalorder %v2262, 0
    %vm2279 = vcmp.ne.s32.totalorder %v2263, 0
    %vm2280 = vcmp.ne.s32.totalorder %v2264, 0
    %vm2281 = vcmp.ne.s32.totalorder %v2265, 0
    %vm2282 = vcmp.ne.s32.totalorder %v2266, 0
    %vm2283 = vcmp.ne.s32.totalorder %v2267, 0
    %vm2284 = vcmp.ne.s32.totalorder %v2268, 0
    %vm2285 = vcmp.ne.s32.totalorder %v2269, 0
    %vm2286 = vcmp.ne.s32.totalorder %v2270, 0
    %vm2287 = vcmp.ne.s32.totalorder %v2271, 0
    %vm2288 = vcmp.ne.s32.totalorder %v2272, 0
    %v2289 = vsel %vm2273, 1, 0
    %v2290 = vsel %vm2274, 1, 0
    %v2291 = vsel %vm2275, 1, 0
    %v2292 = vsel %vm2276, 1, 0
    %v2293 = vsel %vm2277, 1, 0
    %v2294 = vsel %vm2278, 1, 0
    %v2295 = vsel %vm2279, 1, 0
    %v2296 = vsel %vm2280, 1, 0
    %v2297 = vsel %vm2281, 1, 0
    %v2298 = vsel %vm2282, 1, 0
    %v2299 = vsel %vm2283, 1, 0
    %v2300 = vsel %vm2284, 1, 0
    %v2301 = vsel %vm2285, 1, 0
    %v2302 = vsel %vm2286, 1, 0
    %v2303 = vsel %vm2287, 1, 0
    %v2304 = vsel %vm2288, 1, 0
    %v2305 = vcvt.s32.f32 %v2289
    %v2306 = vcvt.s32.f32 %v2290
    %v2307 = vcvt.s32.f32 %v2291
    %v2308 = vcvt.s32.f32 %v2292
    %v2309 = vcvt.s32.f32 %v2293
    %v2310 = vcvt.s32.f32 %v2294
    %v2311 = vcvt.s32.f32 %v2295
    %v2312 = vcvt.s32.f32 %v2296
    %v2313 = vcvt.s32.f32 %v2297
    %v2314 = vcvt.s32.f32 %v2298
    %v2315 = vcvt.s32.f32 %v2299
    %v2316 = vcvt.s32.f32 %v2300
    %v2317 = vcvt.s32.f32 %v2301
    %v2318 = vcvt.s32.f32 %v2302
    %v2319 = vcvt.s32.f32 %v2303
    %v2320 = vcvt.s32.f32 %v2304
    %v2321 = vpack.c.bf16 %v2306, %v2305
    %v2322 = vpack.c.bf16 %v2308, %v2307
    %v2323 = vpack.c.bf16 %v2310, %v2309
    %v2324 = vpack.c.bf16 %v2312, %v2311
    %v2325 = vpack.c.bf16 %v2314, %v2313
    %v2326 = vpack.c.bf16 %v2316, %v2315
    %v2327 = vpack.c.bf16 %v2318, %v2317
    %v2328 = vpack.c.bf16 %v2320, %v2319
    %2329 = vset.pattern.permute.xlu0 12
    %2330 = vperm.xlu0 %2329, %v101
    %v2331 = vpop.permute.xlu0 %2330
    %2333 = vset.pattern.permute.xlu0 12
    %2334 = vperm.xlu0 %2333, %v102
    %v2335 = vpop.permute.xlu0 %2334
    %2337 = vset.pattern.permute.xlu0 12
    %2338 = vperm.xlu0 %2337, %v103
    %v2339 = vpop.permute.xlu0 %2338
    %2341 = vset.pattern.permute.xlu0 12
    %2342 = vperm.xlu0 %2341, %v104
    %v2343 = vpop.permute.xlu0 %2342
    %2345 = vset.pattern.permute.xlu0 12
    %2346 = vperm.xlu0 %2345, %v105
    %v2347 = vpop.permute.xlu0 %2346
    %2349 = vset.pattern.permute.xlu0 12
    %2350 = vperm.xlu0 %2349, %v106
    %v2351 = vpop.permute.xlu0 %2350
    %2353 = vset.pattern.permute.xlu0 12
    %2354 = vperm.xlu0 %2353, %v107
    %v2355 = vpop.permute.xlu0 %2354
    %2357 = vset.pattern.permute.xlu0 12
    %2358 = vperm.xlu0 %2357, %v108
    %v2359 = vpop.permute.xlu0 %2358
    %vm2361 = vcmp.eq.bf16.partialorder %v2331, %v112
    %vm2362 = vcmp.eq.bf16.partialorder %v2335, %v112
    %vm2363 = vcmp.eq.bf16.partialorder %v2339, %v112
    %vm2364 = vcmp.eq.bf16.partialorder %v2343, %v112
    %vm2365 = vcmp.eq.bf16.partialorder %v2347, %v112
    %vm2366 = vcmp.eq.bf16.partialorder %v2351, %v112
    %vm2367 = vcmp.eq.bf16.partialorder %v2355, %v112
    %vm2368 = vcmp.eq.bf16.partialorder %v2359, %v112
    %v2369 = vsel %vm2361, 65537, 0
    %v2370 = vsel %vm2362, 65537, 0
    %v2371 = vsel %vm2363, 65537, 0
    %v2372 = vsel %vm2364, 65537, 0
    %v2373 = vsel %vm2365, 65537, 0
    %v2374 = vsel %vm2366, 65537, 0
    %v2375 = vsel %vm2367, 65537, 0
    %v2376 = vsel %vm2368, 65537, 0
    %v2377 = vunpack.c.l.b16 %v2369
    %v2378 = vunpack.c.h.b16 %v2369
    %v2379 = vunpack.c.l.b16 %v2370
    %v2380 = vunpack.c.h.b16 %v2370
    %v2381 = vunpack.c.l.b16 %v2371
    %v2382 = vunpack.c.h.b16 %v2371
    %v2383 = vunpack.c.l.b16 %v2372
    %v2384 = vunpack.c.h.b16 %v2372
    %v2385 = vunpack.c.l.b16 %v2373
    %v2386 = vunpack.c.h.b16 %v2373
    %v2387 = vunpack.c.l.b16 %v2374
    %v2388 = vunpack.c.h.b16 %v2374
    %v2389 = vunpack.c.l.b16 %v2375
    %v2390 = vunpack.c.h.b16 %v2375
    %v2391 = vunpack.c.l.b16 %v2376
    %v2392 = vunpack.c.h.b16 %v2376
    %v2393 = vpack.c.b16 %v2377, %v2377
    %v2394 = vpack.c.b16 %v2378, %v2378
    %v2395 = vpack.c.b16 %v2379, %v2379
    %v2396 = vpack.c.b16 %v2380, %v2380
    %v2397 = vpack.c.b16 %v2381, %v2381
    %v2398 = vpack.c.b16 %v2382, %v2382
    %v2399 = vpack.c.b16 %v2383, %v2383
    %v2400 = vpack.c.b16 %v2384, %v2384
    %v2401 = vpack.c.b16 %v2385, %v2385
    %v2402 = vpack.c.b16 %v2386, %v2386
    %v2403 = vpack.c.b16 %v2387, %v2387
    %v2404 = vpack.c.b16 %v2388, %v2388
    %v2405 = vpack.c.b16 %v2389, %v2389
    %v2406 = vpack.c.b16 %v2390, %v2390
    %v2407 = vpack.c.b16 %v2391, %v2391
    %v2408 = vpack.c.b16 %v2392, %v2392
    %vm2409 = vcmp.ne.s16.totalorder %v2393, 0
    %vm2410 = vcmp.ne.s16.totalorder %v2394, 0
    %vm2411 = vcmp.ne.s16.totalorder %v2395, 0
    %vm2412 = vcmp.ne.s16.totalorder %v2396, 0
    %vm2413 = vcmp.ne.s16.totalorder %v2397, 0
    %vm2414 = vcmp.ne.s16.totalorder %v2398, 0
    %vm2415 = vcmp.ne.s16.totalorder %v2399, 0
    %vm2416 = vcmp.ne.s16.totalorder %v2400, 0
    %vm2417 = vcmp.ne.s16.totalorder %v2401, 0
    %vm2418 = vcmp.ne.s16.totalorder %v2402, 0
    %vm2419 = vcmp.ne.s16.totalorder %v2403, 0
    %vm2420 = vcmp.ne.s16.totalorder %v2404, 0
    %vm2421 = vcmp.ne.s16.totalorder %v2405, 0
    %vm2422 = vcmp.ne.s16.totalorder %v2406, 0
    %vm2423 = vcmp.ne.s16.totalorder %v2407, 0
    %vm2424 = vcmp.ne.s16.totalorder %v2408, 0
    %v2425 = vsel %vm2409, 65537, 0
    %v2426 = vsel %vm2410, 65537, 0
    %v2427 = vsel %vm2411, 65537, 0
    %v2428 = vsel %vm2412, 65537, 0
    %v2429 = vsel %vm2413, 65537, 0
    %v2430 = vsel %vm2414, 65537, 0
    %v2431 = vsel %vm2415, 65537, 0
    %v2432 = vsel %vm2416, 65537, 0
    %v2433 = vsel %vm2417, 65537, 0
    %v2434 = vsel %vm2418, 65537, 0
    %v2435 = vsel %vm2419, 65537, 0
    %v2436 = vsel %vm2420, 65537, 0
    %v2437 = vsel %vm2421, 65537, 0
    %v2438 = vsel %vm2422, 65537, 0
    %v2439 = vsel %vm2423, 65537, 0
    %v2440 = vsel %vm2424, 65537, 0
    %v2441 = vunpack.c.l.b16 %v2425
    %v2442 = vunpack.c.l.b16 %v2426
    %v2443 = vunpack.c.l.b16 %v2427
    %v2444 = vunpack.c.l.b16 %v2428
    %v2445 = vunpack.c.l.b16 %v2429
    %v2446 = vunpack.c.l.b16 %v2430
    %v2447 = vunpack.c.l.b16 %v2431
    %v2448 = vunpack.c.l.b16 %v2432
    %v2449 = vunpack.c.l.b16 %v2433
    %v2450 = vunpack.c.l.b16 %v2434
    %v2451 = vunpack.c.l.b16 %v2435
    %v2452 = vunpack.c.l.b16 %v2436
    %v2453 = vunpack.c.l.b16 %v2437
    %v2454 = vunpack.c.l.b16 %v2438
    %v2455 = vunpack.c.l.b16 %v2439
    %v2456 = vunpack.c.l.b16 %v2440
    %vm2457 = vcmp.ne.s32.totalorder %v2441, 0
    %vm2458 = vcmp.ne.s32.totalorder %v2442, 0
    %vm2459 = vcmp.ne.s32.totalorder %v2443, 0
    %vm2460 = vcmp.ne.s32.totalorder %v2444, 0
    %vm2461 = vcmp.ne.s32.totalorder %v2445, 0
    %vm2462 = vcmp.ne.s32.totalorder %v2446, 0
    %vm2463 = vcmp.ne.s32.totalorder %v2447, 0
    %vm2464 = vcmp.ne.s32.totalorder %v2448, 0
    %vm2465 = vcmp.ne.s32.totalorder %v2449, 0
    %vm2466 = vcmp.ne.s32.totalorder %v2450, 0
    %vm2467 = vcmp.ne.s32.totalorder %v2451, 0
    %vm2468 = vcmp.ne.s32.totalorder %v2452, 0
    %vm2469 = vcmp.ne.s32.totalorder %v2453, 0
    %vm2470 = vcmp.ne.s32.totalorder %v2454, 0
    %vm2471 = vcmp.ne.s32.totalorder %v2455, 0
    %vm2472 = vcmp.ne.s32.totalorder %v2456, 0
    %v2473 = vsel %vm2457, 1, 0
    %v2474 = vsel %vm2458, 1, 0
    %v2475 = vsel %vm2459, 1, 0
    %v2476 = vsel %vm2460, 1, 0
    %v2477 = vsel %vm2461, 1, 0
    %v2478 = vsel %vm2462, 1, 0
    %v2479 = vsel %vm2463, 1, 0
    %v2480 = vsel %vm2464, 1, 0
    %v2481 = vsel %vm2465, 1, 0
    %v2482 = vsel %vm2466, 1, 0
    %v2483 = vsel %vm2467, 1, 0
    %v2484 = vsel %vm2468, 1, 0
    %v2485 = vsel %vm2469, 1, 0
    %v2486 = vsel %vm2470, 1, 0
    %v2487 = vsel %vm2471, 1, 0
    %v2488 = vsel %vm2472, 1, 0
    %v2489 = vcvt.s32.f32 %v2473
    %v2490 = vcvt.s32.f32 %v2474
    %v2491 = vcvt.s32.f32 %v2475
    %v2492 = vcvt.s32.f32 %v2476
    %v2493 = vcvt.s32.f32 %v2477
    %v2494 = vcvt.s32.f32 %v2478
    %v2495 = vcvt.s32.f32 %v2479
    %v2496 = vcvt.s32.f32 %v2480
    %v2497 = vcvt.s32.f32 %v2481
    %v2498 = vcvt.s32.f32 %v2482
    %v2499 = vcvt.s32.f32 %v2483
    %v2500 = vcvt.s32.f32 %v2484
    %v2501 = vcvt.s32.f32 %v2485
    %v2502 = vcvt.s32.f32 %v2486
    %v2503 = vcvt.s32.f32 %v2487
    %v2504 = vcvt.s32.f32 %v2488
    %v2505 = vpack.c.bf16 %v2490, %v2489
    %v2506 = vpack.c.bf16 %v2492, %v2491
    %v2507 = vpack.c.bf16 %v2494, %v2493
    %v2508 = vpack.c.bf16 %v2496, %v2495
    %v2509 = vpack.c.bf16 %v2498, %v2497
    %v2510 = vpack.c.bf16 %v2500, %v2499
    %v2511 = vpack.c.bf16 %v2502, %v2501
    %v2512 = vpack.c.bf16 %v2504, %v2503
    %2513 = vset.pattern.permute.xlu0 13
    %2514 = vperm.xlu0 %2513, %v101
    %v2515 = vpop.permute.xlu0 %2514
    %2517 = vset.pattern.permute.xlu0 13
    %2518 = vperm.xlu0 %2517, %v102
    %v2519 = vpop.permute.xlu0 %2518
    %2521 = vset.pattern.permute.xlu0 13
    %2522 = vperm.xlu0 %2521, %v103
    %v2523 = vpop.permute.xlu0 %2522
    %2525 = vset.pattern.permute.xlu0 13
    %2526 = vperm.xlu0 %2525, %v104
    %v2527 = vpop.permute.xlu0 %2526
    %2529 = vset.pattern.permute.xlu0 13
    %2530 = vperm.xlu0 %2529, %v105
    %v2531 = vpop.permute.xlu0 %2530
    %2533 = vset.pattern.permute.xlu0 13
    %2534 = vperm.xlu0 %2533, %v106
    %v2535 = vpop.permute.xlu0 %2534
    %2537 = vset.pattern.permute.xlu0 13
    %2538 = vperm.xlu0 %2537, %v107
    %v2539 = vpop.permute.xlu0 %2538
    %2541 = vset.pattern.permute.xlu0 13
    %2542 = vperm.xlu0 %2541, %v108
    %v2543 = vpop.permute.xlu0 %2542
    %vm2545 = vcmp.eq.bf16.partialorder %v2515, %v112
    %vm2546 = vcmp.eq.bf16.partialorder %v2519, %v112
    %vm2547 = vcmp.eq.bf16.partialorder %v2523, %v112
    %vm2548 = vcmp.eq.bf16.partialorder %v2527, %v112
    %vm2549 = vcmp.eq.bf16.partialorder %v2531, %v112
    %vm2550 = vcmp.eq.bf16.partialorder %v2535, %v112
    %vm2551 = vcmp.eq.bf16.partialorder %v2539, %v112
    %vm2552 = vcmp.eq.bf16.partialorder %v2543, %v112
    %v2553 = vsel %vm2545, 65537, 0
    %v2554 = vsel %vm2546, 65537, 0
    %v2555 = vsel %vm2547, 65537, 0
    %v2556 = vsel %vm2548, 65537, 0
    %v2557 = vsel %vm2549, 65537, 0
    %v2558 = vsel %vm2550, 65537, 0
    %v2559 = vsel %vm2551, 65537, 0
    %v2560 = vsel %vm2552, 65537, 0
    %v2561 = vunpack.c.l.b16 %v2553
    %v2562 = vunpack.c.h.b16 %v2553
    %v2563 = vunpack.c.l.b16 %v2554
    %v2564 = vunpack.c.h.b16 %v2554
    %v2565 = vunpack.c.l.b16 %v2555
    %v2566 = vunpack.c.h.b16 %v2555
    %v2567 = vunpack.c.l.b16 %v2556
    %v2568 = vunpack.c.h.b16 %v2556
    %v2569 = vunpack.c.l.b16 %v2557
    %v2570 = vunpack.c.h.b16 %v2557
    %v2571 = vunpack.c.l.b16 %v2558
    %v2572 = vunpack.c.h.b16 %v2558
    %v2573 = vunpack.c.l.b16 %v2559
    %v2574 = vunpack.c.h.b16 %v2559
    %v2575 = vunpack.c.l.b16 %v2560
    %v2576 = vunpack.c.h.b16 %v2560
    %v2577 = vpack.c.b16 %v2561, %v2561
    %v2578 = vpack.c.b16 %v2562, %v2562
    %v2579 = vpack.c.b16 %v2563, %v2563
    %v2580 = vpack.c.b16 %v2564, %v2564
    %v2581 = vpack.c.b16 %v2565, %v2565
    %v2582 = vpack.c.b16 %v2566, %v2566
    %v2583 = vpack.c.b16 %v2567, %v2567
    %v2584 = vpack.c.b16 %v2568, %v2568
    %v2585 = vpack.c.b16 %v2569, %v2569
    %v2586 = vpack.c.b16 %v2570, %v2570
    %v2587 = vpack.c.b16 %v2571, %v2571
    %v2588 = vpack.c.b16 %v2572, %v2572
    %v2589 = vpack.c.b16 %v2573, %v2573
    %v2590 = vpack.c.b16 %v2574, %v2574
    %v2591 = vpack.c.b16 %v2575, %v2575
    %v2592 = vpack.c.b16 %v2576, %v2576
    %vm2593 = vcmp.ne.s16.totalorder %v2577, 0
    %vm2594 = vcmp.ne.s16.totalorder %v2578, 0
    %vm2595 = vcmp.ne.s16.totalorder %v2579, 0
    %vm2596 = vcmp.ne.s16.totalorder %v2580, 0
    %vm2597 = vcmp.ne.s16.totalorder %v2581, 0
    %vm2598 = vcmp.ne.s16.totalorder %v2582, 0
    %vm2599 = vcmp.ne.s16.totalorder %v2583, 0
    %vm2600 = vcmp.ne.s16.totalorder %v2584, 0
    %vm2601 = vcmp.ne.s16.totalorder %v2585, 0
    %vm2602 = vcmp.ne.s16.totalorder %v2586, 0
    %vm2603 = vcmp.ne.s16.totalorder %v2587, 0
    %vm2604 = vcmp.ne.s16.totalorder %v2588, 0
    %vm2605 = vcmp.ne.s16.totalorder %v2589, 0
    %vm2606 = vcmp.ne.s16.totalorder %v2590, 0
    %vm2607 = vcmp.ne.s16.totalorder %v2591, 0
    %vm2608 = vcmp.ne.s16.totalorder %v2592, 0
    %v2609 = vsel %vm2593, 65537, 0
    %v2610 = vsel %vm2594, 65537, 0
    %v2611 = vsel %vm2595, 65537, 0
    %v2612 = vsel %vm2596, 65537, 0
    %v2613 = vsel %vm2597, 65537, 0
    %v2614 = vsel %vm2598, 65537, 0
    %v2615 = vsel %vm2599, 65537, 0
    %v2616 = vsel %vm2600, 65537, 0
    %v2617 = vsel %vm2601, 65537, 0
    %v2618 = vsel %vm2602, 65537, 0
    %v2619 = vsel %vm2603, 65537, 0
    %v2620 = vsel %vm2604, 65537, 0
    %v2621 = vsel %vm2605, 65537, 0
    %v2622 = vsel %vm2606, 65537, 0
    %v2623 = vsel %vm2607, 65537, 0
    %v2624 = vsel %vm2608, 65537, 0
    %v2625 = vunpack.c.l.b16 %v2609
    %v2626 = vunpack.c.l.b16 %v2610
    %v2627 = vunpack.c.l.b16 %v2611
    %v2628 = vunpack.c.l.b16 %v2612
    %v2629 = vunpack.c.l.b16 %v2613
    %v2630 = vunpack.c.l.b16 %v2614
    %v2631 = vunpack.c.l.b16 %v2615
    %v2632 = vunpack.c.l.b16 %v2616
    %v2633 = vunpack.c.l.b16 %v2617
    %v2634 = vunpack.c.l.b16 %v2618
    %v2635 = vunpack.c.l.b16 %v2619
    %v2636 = vunpack.c.l.b16 %v2620
    %v2637 = vunpack.c.l.b16 %v2621
    %v2638 = vunpack.c.l.b16 %v2622
    %v2639 = vunpack.c.l.b16 %v2623
    %v2640 = vunpack.c.l.b16 %v2624
    %vm2641 = vcmp.ne.s32.totalorder %v2625, 0
    %vm2642 = vcmp.ne.s32.totalorder %v2626, 0
    %vm2643 = vcmp.ne.s32.totalorder %v2627, 0
    %vm2644 = vcmp.ne.s32.totalorder %v2628, 0
    %vm2645 = vcmp.ne.s32.totalorder %v2629, 0
    %vm2646 = vcmp.ne.s32.totalorder %v2630, 0
    %vm2647 = vcmp.ne.s32.totalorder %v2631, 0
    %vm2648 = vcmp.ne.s32.totalorder %v2632, 0
    %vm2649 = vcmp.ne.s32.totalorder %v2633, 0
    %vm2650 = vcmp.ne.s32.totalorder %v2634, 0
    %vm2651 = vcmp.ne.s32.totalorder %v2635, 0
    %vm2652 = vcmp.ne.s32.totalorder %v2636, 0
    %vm2653 = vcmp.ne.s32.totalorder %v2637, 0
    %vm2654 = vcmp.ne.s32.totalorder %v2638, 0
    %vm2655 = vcmp.ne.s32.totalorder %v2639, 0
    %vm2656 = vcmp.ne.s32.totalorder %v2640, 0
    %v2657 = vsel %vm2641, 1, 0
    %v2658 = vsel %vm2642, 1, 0
    %v2659 = vsel %vm2643, 1, 0
    %v2660 = vsel %vm2644, 1, 0
    %v2661 = vsel %vm2645, 1, 0
    %v2662 = vsel %vm2646, 1, 0
    %v2663 = vsel %vm2647, 1, 0
    %v2664 = vsel %vm2648, 1, 0
    %v2665 = vsel %vm2649, 1, 0
    %v2666 = vsel %vm2650, 1, 0
    %v2667 = vsel %vm2651, 1, 0
    %v2668 = vsel %vm2652, 1, 0
    %v2669 = vsel %vm2653, 1, 0
    %v2670 = vsel %vm2654, 1, 0
    %v2671 = vsel %vm2655, 1, 0
    %v2672 = vsel %vm2656, 1, 0
    %v2673 = vcvt.s32.f32 %v2657
    %v2674 = vcvt.s32.f32 %v2658
    %v2675 = vcvt.s32.f32 %v2659
    %v2676 = vcvt.s32.f32 %v2660
    %v2677 = vcvt.s32.f32 %v2661
    %v2678 = vcvt.s32.f32 %v2662
    %v2679 = vcvt.s32.f32 %v2663
    %v2680 = vcvt.s32.f32 %v2664
    %v2681 = vcvt.s32.f32 %v2665
    %v2682 = vcvt.s32.f32 %v2666
    %v2683 = vcvt.s32.f32 %v2667
    %v2684 = vcvt.s32.f32 %v2668
    %v2685 = vcvt.s32.f32 %v2669
    %v2686 = vcvt.s32.f32 %v2670
    %v2687 = vcvt.s32.f32 %v2671
    %v2688 = vcvt.s32.f32 %v2672
    %v2689 = vpack.c.bf16 %v2674, %v2673
    %v2690 = vpack.c.bf16 %v2676, %v2675
    %v2691 = vpack.c.bf16 %v2678, %v2677
    %v2692 = vpack.c.bf16 %v2680, %v2679
    %v2693 = vpack.c.bf16 %v2682, %v2681
    %v2694 = vpack.c.bf16 %v2684, %v2683
    %v2695 = vpack.c.bf16 %v2686, %v2685
    %v2696 = vpack.c.bf16 %v2688, %v2687
    %2697 = vset.pattern.permute.xlu0 14
    %2698 = vperm.xlu0 %2697, %v101
    %v2699 = vpop.permute.xlu0 %2698
    %2701 = vset.pattern.permute.xlu0 14
    %2702 = vperm.xlu0 %2701, %v102
    %v2703 = vpop.permute.xlu0 %2702
    %2705 = vset.pattern.permute.xlu0 14
    %2706 = vperm.xlu0 %2705, %v103
    %v2707 = vpop.permute.xlu0 %2706
    %2709 = vset.pattern.permute.xlu0 14
    %2710 = vperm.xlu0 %2709, %v104
    %v2711 = vpop.permute.xlu0 %2710
    %2713 = vset.pattern.permute.xlu0 14
    %2714 = vperm.xlu0 %2713, %v105
    %v2715 = vpop.permute.xlu0 %2714
    %2717 = vset.pattern.permute.xlu0 14
    %2718 = vperm.xlu0 %2717, %v106
    %v2719 = vpop.permute.xlu0 %2718
    %2721 = vset.pattern.permute.xlu0 14
    %2722 = vperm.xlu0 %2721, %v107
    %v2723 = vpop.permute.xlu0 %2722
    %2725 = vset.pattern.permute.xlu0 14
    %2726 = vperm.xlu0 %2725, %v108
    %v2727 = vpop.permute.xlu0 %2726
    %vm2729 = vcmp.eq.bf16.partialorder %v2699, %v112
    %vm2730 = vcmp.eq.bf16.partialorder %v2703, %v112
    %vm2731 = vcmp.eq.bf16.partialorder %v2707, %v112
    %vm2732 = vcmp.eq.bf16.partialorder %v2711, %v112
    %vm2733 = vcmp.eq.bf16.partialorder %v2715, %v112
    %vm2734 = vcmp.eq.bf16.partialorder %v2719, %v112
    %vm2735 = vcmp.eq.bf16.partialorder %v2723, %v112
    %vm2736 = vcmp.eq.bf16.partialorder %v2727, %v112
    %v2737 = vsel %vm2729, 65537, 0
    %v2738 = vsel %vm2730, 65537, 0
    %v2739 = vsel %vm2731, 65537, 0
    %v2740 = vsel %vm2732, 65537, 0
    %v2741 = vsel %vm2733, 65537, 0
    %v2742 = vsel %vm2734, 65537, 0
    %v2743 = vsel %vm2735, 65537, 0
    %v2744 = vsel %vm2736, 65537, 0
    %v2745 = vunpack.c.l.b16 %v2737
    %v2746 = vunpack.c.h.b16 %v2737
    %v2747 = vunpack.c.l.b16 %v2738
    %v2748 = vunpack.c.h.b16 %v2738
    %v2749 = vunpack.c.l.b16 %v2739
    %v2750 = vunpack.c.h.b16 %v2739
    %v2751 = vunpack.c.l.b16 %v2740
    %v2752 = vunpack.c.h.b16 %v2740
    %v2753 = vunpack.c.l.b16 %v2741
    %v2754 = vunpack.c.h.b16 %v2741
    %v2755 = vunpack.c.l.b16 %v2742
    %v2756 = vunpack.c.h.b16 %v2742
    %v2757 = vunpack.c.l.b16 %v2743
    %v2758 = vunpack.c.h.b16 %v2743
    %v2759 = vunpack.c.l.b16 %v2744
    %v2760 = vunpack.c.h.b16 %v2744
    %v2761 = vpack.c.b16 %v2745, %v2745
    %v2762 = vpack.c.b16 %v2746, %v2746
    %v2763 = vpack.c.b16 %v2747, %v2747
    %v2764 = vpack.c.b16 %v2748, %v2748
    %v2765 = vpack.c.b16 %v2749, %v2749
    %v2766 = vpack.c.b16 %v2750, %v2750
    %v2767 = vpack.c.b16 %v2751, %v2751
    %v2768 = vpack.c.b16 %v2752, %v2752
    %v2769 = vpack.c.b16 %v2753, %v2753
    %v2770 = vpack.c.b16 %v2754, %v2754
    %v2771 = vpack.c.b16 %v2755, %v2755
    %v2772 = vpack.c.b16 %v2756, %v2756
    %v2773 = vpack.c.b16 %v2757, %v2757
    %v2774 = vpack.c.b16 %v2758, %v2758
    %v2775 = vpack.c.b16 %v2759, %v2759
    %v2776 = vpack.c.b16 %v2760, %v2760
    %vm2777 = vcmp.ne.s16.totalorder %v2761, 0
    %vm2778 = vcmp.ne.s16.totalorder %v2762, 0
    %vm2779 = vcmp.ne.s16.totalorder %v2763, 0
    %vm2780 = vcmp.ne.s16.totalorder %v2764, 0
    %vm2781 = vcmp.ne.s16.totalorder %v2765, 0
    %vm2782 = vcmp.ne.s16.totalorder %v2766, 0
    %vm2783 = vcmp.ne.s16.totalorder %v2767, 0
    %vm2784 = vcmp.ne.s16.totalorder %v2768, 0
    %vm2785 = vcmp.ne.s16.totalorder %v2769, 0
    %vm2786 = vcmp.ne.s16.totalorder %v2770, 0
    %vm2787 = vcmp.ne.s16.totalorder %v2771, 0
    %vm2788 = vcmp.ne.s16.totalorder %v2772, 0
    %vm2789 = vcmp.ne.s16.totalorder %v2773, 0
    %vm2790 = vcmp.ne.s16.totalorder %v2774, 0
    %vm2791 = vcmp.ne.s16.totalorder %v2775, 0
    %vm2792 = vcmp.ne.s16.totalorder %v2776, 0
    %v2793 = vsel %vm2777, 65537, 0
    %v2794 = vsel %vm2778, 65537, 0
    %v2795 = vsel %vm2779, 65537, 0
    %v2796 = vsel %vm2780, 65537, 0
    %v2797 = vsel %vm2781, 65537, 0
    %v2798 = vsel %vm2782, 65537, 0
    %v2799 = vsel %vm2783, 65537, 0
    %v2800 = vsel %vm2784, 65537, 0
    %v2801 = vsel %vm2785, 65537, 0
    %v2802 = vsel %vm2786, 65537, 0
    %v2803 = vsel %vm2787, 65537, 0
    %v2804 = vsel %vm2788, 65537, 0
    %v2805 = vsel %vm2789, 65537, 0
    %v2806 = vsel %vm2790, 65537, 0
    %v2807 = vsel %vm2791, 65537, 0
    %v2808 = vsel %vm2792, 65537, 0
    %v2809 = vunpack.c.l.b16 %v2793
    %v2810 = vunpack.c.l.b16 %v2794
    %v2811 = vunpack.c.l.b16 %v2795
    %v2812 = vunpack.c.l.b16 %v2796
    %v2813 = vunpack.c.l.b16 %v2797
    %v2814 = vunpack.c.l.b16 %v2798
    %v2815 = vunpack.c.l.b16 %v2799
    %v2816 = vunpack.c.l.b16 %v2800
    %v2817 = vunpack.c.l.b16 %v2801
    %v2818 = vunpack.c.l.b16 %v2802
    %v2819 = vunpack.c.l.b16 %v2803
    %v2820 = vunpack.c.l.b16 %v2804
    %v2821 = vunpack.c.l.b16 %v2805
    %v2822 = vunpack.c.l.b16 %v2806
    %v2823 = vunpack.c.l.b16 %v2807
    %v2824 = vunpack.c.l.b16 %v2808
    %vm2825 = vcmp.ne.s32.totalorder %v2809, 0
    %vm2826 = vcmp.ne.s32.totalorder %v2810, 0
    %vm2827 = vcmp.ne.s32.totalorder %v2811, 0
    %vm2828 = vcmp.ne.s32.totalorder %v2812, 0
    %vm2829 = vcmp.ne.s32.totalorder %v2813, 0
    %vm2830 = vcmp.ne.s32.totalorder %v2814, 0
    %vm2831 = vcmp.ne.s32.totalorder %v2815, 0
    %vm2832 = vcmp.ne.s32.totalorder %v2816, 0
    %vm2833 = vcmp.ne.s32.totalorder %v2817, 0
    %vm2834 = vcmp.ne.s32.totalorder %v2818, 0
    %vm2835 = vcmp.ne.s32.totalorder %v2819, 0
    %vm2836 = vcmp.ne.s32.totalorder %v2820, 0
    %vm2837 = vcmp.ne.s32.totalorder %v2821, 0
    %vm2838 = vcmp.ne.s32.totalorder %v2822, 0
    %vm2839 = vcmp.ne.s32.totalorder %v2823, 0
    %vm2840 = vcmp.ne.s32.totalorder %v2824, 0
    %v2841 = vsel %vm2825, 1, 0
    %v2842 = vsel %vm2826, 1, 0
    %v2843 = vsel %vm2827, 1, 0
    %v2844 = vsel %vm2828, 1, 0
    %v2845 = vsel %vm2829, 1, 0
    %v2846 = vsel %vm2830, 1, 0
    %v2847 = vsel %vm2831, 1, 0
    %v2848 = vsel %vm2832, 1, 0
    %v2849 = vsel %vm2833, 1, 0
    %v2850 = vsel %vm2834, 1, 0
    %v2851 = vsel %vm2835, 1, 0
    %v2852 = vsel %vm2836, 1, 0
    %v2853 = vsel %vm2837, 1, 0
    %v2854 = vsel %vm2838, 1, 0
    %v2855 = vsel %vm2839, 1, 0
    %v2856 = vsel %vm2840, 1, 0
    %v2857 = vcvt.s32.f32 %v2841
    %v2858 = vcvt.s32.f32 %v2842
    %v2859 = vcvt.s32.f32 %v2843
    %v2860 = vcvt.s32.f32 %v2844
    %v2861 = vcvt.s32.f32 %v2845
    %v2862 = vcvt.s32.f32 %v2846
    %v2863 = vcvt.s32.f32 %v2847
    %v2864 = vcvt.s32.f32 %v2848
    %v2865 = vcvt.s32.f32 %v2849
    %v2866 = vcvt.s32.f32 %v2850
    %v2867 = vcvt.s32.f32 %v2851
    %v2868 = vcvt.s32.f32 %v2852
    %v2869 = vcvt.s32.f32 %v2853
    %v2870 = vcvt.s32.f32 %v2854
    %v2871 = vcvt.s32.f32 %v2855
    %v2872 = vcvt.s32.f32 %v2856
    %v2873 = vpack.c.bf16 %v2858, %v2857
    %v2874 = vpack.c.bf16 %v2860, %v2859
    %v2875 = vpack.c.bf16 %v2862, %v2861
    %v2876 = vpack.c.bf16 %v2864, %v2863
    %v2877 = vpack.c.bf16 %v2866, %v2865
    %v2878 = vpack.c.bf16 %v2868, %v2867
    %v2879 = vpack.c.bf16 %v2870, %v2869
    %v2880 = vpack.c.bf16 %v2872, %v2871
    %2881 = vset.pattern.permute.xlu0 15
    %2882 = vperm.xlu0 %2881, %v101
    %v2883 = vpop.permute.xlu0 %2882
    %2885 = vset.pattern.permute.xlu0 15
    %2886 = vperm.xlu0 %2885, %v102
    %v2887 = vpop.permute.xlu0 %2886
    %2889 = vset.pattern.permute.xlu0 15
    %2890 = vperm.xlu0 %2889, %v103
    %v2891 = vpop.permute.xlu0 %2890
    %2893 = vset.pattern.permute.xlu0 15
    %2894 = vperm.xlu0 %2893, %v104
    %v2895 = vpop.permute.xlu0 %2894
    %2897 = vset.pattern.permute.xlu0 15
    %2898 = vperm.xlu0 %2897, %v105
    %v2899 = vpop.permute.xlu0 %2898
    %2901 = vset.pattern.permute.xlu0 15
    %2902 = vperm.xlu0 %2901, %v106
    %v2903 = vpop.permute.xlu0 %2902
    %2905 = vset.pattern.permute.xlu0 15
    %2906 = vperm.xlu0 %2905, %v107
    %v2907 = vpop.permute.xlu0 %2906
    %2909 = vset.pattern.permute.xlu0 15
    %2910 = vperm.xlu0 %2909, %v108
    %v2911 = vpop.permute.xlu0 %2910
    %vm2913 = vcmp.eq.bf16.partialorder %v2883, %v112
    %vm2914 = vcmp.eq.bf16.partialorder %v2887, %v112
    %vm2915 = vcmp.eq.bf16.partialorder %v2891, %v112
    %vm2916 = vcmp.eq.bf16.partialorder %v2895, %v112
    %vm2917 = vcmp.eq.bf16.partialorder %v2899, %v112
    %vm2918 = vcmp.eq.bf16.partialorder %v2903, %v112
    %vm2919 = vcmp.eq.bf16.partialorder %v2907, %v112
    %vm2920 = vcmp.eq.bf16.partialorder %v2911, %v112
    %v2921 = vsel %vm2913, 65537, 0
    %v2922 = vsel %vm2914, 65537, 0
    %v2923 = vsel %vm2915, 65537, 0
    %v2924 = vsel %vm2916, 65537, 0
    %v2925 = vsel %vm2917, 65537, 0
    %v2926 = vsel %vm2918, 65537, 0
    %v2927 = vsel %vm2919, 65537, 0
    %v2928 = vsel %vm2920, 65537, 0
    %v2929 = vunpack.c.l.b16 %v2921
    %v2930 = vunpack.c.h.b16 %v2921
    %v2931 = vunpack.c.l.b16 %v2922
    %v2932 = vunpack.c.h.b16 %v2922
    %v2933 = vunpack.c.l.b16 %v2923
    %v2934 = vunpack.c.h.b16 %v2923
    %v2935 = vunpack.c.l.b16 %v2924
    %v2936 = vunpack.c.h.b16 %v2924
    %v2937 = vunpack.c.l.b16 %v2925
    %v2938 = vunpack.c.h.b16 %v2925
    %v2939 = vunpack.c.l.b16 %v2926
    %v2940 = vunpack.c.h.b16 %v2926
    %v2941 = vunpack.c.l.b16 %v2927
    %v2942 = vunpack.c.h.b16 %v2927
    %v2943 = vunpack.c.l.b16 %v2928
    %v2944 = vunpack.c.h.b16 %v2928
    %v2945 = vpack.c.b16 %v2929, %v2929
    %v2946 = vpack.c.b16 %v2930, %v2930
    %v2947 = vpack.c.b16 %v2931, %v2931
    %v2948 = vpack.c.b16 %v2932, %v2932
    %v2949 = vpack.c.b16 %v2933, %v2933
    %v2950 = vpack.c.b16 %v2934, %v2934
    %v2951 = vpack.c.b16 %v2935, %v2935
    %v2952 = vpack.c.b16 %v2936, %v2936
    %v2953 = vpack.c.b16 %v2937, %v2937
    %v2954 = vpack.c.b16 %v2938, %v2938
    %v2955 = vpack.c.b16 %v2939, %v2939
    %v2956 = vpack.c.b16 %v2940, %v2940
    %v2957 = vpack.c.b16 %v2941, %v2941
    %v2958 = vpack.c.b16 %v2942, %v2942
    %v2959 = vpack.c.b16 %v2943, %v2943
    %v2960 = vpack.c.b16 %v2944, %v2944
    %vm2961 = vcmp.ne.s16.totalorder %v2945, 0
    %vm2962 = vcmp.ne.s16.totalorder %v2946, 0
    %vm2963 = vcmp.ne.s16.totalorder %v2947, 0
    %vm2964 = vcmp.ne.s16.totalorder %v2948, 0
    %vm2965 = vcmp.ne.s16.totalorder %v2949, 0
    %vm2966 = vcmp.ne.s16.totalorder %v2950, 0
    %vm2967 = vcmp.ne.s16.totalorder %v2951, 0
    %vm2968 = vcmp.ne.s16.totalorder %v2952, 0
    %vm2969 = vcmp.ne.s16.totalorder %v2953, 0
    %vm2970 = vcmp.ne.s16.totalorder %v2954, 0
    %vm2971 = vcmp.ne.s16.totalorder %v2955, 0
    %vm2972 = vcmp.ne.s16.totalorder %v2956, 0
    %vm2973 = vcmp.ne.s16.totalorder %v2957, 0
    %vm2974 = vcmp.ne.s16.totalorder %v2958, 0
    %vm2975 = vcmp.ne.s16.totalorder %v2959, 0
    %vm2976 = vcmp.ne.s16.totalorder %v2960, 0
    %v2977 = vsel %vm2961, 65537, 0
    %v2978 = vsel %vm2962, 65537, 0
    %v2979 = vsel %vm2963, 65537, 0
    %v2980 = vsel %vm2964, 65537, 0
    %v2981 = vsel %vm2965, 65537, 0
    %v2982 = vsel %vm2966, 65537, 0
    %v2983 = vsel %vm2967, 65537, 0
    %v2984 = vsel %vm2968, 65537, 0
    %v2985 = vsel %vm2969, 65537, 0
    %v2986 = vsel %vm2970, 65537, 0
    %v2987 = vsel %vm2971, 65537, 0
    %v2988 = vsel %vm2972, 65537, 0
    %v2989 = vsel %vm2973, 65537, 0
    %v2990 = vsel %vm2974, 65537, 0
    %v2991 = vsel %vm2975, 65537, 0
    %v2992 = vsel %vm2976, 65537, 0
    %v2993 = vunpack.c.l.b16 %v2977
    %v2994 = vunpack.c.l.b16 %v2978
    %v2995 = vunpack.c.l.b16 %v2979
    %v2996 = vunpack.c.l.b16 %v2980
    %v2997 = vunpack.c.l.b16 %v2981
    %v2998 = vunpack.c.l.b16 %v2982
    %v2999 = vunpack.c.l.b16 %v2983
    %v3000 = vunpack.c.l.b16 %v2984
    %v3001 = vunpack.c.l.b16 %v2985
    %v3002 = vunpack.c.l.b16 %v2986
    %v3003 = vunpack.c.l.b16 %v2987
    %v3004 = vunpack.c.l.b16 %v2988
    %v3005 = vunpack.c.l.b16 %v2989
    %v3006 = vunpack.c.l.b16 %v2990
    %v3007 = vunpack.c.l.b16 %v2991
    %v3008 = vunpack.c.l.b16 %v2992
    %vm3009 = vcmp.ne.s32.totalorder %v2993, 0
    %vm3010 = vcmp.ne.s32.totalorder %v2994, 0
    %vm3011 = vcmp.ne.s32.totalorder %v2995, 0
    %vm3012 = vcmp.ne.s32.totalorder %v2996, 0
    %vm3013 = vcmp.ne.s32.totalorder %v2997, 0
    %vm3014 = vcmp.ne.s32.totalorder %v2998, 0
    %vm3015 = vcmp.ne.s32.totalorder %v2999, 0
    %vm3016 = vcmp.ne.s32.totalorder %v3000, 0
    %vm3017 = vcmp.ne.s32.totalorder %v3001, 0
    %vm3018 = vcmp.ne.s32.totalorder %v3002, 0
    %vm3019 = vcmp.ne.s32.totalorder %v3003, 0
    %vm3020 = vcmp.ne.s32.totalorder %v3004, 0
    %vm3021 = vcmp.ne.s32.totalorder %v3005, 0
    %vm3022 = vcmp.ne.s32.totalorder %v3006, 0
    %vm3023 = vcmp.ne.s32.totalorder %v3007, 0
    %vm3024 = vcmp.ne.s32.totalorder %v3008, 0
    %v3025 = vsel %vm3009, 1, 0
    %v3026 = vsel %vm3010, 1, 0
    %v3027 = vsel %vm3011, 1, 0
    %v3028 = vsel %vm3012, 1, 0
    %v3029 = vsel %vm3013, 1, 0
    %v3030 = vsel %vm3014, 1, 0
    %v3031 = vsel %vm3015, 1, 0
    %v3032 = vsel %vm3016, 1, 0
    %v3033 = vsel %vm3017, 1, 0
    %v3034 = vsel %vm3018, 1, 0
    %v3035 = vsel %vm3019, 1, 0
    %v3036 = vsel %vm3020, 1, 0
    %v3037 = vsel %vm3021, 1, 0
    %v3038 = vsel %vm3022, 1, 0
    %v3039 = vsel %vm3023, 1, 0
    %v3040 = vsel %vm3024, 1, 0
    %v3041 = vcvt.s32.f32 %v3025
    %v3042 = vcvt.s32.f32 %v3026
    %v3043 = vcvt.s32.f32 %v3027
    %v3044 = vcvt.s32.f32 %v3028
    %v3045 = vcvt.s32.f32 %v3029
    %v3046 = vcvt.s32.f32 %v3030
    %v3047 = vcvt.s32.f32 %v3031
    %v3048 = vcvt.s32.f32 %v3032
    %v3049 = vcvt.s32.f32 %v3033
    %v3050 = vcvt.s32.f32 %v3034
    %v3051 = vcvt.s32.f32 %v3035
    %v3052 = vcvt.s32.f32 %v3036
    %v3053 = vcvt.s32.f32 %v3037
    %v3054 = vcvt.s32.f32 %v3038
    %v3055 = vcvt.s32.f32 %v3039
    %v3056 = vcvt.s32.f32 %v3040
    %v3057 = vpack.c.bf16 %v3042, %v3041
    %v3058 = vpack.c.bf16 %v3044, %v3043
    %v3059 = vpack.c.bf16 %v3046, %v3045
    %v3060 = vpack.c.bf16 %v3048, %v3047
    %v3061 = vpack.c.bf16 %v3050, %v3049
    %v3062 = vpack.c.bf16 %v3052, %v3051
    %v3063 = vpack.c.bf16 %v3054, %v3053
    %v3064 = vpack.c.bf16 %v3056, %v3055
    %v3065 = vld [vmem:[%s2] sm:$0xf]
    %v3066 = vld [vmem:[%s2 + $0x4] sm:$0xf]
    %v3067 = vld [vmem:[%s2 + $0x8] sm:$0xf]
    %v3068 = vld [vmem:[%s2 + $0xc] sm:$0xf]
    %v3069 = vld [vmem:[%s2 + $0x10] sm:$0xf]
    %v3070 = vld [vmem:[%s2 + $0x14] sm:$0xf]
    %v3071 = vld [vmem:[%s2 + $0x18] sm:$0xf]
    %v3072 = vld [vmem:[%s2 + $0x1c] sm:$0xf]
    %v3073 = vld [vmem:[%s2 + $0x20] sm:$0xf]
    %v3074 = vld [vmem:[%s2 + $0x24] sm:$0xf]
    %v3075 = vld [vmem:[%s2 + $0x28] sm:$0xf]
    %v3076 = vld [vmem:[%s2 + $0x2c] sm:$0xf]
    %v3077 = vld [vmem:[%s2 + $0x30] sm:$0xf]
    %v3078 = vld [vmem:[%s2 + $0x34] sm:$0xf]
    %v3079 = vld [vmem:[%s2 + $0x38] sm:$0xf]
    %v3080 = vld [vmem:[%s2 + $0x3c] sm:$0xf]
    %v3081 = vld [vmem:[%s2 + $0x40] sm:$0xf]
    %v3082 = vld [vmem:[%s2 + $0x44] sm:$0xf]
    %v3083 = vld [vmem:[%s2 + $0x48] sm:$0xf]
    %v3084 = vld [vmem:[%s2 + $0x4c] sm:$0xf]
    %v3085 = vld [vmem:[%s2 + $0x50] sm:$0xf]
    %v3086 = vld [vmem:[%s2 + $0x54] sm:$0xf]
    %v3087 = vld [vmem:[%s2 + $0x58] sm:$0xf]
    %v3088 = vld [vmem:[%s2 + $0x5c] sm:$0xf]
    %v3089 = vld [vmem:[%s2 + $0x60] sm:$0xf]
    %v3090 = vld [vmem:[%s2 + $0x64] sm:$0xf]
    %v3091 = vld [vmem:[%s2 + $0x68] sm:$0xf]
    %v3092 = vld [vmem:[%s2 + $0x6c] sm:$0xf]
    %v3093 = vld [vmem:[%s2 + $0x70] sm:$0xf]
    %v3094 = vld [vmem:[%s2 + $0x74] sm:$0xf]
    %v3095 = vld [vmem:[%s2 + $0x78] sm:$0xf]
    %v3096 = vld [vmem:[%s2 + $0x7c] sm:$0xf]
    %v3097 = vld [vmem:[%s2 + $0x80] sm:$0xf]
    %v3098 = vld [vmem:[%s2 + $0x84] sm:$0xf]
    %v3099 = vld [vmem:[%s2 + $0x88] sm:$0xf]
    %v3100 = vld [vmem:[%s2 + $0x8c] sm:$0xf]
    %v3101 = vld [vmem:[%s2 + $0x90] sm:$0xf]
    %v3102 = vld [vmem:[%s2 + $0x94] sm:$0xf]
    %v3103 = vld [vmem:[%s2 + $0x98] sm:$0xf]
    %v3104 = vld [vmem:[%s2 + $0x9c] sm:$0xf]
    %v3105 = vld [vmem:[%s2 + $0xa0] sm:$0xf]
    %v3106 = vld [vmem:[%s2 + $0xa4] sm:$0xf]
    %v3107 = vld [vmem:[%s2 + $0xa8] sm:$0xf]
    %v3108 = vld [vmem:[%s2 + $0xac] sm:$0xf]
    %v3109 = vld [vmem:[%s2 + $0xb0] sm:$0xf]
    %v3110 = vld [vmem:[%s2 + $0xb4] sm:$0xf]
    %v3111 = vld [vmem:[%s2 + $0xb8] sm:$0xf]
    %v3112 = vld [vmem:[%s2 + $0xbc] sm:$0xf]
    %v3113 = vld [vmem:[%s2 + $0xc0] sm:$0xf]
    %v3114 = vld [vmem:[%s2 + $0xc4] sm:$0xf]
    %v3115 = vld [vmem:[%s2 + $0xc8] sm:$0xf]
    %v3116 = vld [vmem:[%s2 + $0xcc] sm:$0xf]
    %v3117 = vld [vmem:[%s2 + $0xd0] sm:$0xf]
    %v3118 = vld [vmem:[%s2 + $0xd4] sm:$0xf]
    %v3119 = vld [vmem:[%s2 + $0xd8] sm:$0xf]
    %v3120 = vld [vmem:[%s2 + $0xdc] sm:$0xf]
    %v3121 = vld [vmem:[%s2 + $0xe0] sm:$0xf]
    %v3122 = vld [vmem:[%s2 + $0xe4] sm:$0xf]
    %v3123 = vld [vmem:[%s2 + $0xe8] sm:$0xf]
    %v3124 = vld [vmem:[%s2 + $0xec] sm:$0xf]
    %v3125 = vld [vmem:[%s2 + $0xf0] sm:$0xf]
    %v3126 = vld [vmem:[%s2 + $0xf4] sm:$0xf]
    %v3127 = vld [vmem:[%s2 + $0xf8] sm:$0xf]
    %v3128 = vld [vmem:[%s2 + $0xfc] sm:$0xf]
    %v3129 = vld [vmem:[%s2 + $0x100] sm:$0xf]
    %v3130 = vld [vmem:[%s2 + $0x104] sm:$0xf]
    %v3131 = vld [vmem:[%s2 + $0x108] sm:$0xf]
    %v3132 = vld [vmem:[%s2 + $0x10c] sm:$0xf]
    %v3133 = vld [vmem:[%s2 + $0x110] sm:$0xf]
    %v3134 = vld [vmem:[%s2 + $0x114] sm:$0xf]
    %v3135 = vld [vmem:[%s2 + $0x118] sm:$0xf]
    %v3136 = vld [vmem:[%s2 + $0x11c] sm:$0xf]
    %v3137 = vld [vmem:[%s2 + $0x120] sm:$0xf]
    %v3138 = vld [vmem:[%s2 + $0x124] sm:$0xf]
    %v3139 = vld [vmem:[%s2 + $0x128] sm:$0xf]
    %v3140 = vld [vmem:[%s2 + $0x12c] sm:$0xf]
    %v3141 = vld [vmem:[%s2 + $0x130] sm:$0xf]
    %v3142 = vld [vmem:[%s2 + $0x134] sm:$0xf]
    %v3143 = vld [vmem:[%s2 + $0x138] sm:$0xf]
    %v3144 = vld [vmem:[%s2 + $0x13c] sm:$0xf]
    %v3145 = vld [vmem:[%s2 + $0x140] sm:$0xf]
    %v3146 = vld [vmem:[%s2 + $0x144] sm:$0xf]
    %v3147 = vld [vmem:[%s2 + $0x148] sm:$0xf]
    %v3148 = vld [vmem:[%s2 + $0x14c] sm:$0xf]
    %v3149 = vld [vmem:[%s2 + $0x150] sm:$0xf]
    %v3150 = vld [vmem:[%s2 + $0x154] sm:$0xf]
    %v3151 = vld [vmem:[%s2 + $0x158] sm:$0xf]
    %v3152 = vld [vmem:[%s2 + $0x15c] sm:$0xf]
    %v3153 = vld [vmem:[%s2 + $0x160] sm:$0xf]
    %v3154 = vld [vmem:[%s2 + $0x164] sm:$0xf]
    %v3155 = vld [vmem:[%s2 + $0x168] sm:$0xf]
    %v3156 = vld [vmem:[%s2 + $0x16c] sm:$0xf]
    %v3157 = vld [vmem:[%s2 + $0x170] sm:$0xf]
    %v3158 = vld [vmem:[%s2 + $0x174] sm:$0xf]
    %v3159 = vld [vmem:[%s2 + $0x178] sm:$0xf]
    %v3160 = vld [vmem:[%s2 + $0x17c] sm:$0xf]
    %v3161 = vld [vmem:[%s2 + $0x180] sm:$0xf]
    %v3162 = vld [vmem:[%s2 + $0x184] sm:$0xf]
    %v3163 = vld [vmem:[%s2 + $0x188] sm:$0xf]
    %v3164 = vld [vmem:[%s2 + $0x18c] sm:$0xf]
    %v3165 = vld [vmem:[%s2 + $0x190] sm:$0xf]
    %v3166 = vld [vmem:[%s2 + $0x194] sm:$0xf]
    %v3167 = vld [vmem:[%s2 + $0x198] sm:$0xf]
    %v3168 = vld [vmem:[%s2 + $0x19c] sm:$0xf]
    %v3169 = vld [vmem:[%s2 + $0x1a0] sm:$0xf]
    %v3170 = vld [vmem:[%s2 + $0x1a4] sm:$0xf]
    %v3171 = vld [vmem:[%s2 + $0x1a8] sm:$0xf]
    %v3172 = vld [vmem:[%s2 + $0x1ac] sm:$0xf]
    %v3173 = vld [vmem:[%s2 + $0x1b0] sm:$0xf]
    %v3174 = vld [vmem:[%s2 + $0x1b4] sm:$0xf]
    %v3175 = vld [vmem:[%s2 + $0x1b8] sm:$0xf]
    %v3176 = vld [vmem:[%s2 + $0x1bc] sm:$0xf]
    %v3177 = vld [vmem:[%s2 + $0x1c0] sm:$0xf]
    %v3178 = vld [vmem:[%s2 + $0x1c4] sm:$0xf]
    %v3179 = vld [vmem:[%s2 + $0x1c8] sm:$0xf]
    %v3180 = vld [vmem:[%s2 + $0x1cc] sm:$0xf]
    %v3181 = vld [vmem:[%s2 + $0x1d0] sm:$0xf]
    %v3182 = vld [vmem:[%s2 + $0x1d4] sm:$0xf]
    %v3183 = vld [vmem:[%s2 + $0x1d8] sm:$0xf]
    %v3184 = vld [vmem:[%s2 + $0x1dc] sm:$0xf]
    %v3185 = vld [vmem:[%s2 + $0x1e0] sm:$0xf]
    %v3186 = vld [vmem:[%s2 + $0x1e4] sm:$0xf]
    %v3187 = vld [vmem:[%s2 + $0x1e8] sm:$0xf]
    %v3188 = vld [vmem:[%s2 + $0x1ec] sm:$0xf]
    %v3189 = vld [vmem:[%s2 + $0x1f0] sm:$0xf]
    %v3190 = vld [vmem:[%s2 + $0x1f4] sm:$0xf]
    %v3191 = vld [vmem:[%s2 + $0x1f8] sm:$0xf]
    %v3192 = vld [vmem:[%s2 + $0x1fc] sm:$0xf]
    %v3193 = vld [vmem:[%s2 + $0x200] sm:$0xf]
    %v3194 = vld [vmem:[%s2 + $0x204] sm:$0xf]
    %v3195 = vld [vmem:[%s2 + $0x208] sm:$0xf]
    %v3196 = vld [vmem:[%s2 + $0x20c] sm:$0xf]
    %v3197 = vld [vmem:[%s2 + $0x210] sm:$0xf]
    %v3198 = vld [vmem:[%s2 + $0x214] sm:$0xf]
    %v3199 = vld [vmem:[%s2 + $0x218] sm:$0xf]
    %v3200 = vld [vmem:[%s2 + $0x21c] sm:$0xf]
    %v3201 = vld [vmem:[%s2 + $0x220] sm:$0xf]
    %v3202 = vld [vmem:[%s2 + $0x224] sm:$0xf]
    %v3203 = vld [vmem:[%s2 + $0x228] sm:$0xf]
    %v3204 = vld [vmem:[%s2 + $0x22c] sm:$0xf]
    %v3205 = vld [vmem:[%s2 + $0x230] sm:$0xf]
    %v3206 = vld [vmem:[%s2 + $0x234] sm:$0xf]
    %v3207 = vld [vmem:[%s2 + $0x238] sm:$0xf]
    %v3208 = vld [vmem:[%s2 + $0x23c] sm:$0xf]
    %v3209 = vld [vmem:[%s2 + $0x240] sm:$0xf]
    %v3210 = vld [vmem:[%s2 + $0x244] sm:$0xf]
    %v3211 = vld [vmem:[%s2 + $0x248] sm:$0xf]
    %v3212 = vld [vmem:[%s2 + $0x24c] sm:$0xf]
    %v3213 = vld [vmem:[%s2 + $0x250] sm:$0xf]
    %v3214 = vld [vmem:[%s2 + $0x254] sm:$0xf]
    %v3215 = vld [vmem:[%s2 + $0x258] sm:$0xf]
    %v3216 = vld [vmem:[%s2 + $0x25c] sm:$0xf]
    %v3217 = vld [vmem:[%s2 + $0x260] sm:$0xf]
    %v3218 = vld [vmem:[%s2 + $0x264] sm:$0xf]
    %v3219 = vld [vmem:[%s2 + $0x268] sm:$0xf]
    %v3220 = vld [vmem:[%s2 + $0x26c] sm:$0xf]
    %v3221 = vld [vmem:[%s2 + $0x270] sm:$0xf]
    %v3222 = vld [vmem:[%s2 + $0x274] sm:$0xf]
    %v3223 = vld [vmem:[%s2 + $0x278] sm:$0xf]
    %v3224 = vld [vmem:[%s2 + $0x27c] sm:$0xf]
    %v3225 = vld [vmem:[%s2 + $0x280] sm:$0xf]
    %v3226 = vld [vmem:[%s2 + $0x284] sm:$0xf]
    %v3227 = vld [vmem:[%s2 + $0x288] sm:$0xf]
    %v3228 = vld [vmem:[%s2 + $0x28c] sm:$0xf]
    %v3229 = vld [vmem:[%s2 + $0x290] sm:$0xf]
    %v3230 = vld [vmem:[%s2 + $0x294] sm:$0xf]
    %v3231 = vld [vmem:[%s2 + $0x298] sm:$0xf]
    %v3232 = vld [vmem:[%s2 + $0x29c] sm:$0xf]
    %v3233 = vld [vmem:[%s2 + $0x2a0] sm:$0xf]
    %v3234 = vld [vmem:[%s2 + $0x2a4] sm:$0xf]
    %v3235 = vld [vmem:[%s2 + $0x2a8] sm:$0xf]
    %v3236 = vld [vmem:[%s2 + $0x2ac] sm:$0xf]
    %v3237 = vld [vmem:[%s2 + $0x2b0] sm:$0xf]
    %v3238 = vld [vmem:[%s2 + $0x2b4] sm:$0xf]
    %v3239 = vld [vmem:[%s2 + $0x2b8] sm:$0xf]
    %v3240 = vld [vmem:[%s2 + $0x2bc] sm:$0xf]
    %v3241 = vld [vmem:[%s2 + $0x2c0] sm:$0xf]
    %v3242 = vld [vmem:[%s2 + $0x2c4] sm:$0xf]
    %v3243 = vld [vmem:[%s2 + $0x2c8] sm:$0xf]
    %v3244 = vld [vmem:[%s2 + $0x2cc] sm:$0xf]
    %v3245 = vld [vmem:[%s2 + $0x2d0] sm:$0xf]
    %v3246 = vld [vmem:[%s2 + $0x2d4] sm:$0xf]
    %v3247 = vld [vmem:[%s2 + $0x2d8] sm:$0xf]
    %v3248 = vld [vmem:[%s2 + $0x2dc] sm:$0xf]
    %v3249 = vld [vmem:[%s2 + $0x2e0] sm:$0xf]
    %v3250 = vld [vmem:[%s2 + $0x2e4] sm:$0xf]
    %v3251 = vld [vmem:[%s2 + $0x2e8] sm:$0xf]
    %v3252 = vld [vmem:[%s2 + $0x2ec] sm:$0xf]
    %v3253 = vld [vmem:[%s2 + $0x2f0] sm:$0xf]
    %v3254 = vld [vmem:[%s2 + $0x2f4] sm:$0xf]
    %v3255 = vld [vmem:[%s2 + $0x2f8] sm:$0xf]
    %v3256 = vld [vmem:[%s2 + $0x2fc] sm:$0xf]
    %v3257 = vld [vmem:[%s2 + $0x300] sm:$0xf]
    %v3258 = vld [vmem:[%s2 + $0x304] sm:$0xf]
    %v3259 = vld [vmem:[%s2 + $0x308] sm:$0xf]
    %v3260 = vld [vmem:[%s2 + $0x30c] sm:$0xf]
    %v3261 = vld [vmem:[%s2 + $0x310] sm:$0xf]
    %v3262 = vld [vmem:[%s2 + $0x314] sm:$0xf]
    %v3263 = vld [vmem:[%s2 + $0x318] sm:$0xf]
    %v3264 = vld [vmem:[%s2 + $0x31c] sm:$0xf]
    %v3265 = vld [vmem:[%s2 + $0x320] sm:$0xf]
    %v3266 = vld [vmem:[%s2 + $0x324] sm:$0xf]
    %v3267 = vld [vmem:[%s2 + $0x328] sm:$0xf]
    %v3268 = vld [vmem:[%s2 + $0x32c] sm:$0xf]
    %v3269 = vld [vmem:[%s2 + $0x330] sm:$0xf]
    %v3270 = vld [vmem:[%s2 + $0x334] sm:$0xf]
    %v3271 = vld [vmem:[%s2 + $0x338] sm:$0xf]
    %v3272 = vld [vmem:[%s2 + $0x33c] sm:$0xf]
    %v3273 = vld [vmem:[%s2 + $0x340] sm:$0xf]
    %v3274 = vld [vmem:[%s2 + $0x344] sm:$0xf]
    %v3275 = vld [vmem:[%s2 + $0x348] sm:$0xf]
    %v3276 = vld [vmem:[%s2 + $0x34c] sm:$0xf]
    %v3277 = vld [vmem:[%s2 + $0x350] sm:$0xf]
    %v3278 = vld [vmem:[%s2 + $0x354] sm:$0xf]
    %v3279 = vld [vmem:[%s2 + $0x358] sm:$0xf]
    %v3280 = vld [vmem:[%s2 + $0x35c] sm:$0xf]
    %v3281 = vld [vmem:[%s2 + $0x360] sm:$0xf]
    %v3282 = vld [vmem:[%s2 + $0x364] sm:$0xf]
    %v3283 = vld [vmem:[%s2 + $0x368] sm:$0xf]
    %v3284 = vld [vmem:[%s2 + $0x36c] sm:$0xf]
    %v3285 = vld [vmem:[%s2 + $0x370] sm:$0xf]
    %v3286 = vld [vmem:[%s2 + $0x374] sm:$0xf]
    %v3287 = vld [vmem:[%s2 + $0x378] sm:$0xf]
    %v3288 = vld [vmem:[%s2 + $0x37c] sm:$0xf]
    %v3289 = vld [vmem:[%s2 + $0x380] sm:$0xf]
    %v3290 = vld [vmem:[%s2 + $0x384] sm:$0xf]
    %v3291 = vld [vmem:[%s2 + $0x388] sm:$0xf]
    %v3292 = vld [vmem:[%s2 + $0x38c] sm:$0xf]
    %v3293 = vld [vmem:[%s2 + $0x390] sm:$0xf]
    %v3294 = vld [vmem:[%s2 + $0x394] sm:$0xf]
    %v3295 = vld [vmem:[%s2 + $0x398] sm:$0xf]
    %v3296 = vld [vmem:[%s2 + $0x39c] sm:$0xf]
    %v3297 = vld [vmem:[%s2 + $0x3a0] sm:$0xf]
    %v3298 = vld [vmem:[%s2 + $0x3a4] sm:$0xf]
    %v3299 = vld [vmem:[%s2 + $0x3a8] sm:$0xf]
    %v3300 = vld [vmem:[%s2 + $0x3ac] sm:$0xf]
    %v3301 = vld [vmem:[%s2 + $0x3b0] sm:$0xf]
    %v3302 = vld [vmem:[%s2 + $0x3b4] sm:$0xf]
    %v3303 = vld [vmem:[%s2 + $0x3b8] sm:$0xf]
    %v3304 = vld [vmem:[%s2 + $0x3bc] sm:$0xf]
    %v3305 = vld [vmem:[%s2 + $0x3c0] sm:$0xf]
    %v3306 = vld [vmem:[%s2 + $0x3c4] sm:$0xf]
    %v3307 = vld [vmem:[%s2 + $0x3c8] sm:$0xf]
    %v3308 = vld [vmem:[%s2 + $0x3cc] sm:$0xf]
    %v3309 = vld [vmem:[%s2 + $0x3d0] sm:$0xf]
    %v3310 = vld [vmem:[%s2 + $0x3d4] sm:$0xf]
    %v3311 = vld [vmem:[%s2 + $0x3d8] sm:$0xf]
    %v3312 = vld [vmem:[%s2 + $0x3dc] sm:$0xf]
    %v3313 = vld [vmem:[%s2 + $0x3e0] sm:$0xf]
    %v3314 = vld [vmem:[%s2 + $0x3e4] sm:$0xf]
    %v3315 = vld [vmem:[%s2 + $0x3e8] sm:$0xf]
    %v3316 = vld [vmem:[%s2 + $0x3ec] sm:$0xf]
    %v3317 = vld [vmem:[%s2 + $0x3f0] sm:$0xf]
    %v3318 = vld [vmem:[%s2 + $0x3f4] sm:$0xf]
    %v3319 = vld [vmem:[%s2 + $0x3f8] sm:$0xf]
    %v3320 = vld [vmem:[%s2 + $0x3fc] sm:$0xf]
    %v3321 = vld [vmem:[%s3] sm:$0x1]
    %v3323 = vlaneseq
    %v3324 = vshrl.u32 %v3323, 7
    %v3325 = vsub.s32 0, %v3324
    %v3326 = vrot.slane %v3321, %v3325
    %v3584 = vunpack.c.l.b16 %v3065
    %v3585 = vunpack.c.l.b16 %v3066
    %v3586 = vunpack.c.l.b16 %v3067
    %v3587 = vunpack.c.l.b16 %v3068
    %v3588 = vunpack.c.l.b16 %v3069
    %v3589 = vunpack.c.l.b16 %v3070
    %v3590 = vunpack.c.l.b16 %v3071
    %v3591 = vunpack.c.l.b16 %v3072
    %v3592 = vunpack.c.l.b16 %v3073
    %v3593 = vunpack.c.l.b16 %v3074
    %v3594 = vunpack.c.l.b16 %v3075
    %v3595 = vunpack.c.l.b16 %v3076
    %v3596 = vunpack.c.l.b16 %v3077
    %v3597 = vunpack.c.l.b16 %v3078
    %v3598 = vunpack.c.l.b16 %v3079
    %v3599 = vunpack.c.l.b16 %v3080
    %v3600 = vunpack.c.l.b16 %v3081
    %v3601 = vunpack.c.l.b16 %v3082
    %v3602 = vunpack.c.l.b16 %v3083
    %v3603 = vunpack.c.l.b16 %v3084
    %v3604 = vunpack.c.l.b16 %v3085
    %v3605 = vunpack.c.l.b16 %v3086
    %v3606 = vunpack.c.l.b16 %v3087
    %v3607 = vunpack.c.l.b16 %v3088
    %v3608 = vunpack.c.l.b16 %v3089
    %v3609 = vunpack.c.l.b16 %v3090
    %v3610 = vunpack.c.l.b16 %v3091
    %v3611 = vunpack.c.l.b16 %v3092
    %v3612 = vunpack.c.l.b16 %v3093
    %v3613 = vunpack.c.l.b16 %v3094
    %v3614 = vunpack.c.l.b16 %v3095
    %v3615 = vunpack.c.l.b16 %v3096
    %v3616 = vunpack.c.l.b16 %v3097
    %v3617 = vunpack.c.l.b16 %v3098
    %v3618 = vunpack.c.l.b16 %v3099
    %v3619 = vunpack.c.l.b16 %v3100
    %v3620 = vunpack.c.l.b16 %v3101
    %v3621 = vunpack.c.l.b16 %v3102
    %v3622 = vunpack.c.l.b16 %v3103
    %v3623 = vunpack.c.l.b16 %v3104
    %v3624 = vunpack.c.l.b16 %v3105
    %v3625 = vunpack.c.l.b16 %v3106
    %v3626 = vunpack.c.l.b16 %v3107
    %v3627 = vunpack.c.l.b16 %v3108
    %v3628 = vunpack.c.l.b16 %v3109
    %v3629 = vunpack.c.l.b16 %v3110
    %v3630 = vunpack.c.l.b16 %v3111
    %v3631 = vunpack.c.l.b16 %v3112
    %v3632 = vunpack.c.l.b16 %v3113
    %v3633 = vunpack.c.l.b16 %v3114
    %v3634 = vunpack.c.l.b16 %v3115
    %v3635 = vunpack.c.l.b16 %v3116
    %v3636 = vunpack.c.l.b16 %v3117
    %v3637 = vunpack.c.l.b16 %v3118
    %v3638 = vunpack.c.l.b16 %v3119
    %v3639 = vunpack.c.l.b16 %v3120
    %v3640 = vunpack.c.l.b16 %v3121
    %v3641 = vunpack.c.l.b16 %v3122
    %v3642 = vunpack.c.l.b16 %v3123
    %v3643 = vunpack.c.l.b16 %v3124
    %v3644 = vunpack.c.l.b16 %v3125
    %v3645 = vunpack.c.l.b16 %v3126
    %v3646 = vunpack.c.l.b16 %v3127
    %v3647 = vunpack.c.l.b16 %v3128
    %v3648 = vunpack.c.l.b16 %v3129
    %v3649 = vunpack.c.l.b16 %v3130
    %v3650 = vunpack.c.l.b16 %v3131
    %v3651 = vunpack.c.l.b16 %v3132
    %v3652 = vunpack.c.l.b16 %v3133
    %v3653 = vunpack.c.l.b16 %v3134
    %v3654 = vunpack.c.l.b16 %v3135
    %v3655 = vunpack.c.l.b16 %v3136
    %v3656 = vunpack.c.l.b16 %v3137
    %v3657 = vunpack.c.l.b16 %v3138
    %v3658 = vunpack.c.l.b16 %v3139
    %v3659 = vunpack.c.l.b16 %v3140
    %v3660 = vunpack.c.l.b16 %v3141
    %v3661 = vunpack.c.l.b16 %v3142
    %v3662 = vunpack.c.l.b16 %v3143
    %v3663 = vunpack.c.l.b16 %v3144
    %v3664 = vunpack.c.l.b16 %v3145
    %v3665 = vunpack.c.l.b16 %v3146
    %v3666 = vunpack.c.l.b16 %v3147
    %v3667 = vunpack.c.l.b16 %v3148
    %v3668 = vunpack.c.l.b16 %v3149
    %v3669 = vunpack.c.l.b16 %v3150
    %v3670 = vunpack.c.l.b16 %v3151
    %v3671 = vunpack.c.l.b16 %v3152
    %v3672 = vunpack.c.l.b16 %v3153
    %v3673 = vunpack.c.l.b16 %v3154
    %v3674 = vunpack.c.l.b16 %v3155
    %v3675 = vunpack.c.l.b16 %v3156
    %v3676 = vunpack.c.l.b16 %v3157
    %v3677 = vunpack.c.l.b16 %v3158
    %v3678 = vunpack.c.l.b16 %v3159
    %v3679 = vunpack.c.l.b16 %v3160
    %v3680 = vunpack.c.l.b16 %v3161
    %v3681 = vunpack.c.l.b16 %v3162
    %v3682 = vunpack.c.l.b16 %v3163
    %v3683 = vunpack.c.l.b16 %v3164
    %v3684 = vunpack.c.l.b16 %v3165
    %v3685 = vunpack.c.l.b16 %v3166
    %v3686 = vunpack.c.l.b16 %v3167
    %v3687 = vunpack.c.l.b16 %v3168
    %v3688 = vunpack.c.l.b16 %v3169
    %v3689 = vunpack.c.l.b16 %v3170
    %v3690 = vunpack.c.l.b16 %v3171
    %v3691 = vunpack.c.l.b16 %v3172
    %v3692 = vunpack.c.l.b16 %v3173
    %v3693 = vunpack.c.l.b16 %v3174
    %v3694 = vunpack.c.l.b16 %v3175
    %v3695 = vunpack.c.l.b16 %v3176
    %v3696 = vunpack.c.l.b16 %v3177
    %v3697 = vunpack.c.l.b16 %v3178
    %v3698 = vunpack.c.l.b16 %v3179
    %v3699 = vunpack.c.l.b16 %v3180
    %v3700 = vunpack.c.l.b16 %v3181
    %v3701 = vunpack.c.l.b16 %v3182
    %v3702 = vunpack.c.l.b16 %v3183
    %v3703 = vunpack.c.l.b16 %v3184
    %v3704 = vunpack.c.l.b16 %v3185
    %v3705 = vunpack.c.l.b16 %v3186
    %v3706 = vunpack.c.l.b16 %v3187
    %v3707 = vunpack.c.l.b16 %v3188
    %v3708 = vunpack.c.l.b16 %v3189
    %v3709 = vunpack.c.l.b16 %v3190
    %v3710 = vunpack.c.l.b16 %v3191
    %v3711 = vunpack.c.l.b16 %v3192
    %v3712 = vunpack.c.l.b16 %v3193
    %v3713 = vunpack.c.l.b16 %v3194
    %v3714 = vunpack.c.l.b16 %v3195
    %v3715 = vunpack.c.l.b16 %v3196
    %v3716 = vunpack.c.l.b16 %v3197
    %v3717 = vunpack.c.l.b16 %v3198
    %v3718 = vunpack.c.l.b16 %v3199
    %v3719 = vunpack.c.l.b16 %v3200
    %v3720 = vunpack.c.l.b16 %v3201
    %v3721 = vunpack.c.l.b16 %v3202
    %v3722 = vunpack.c.l.b16 %v3203
    %v3723 = vunpack.c.l.b16 %v3204
    %v3724 = vunpack.c.l.b16 %v3205
    %v3725 = vunpack.c.l.b16 %v3206
    %v3726 = vunpack.c.l.b16 %v3207
    %v3727 = vunpack.c.l.b16 %v3208
    %v3728 = vunpack.c.l.b16 %v3209
    %v3729 = vunpack.c.l.b16 %v3210
    %v3730 = vunpack.c.l.b16 %v3211
    %v3731 = vunpack.c.l.b16 %v3212
    %v3732 = vunpack.c.l.b16 %v3213
    %v3733 = vunpack.c.l.b16 %v3214
    %v3734 = vunpack.c.l.b16 %v3215
    %v3735 = vunpack.c.l.b16 %v3216
    %v3736 = vunpack.c.l.b16 %v3217
    %v3737 = vunpack.c.l.b16 %v3218
    %v3738 = vunpack.c.l.b16 %v3219
    %v3739 = vunpack.c.l.b16 %v3220
    %v3740 = vunpack.c.l.b16 %v3221
    %v3741 = vunpack.c.l.b16 %v3222
    %v3742 = vunpack.c.l.b16 %v3223
    %v3743 = vunpack.c.l.b16 %v3224
    %v3744 = vunpack.c.l.b16 %v3225
    %v3745 = vunpack.c.l.b16 %v3226
    %v3746 = vunpack.c.l.b16 %v3227
    %v3747 = vunpack.c.l.b16 %v3228
    %v3748 = vunpack.c.l.b16 %v3229
    %v3749 = vunpack.c.l.b16 %v3230
    %v3750 = vunpack.c.l.b16 %v3231
    %v3751 = vunpack.c.l.b16 %v3232
    %v3752 = vunpack.c.l.b16 %v3233
    %v3753 = vunpack.c.l.b16 %v3234
    %v3754 = vunpack.c.l.b16 %v3235
    %v3755 = vunpack.c.l.b16 %v3236
    %v3756 = vunpack.c.l.b16 %v3237
    %v3757 = vunpack.c.l.b16 %v3238
    %v3758 = vunpack.c.l.b16 %v3239
    %v3759 = vunpack.c.l.b16 %v3240
    %v3760 = vunpack.c.l.b16 %v3241
    %v3761 = vunpack.c.l.b16 %v3242
    %v3762 = vunpack.c.l.b16 %v3243
    %v3763 = vunpack.c.l.b16 %v3244
    %v3764 = vunpack.c.l.b16 %v3245
    %v3765 = vunpack.c.l.b16 %v3246
    %v3766 = vunpack.c.l.b16 %v3247
    %v3767 = vunpack.c.l.b16 %v3248
    %v3768 = vunpack.c.l.b16 %v3249
    %v3769 = vunpack.c.l.b16 %v3250
    %v3770 = vunpack.c.l.b16 %v3251
    %v3771 = vunpack.c.l.b16 %v3252
    %v3772 = vunpack.c.l.b16 %v3253
    %v3773 = vunpack.c.l.b16 %v3254
    %v3774 = vunpack.c.l.b16 %v3255
    %v3775 = vunpack.c.l.b16 %v3256
    %v3776 = vunpack.c.l.b16 %v3257
    %v3777 = vunpack.c.l.b16 %v3258
    %v3778 = vunpack.c.l.b16 %v3259
    %v3779 = vunpack.c.l.b16 %v3260
    %v3780 = vunpack.c.l.b16 %v3261
    %v3781 = vunpack.c.l.b16 %v3262
    %v3782 = vunpack.c.l.b16 %v3263
    %v3783 = vunpack.c.l.b16 %v3264
    %v3784 = vunpack.c.l.b16 %v3265
    %v3785 = vunpack.c.l.b16 %v3266
    %v3786 = vunpack.c.l.b16 %v3267
    %v3787 = vunpack.c.l.b16 %v3268
    %v3788 = vunpack.c.l.b16 %v3269
    %v3789 = vunpack.c.l.b16 %v3270
    %v3790 = vunpack.c.l.b16 %v3271
    %v3791 = vunpack.c.l.b16 %v3272
    %v3792 = vunpack.c.l.b16 %v3273
    %v3793 = vunpack.c.l.b16 %v3274
    %v3794 = vunpack.c.l.b16 %v3275
    %v3795 = vunpack.c.l.b16 %v3276
    %v3796 = vunpack.c.l.b16 %v3277
    %v3797 = vunpack.c.l.b16 %v3278
    %v3798 = vunpack.c.l.b16 %v3279
    %v3799 = vunpack.c.l.b16 %v3280
    %v3800 = vunpack.c.l.b16 %v3281
    %v3801 = vunpack.c.l.b16 %v3282
    %v3802 = vunpack.c.l.b16 %v3283
    %v3803 = vunpack.c.l.b16 %v3284
    %v3804 = vunpack.c.l.b16 %v3285
    %v3805 = vunpack.c.l.b16 %v3286
    %v3806 = vunpack.c.l.b16 %v3287
    %v3807 = vunpack.c.l.b16 %v3288
    %v3808 = vunpack.c.l.b16 %v3289
    %v3809 = vunpack.c.l.b16 %v3290
    %v3810 = vunpack.c.l.b16 %v3291
    %v3811 = vunpack.c.l.b16 %v3292
    %v3812 = vunpack.c.l.b16 %v3293
    %v3813 = vunpack.c.l.b16 %v3294
    %v3814 = vunpack.c.l.b16 %v3295
    %v3815 = vunpack.c.l.b16 %v3296
    %v3816 = vunpack.c.l.b16 %v3297
    %v3817 = vunpack.c.l.b16 %v3298
    %v3818 = vunpack.c.l.b16 %v3299
    %v3819 = vunpack.c.l.b16 %v3300
    %v3820 = vunpack.c.l.b16 %v3301
    %v3821 = vunpack.c.l.b16 %v3302
    %v3822 = vunpack.c.l.b16 %v3303
    %v3823 = vunpack.c.l.b16 %v3304
    %v3824 = vunpack.c.l.b16 %v3305
    %v3825 = vunpack.c.l.b16 %v3306
    %v3826 = vunpack.c.l.b16 %v3307
    %v3827 = vunpack.c.l.b16 %v3308
    %v3828 = vunpack.c.l.b16 %v3309
    %v3829 = vunpack.c.l.b16 %v3310
    %v3830 = vunpack.c.l.b16 %v3311
    %v3831 = vunpack.c.l.b16 %v3312
    %v3832 = vunpack.c.l.b16 %v3313
    %v3833 = vunpack.c.l.b16 %v3314
    %v3834 = vunpack.c.l.b16 %v3315
    %v3835 = vunpack.c.l.b16 %v3316
    %v3836 = vunpack.c.l.b16 %v3317
    %v3837 = vunpack.c.l.b16 %v3318
    %v3838 = vunpack.c.l.b16 %v3319
    %v3839 = vunpack.c.l.b16 %v3320
    %v3840 = vpack.c.b16 %v3585, %v3584
    %v3841 = vpack.c.b16 %v3587, %v3586
    %v3842 = vpack.c.b16 %v3589, %v3588
    %v3843 = vpack.c.b16 %v3591, %v3590
    %v3844 = vpack.c.b16 %v3593, %v3592
    %v3845 = vpack.c.b16 %v3595, %v3594
    %v3846 = vpack.c.b16 %v3597, %v3596
    %v3847 = vpack.c.b16 %v3599, %v3598
    %v3848 = vpack.c.b16 %v3601, %v3600
    %v3849 = vpack.c.b16 %v3603, %v3602
    %v3850 = vpack.c.b16 %v3605, %v3604
    %v3851 = vpack.c.b16 %v3607, %v3606
    %v3852 = vpack.c.b16 %v3609, %v3608
    %v3853 = vpack.c.b16 %v3611, %v3610
    %v3854 = vpack.c.b16 %v3613, %v3612
    %v3855 = vpack.c.b16 %v3615, %v3614
    %v3856 = vpack.c.b16 %v3617, %v3616
    %v3857 = vpack.c.b16 %v3619, %v3618
    %v3858 = vpack.c.b16 %v3621, %v3620
    %v3859 = vpack.c.b16 %v3623, %v3622
    %v3860 = vpack.c.b16 %v3625, %v3624
    %v3861 = vpack.c.b16 %v3627, %v3626
    %v3862 = vpack.c.b16 %v3629, %v3628
    %v3863 = vpack.c.b16 %v3631, %v3630
    %v3864 = vpack.c.b16 %v3633, %v3632
    %v3865 = vpack.c.b16 %v3635, %v3634
    %v3866 = vpack.c.b16 %v3637, %v3636
    %v3867 = vpack.c.b16 %v3639, %v3638
    %v3868 = vpack.c.b16 %v3641, %v3640
    %v3869 = vpack.c.b16 %v3643, %v3642
    %v3870 = vpack.c.b16 %v3645, %v3644
    %v3871 = vpack.c.b16 %v3647, %v3646
    %v3872 = vpack.c.b16 %v3649, %v3648
    %v3873 = vpack.c.b16 %v3651, %v3650
    %v3874 = vpack.c.b16 %v3653, %v3652
    %v3875 = vpack.c.b16 %v3655, %v3654
    %v3876 = vpack.c.b16 %v3657, %v3656
    %v3877 = vpack.c.b16 %v3659, %v3658
    %v3878 = vpack.c.b16 %v3661, %v3660
    %v3879 = vpack.c.b16 %v3663, %v3662
    %v3880 = vpack.c.b16 %v3665, %v3664
    %v3881 = vpack.c.b16 %v3667, %v3666
    %v3882 = vpack.c.b16 %v3669, %v3668
    %v3883 = vpack.c.b16 %v3671, %v3670
    %v3884 = vpack.c.b16 %v3673, %v3672
    %v3885 = vpack.c.b16 %v3675, %v3674
    %v3886 = vpack.c.b16 %v3677, %v3676
    %v3887 = vpack.c.b16 %v3679, %v3678
    %v3888 = vpack.c.b16 %v3681, %v3680
    %v3889 = vpack.c.b16 %v3683, %v3682
    %v3890 = vpack.c.b16 %v3685, %v3684
    %v3891 = vpack.c.b16 %v3687, %v3686
    %v3892 = vpack.c.b16 %v3689, %v3688
    %v3893 = vpack.c.b16 %v3691, %v3690
    %v3894 = vpack.c.b16 %v3693, %v3692
    %v3895 = vpack.c.b16 %v3695, %v3694
    %v3896 = vpack.c.b16 %v3697, %v3696
    %v3897 = vpack.c.b16 %v3699, %v3698
    %v3898 = vpack.c.b16 %v3701, %v3700
    %v3899 = vpack.c.b16 %v3703, %v3702
    %v3900 = vpack.c.b16 %v3705, %v3704
    %v3901 = vpack.c.b16 %v3707, %v3706
    %v3902 = vpack.c.b16 %v3709, %v3708
    %v3903 = vpack.c.b16 %v3711, %v3710
    %v3904 = vpack.c.b16 %v3713, %v3712
    %v3905 = vpack.c.b16 %v3715, %v3714
    %v3906 = vpack.c.b16 %v3717, %v3716
    %v3907 = vpack.c.b16 %v3719, %v3718
    %v3908 = vpack.c.b16 %v3721, %v3720
    %v3909 = vpack.c.b16 %v3723, %v3722
    %v3910 = vpack.c.b16 %v3725, %v3724
    %v3911 = vpack.c.b16 %v3727, %v3726
    %v3912 = vpack.c.b16 %v3729, %v3728
    %v3913 = vpack.c.b16 %v3731, %v3730
    %v3914 = vpack.c.b16 %v3733, %v3732
    %v3915 = vpack.c.b16 %v3735, %v3734
    %v3916 = vpack.c.b16 %v3737, %v3736
    %v3917 = vpack.c.b16 %v3739, %v3738
    %v3918 = vpack.c.b16 %v3741, %v3740
    %v3919 = vpack.c.b16 %v3743, %v3742
    %v3920 = vpack.c.b16 %v3745, %v3744
    %v3921 = vpack.c.b16 %v3747, %v3746
    %v3922 = vpack.c.b16 %v3749, %v3748
    %v3923 = vpack.c.b16 %v3751, %v3750
    %v3924 = vpack.c.b16 %v3753, %v3752
    %v3925 = vpack.c.b16 %v3755, %v3754
    %v3926 = vpack.c.b16 %v3757, %v3756
    %v3927 = vpack.c.b16 %v3759, %v3758
    %v3928 = vpack.c.b16 %v3761, %v3760
    %v3929 = vpack.c.b16 %v3763, %v3762
    %v3930 = vpack.c.b16 %v3765, %v3764
    %v3931 = vpack.c.b16 %v3767, %v3766
    %v3932 = vpack.c.b16 %v3769, %v3768
    %v3933 = vpack.c.b16 %v3771, %v3770
    %v3934 = vpack.c.b16 %v3773, %v3772
    %v3935 = vpack.c.b16 %v3775, %v3774
    %v3936 = vpack.c.b16 %v3777, %v3776
    %v3937 = vpack.c.b16 %v3779, %v3778
    %v3938 = vpack.c.b16 %v3781, %v3780
    %v3939 = vpack.c.b16 %v3783, %v3782
    %v3940 = vpack.c.b16 %v3785, %v3784
    %v3941 = vpack.c.b16 %v3787, %v3786
    %v3942 = vpack.c.b16 %v3789, %v3788
    %v3943 = vpack.c.b16 %v3791, %v3790
    %v3944 = vpack.c.b16 %v3793, %v3792
    %v3945 = vpack.c.b16 %v3795, %v3794
    %v3946 = vpack.c.b16 %v3797, %v3796
    %v3947 = vpack.c.b16 %v3799, %v3798
    %v3948 = vpack.c.b16 %v3801, %v3800
    %v3949 = vpack.c.b16 %v3803, %v3802
    %v3950 = vpack.c.b16 %v3805, %v3804
    %v3951 = vpack.c.b16 %v3807, %v3806
    %v3952 = vpack.c.b16 %v3809, %v3808
    %v3953 = vpack.c.b16 %v3811, %v3810
    %v3954 = vpack.c.b16 %v3813, %v3812
    %v3955 = vpack.c.b16 %v3815, %v3814
    %v3956 = vpack.c.b16 %v3817, %v3816
    %v3957 = vpack.c.b16 %v3819, %v3818
    %v3958 = vpack.c.b16 %v3821, %v3820
    %v3959 = vpack.c.b16 %v3823, %v3822
    %v3960 = vpack.c.b16 %v3825, %v3824
    %v3961 = vpack.c.b16 %v3827, %v3826
    %v3962 = vpack.c.b16 %v3829, %v3828
    %v3963 = vpack.c.b16 %v3831, %v3830
    %v3964 = vpack.c.b16 %v3833, %v3832
    %v3965 = vpack.c.b16 %v3835, %v3834
    %v3966 = vpack.c.b16 %v3837, %v3836
    %v3967 = vpack.c.b16 %v3839, %v3838
    %4096 = vmatprep.subr.bf16.mxu0 0
    %4097 = vmatpush1.bf16.msra.mxu0 %v3840
    %4098 = vmatprep.subr.bf16.mxu0 0
    %4099 = vmatpush1.bf16.msra.mxu0 %v3841
    %4100 = vmatprep.subr.bf16.mxu0 0
    %4101 = vmatpush1.bf16.msra.mxu0 %v3842
    %4102 = vmatprep.subr.bf16.mxu0 0
    %4103 = vmatpush1.bf16.msra.mxu0 %v3843
    %4104 = vmatprep.subr.bf16.mxu0 0
    %4105 = vmatpush1.bf16.msra.mxu0 %v3844
    %4106 = vmatprep.subr.bf16.mxu0 0
    %4107 = vmatpush1.bf16.msra.mxu0 %v3845
    %4108 = vmatprep.subr.bf16.mxu0 0
    %4109 = vmatpush1.bf16.msra.mxu0 %v3846
    %4110 = vmatprep.subr.bf16.mxu0 0
    %4111 = vmatpush1.bf16.msra.mxu0 %v3847
    %4112 = vmatprep.subr.bf16.mxu0 0
    %4113 = vmatpush1.bf16.msra.mxu0 %v3848
    %4114 = vmatprep.subr.bf16.mxu0 0
    %4115 = vmatpush1.bf16.msra.mxu0 %v3849
    %4116 = vmatprep.subr.bf16.mxu0 0
    %4117 = vmatpush1.bf16.msra.mxu0 %v3850
    %4118 = vmatprep.subr.bf16.mxu0 0
    %4119 = vmatpush1.bf16.msra.mxu0 %v3851
    %4120 = vmatprep.subr.bf16.mxu0 0
    %4121 = vmatpush1.bf16.msra.mxu0 %v3852
    %4122 = vmatprep.subr.bf16.mxu0 0
    %4123 = vmatpush1.bf16.msra.mxu0 %v3853
    %4124 = vmatprep.subr.bf16.mxu0 0
    %4125 = vmatpush1.bf16.msra.mxu0 %v3854
    %4126 = vmatprep.subr.bf16.mxu0 0
    %4127 = vmatpush1.bf16.msra.mxu0 %v3855
    %4128 = vmatprep.mubr.bf16.mxu0 %v481
    %4129 = vmatmul.mubr.bf16.gmra.mrb[0].mxu0 %v297
    %v4130 = vpop.f32.mrb[0].mxu0
    %v4131 = vadd.f32 %v3326, %v4130
    %v4132 = vpop.f32.mrb[0].mxu0
    %v4133 = vpop.f32.mrb[0].mxu0
    %v4134 = vadd.f32 %v3326, %v4133
    %v4135 = vpop.f32.mrb[0].mxu0
    %4136 = vmatprep.mubr.bf16.mxu0 %v482
    %4137 = vmatmul.mubr.bf16.gmra.mrb[0].mxu0 %v298
    %v4138 = vpop.f32.mrb[0].mxu0
    %v4139 = vadd.f32 %v3326, %v4138
    %v4140 = vpop.f32.mrb[0].mxu0
    %v4141 = vpop.f32.mrb[0].mxu0
    %v4142 = vadd.f32 %v3326, %v4141
    %v4143 = vpop.f32.mrb[0].mxu0
    %4144 = vmatprep.mubr.bf16.mxu0 %v483
    %4145 = vmatmul.mubr.bf16.gmra.mrb[0].mxu0 %v299
    %v4146 = vpop.f32.mrb[0].mxu0
    %v4147 = vadd.f32 %v3326, %v4146
    %v4148 = vpop.f32.mrb[0].mxu0
    %v4149 = vpop.f32.mrb[0].mxu0
    %v4150 = vadd.f32 %v3326, %v4149
    %v4151 = vpop.f32.mrb[0].mxu0
    %4152 = vmatprep.mubr.bf16.mxu0 %v484
    %4153 = vmatmul.mubr.bf16.gmra.mrb[0].mxu0 %v300
    %v4154 = vpop.f32.mrb[0].mxu0
    %v4155 = vadd.f32 %v3326, %v4154
    %v4156 = vpop.f32.mrb[0].mxu0
    %v4157 = vpop.f32.mrb[0].mxu0
    %v4158 = vadd.f32 %v3326, %v4157
    %v4159 = vpop.f32.mrb[0].mxu0
    %4160 = vmatprep.mubr.bf16.mxu0 %v485
    %4161 = vmatmul.mubr.bf16.gmra.mrb[0].mxu0 %v301
    %v4162 = vpop.f32.mrb[0].mxu0
    %v4163 = vadd.f32 %v3326, %v4162
    %v4164 = vpop.f32.mrb[0].mxu0
    %v4165 = vpop.f32.mrb[0].mxu0
    %v4166 = vadd.f32 %v3326, %v4165
    %v4167 = vpop.f32.mrb[0].mxu0
    %4168 = vmatprep.mubr.bf16.mxu0 %v486
    %4169 = vmatmul.mubr.bf16.gmra.mrb[0].mxu0 %v302
    %v4170 = vpop.f32.mrb[0].mxu0
    %v4171 = vadd.f32 %v3326, %v4170
    %v4172 = vpop.f32.mrb[0].mxu0
    %v4173 = vpop.f32.mrb[0].mxu0
    %v4174 = vadd.f32 %v3326, %v4173
    %v4175 = vpop.f32.mrb[0].mxu0
    %4176 = vmatprep.mubr.bf16.mxu0 %v487
    %4177 = vmatmul.mubr.bf16.gmra.mrb[0].mxu0 %v303
    %v4178 = vpop.f32.mrb[0].mxu0
    %v4179 = vadd.f32 %v3326, %v4178
    %v4180 = vpop.f32.mrb[0].mxu0
    %v4181 = vpop.f32.mrb[0].mxu0
    %v4182 = vadd.f32 %v3326, %v4181
    %v4183 = vpop.f32.mrb[0].mxu0
    %4184 = vmatprep.mubr.bf16.mxu0 %v488
    %4185 = vmatmul.mubr.bf16.gmra.mrb[0].mxu0 %v304
    %v4186 = vpop.f32.mrb[0].mxu0
    %v4187 = vadd.f32 %v3326, %v4186
    %v4188 = vpop.f32.mrb[0].mxu0
    %v4189 = vpop.f32.mrb[0].mxu0
    %v4190 = vadd.f32 %v3326, %v4189
    %v4191 = vpop.f32.mrb[0].mxu0
    %4192 = vdwg.mxu0
    %4193 = vmatprep.subr.bf16.mxu0 0
    %4194 = vmatpush1.bf16.msra.mxu0 %v3856
    %4195 = vmatprep.subr.bf16.mxu0 0
    %4196 = vmatpush1.bf16.msra.mxu0 %v3857
    %4197 = vmatprep.subr.bf16.mxu0 0
    %4198 = vmatpush1.bf16.msra.mxu0 %v3858
    %4199 = vmatprep.subr.bf16.mxu0 0
    %4200 = vmatpush1.bf16.msra.mxu0 %v3859
    %4201 = vmatprep.subr.bf16.mxu0 0
    %4202 = vmatpush1.bf16.msra.mxu0 %v3860
    %4203 = vmatprep.subr.bf16.mxu0 0
    %4204 = vmatpush1.bf16.msra.mxu0 %v3861
    %4205 = vmatprep.subr.bf16.mxu0 0
    %4206 = vmatpush1.bf16.msra.mxu0 %v3862
    %4207 = vmatprep.subr.bf16.mxu0 0
    %4208 = vmatpush1.bf16.msra.mxu0 %v3863
    %4209 = vmatprep.subr.bf16.mxu0 0
    %4210 = vmatpush1.bf16.msra.mxu0 %v3864
    %4211 = vmatprep.subr.bf16.mxu0 0
    %4212 = vmatpush1.bf16.msra.mxu0 %v3865
    %4213 = vmatprep.subr.bf16.mxu0 0
    %4214 = vmatpush1.bf16.msra.mxu0 %v3866
    %4215 = vmatprep.subr.bf16.mxu0 0
    %4216 = vmatpush1.bf16.msra.mxu0 %v3867
    %4217 = vmatprep.subr.bf16.mxu0 0
    %4218 = vmatpush1.bf16.msra.mxu0 %v3868
    %4219 = vmatprep.subr.bf16.mxu0 0
    %4220 = vmatpush1.bf16.msra.mxu0 %v3869
    %4221 = vmatprep.subr.bf16.mxu0 0
    %4222 = vmatpush1.bf16.msra.mxu0 %v3870
    %4223 = vmatprep.subr.bf16.mxu0 0
    %4224 = vmatpush1.bf16.msra.mxu0 %v3871
    %4225 = vmatprep.mubr.bf16.mxu0 %v849
    %4226 = vmatmul.mubr.bf16.gmra.mrb[0].mxu0 %v665
    %v4227 = vpop.f32.mrb[0].mxu0
    %v4228 = vadd.f32 %v4131, %v4227
    %v4229 = vpop.f32.mrb[0].mxu0
    %v4230 = vpop.f32.mrb[0].mxu0
    %v4231 = vadd.f32 %v4134, %v4230
    %v4232 = vpop.f32.mrb[0].mxu0
    %4233 = vmatprep.mubr.bf16.mxu0 %v850
    %4234 = vmatmul.mubr.bf16.gmra.mrb[0].mxu0 %v666
    %v4235 = vpop.f32.mrb[0].mxu0
    %v4236 = vadd.f32 %v4139, %v4235
    %v4237 = vpop.f32.mrb[0].mxu0
    %v4238 = vpop.f32.mrb[0].mxu0
    %v4239 = vadd.f32 %v4142, %v4238
    %v4240 = vpop.f32.mrb[0].mxu0
    %4241 = vmatprep.mubr.bf16.mxu0 %v851
    %4242 = vmatmul.mubr.bf16.gmra.mrb[0].mxu0 %v667
    %v4243 = vpop.f32.mrb[0].mxu0
    %v4244 = vadd.f32 %v4147, %v4243
    %v4245 = vpop.f32.mrb[0].mxu0
    %v4246 = vpop.f32.mrb[0].mxu0
    %v4247 = vadd.f32 %v4150, %v4246
    %v4248 = vpop.f32.mrb[0].mxu0
    %4249 = vmatprep.mubr.bf16.mxu0 %v852
    %4250 = vmatmul.mubr.bf16.gmra.mrb[0].mxu0 %v668
    %v4251 = vpop.f32.mrb[0].mxu0
    %v4252 = vadd.f32 %v4155, %v4251
    %v4253 = vpop.f32.mrb[0].mxu0
    %v4254 = vpop.f32.mrb[0].mxu0
    %v4255 = vadd.f32 %v4158, %v4254
    %v4256 = vpop.f32.mrb[0].mxu0
    %4257 = vmatprep.mubr.bf16.mxu0 %v853
    %4258 = vmatmul.mubr.bf16.gmra.mrb[0].mxu0 %v669
    %v4259 = vpop.f32.mrb[0].mxu0
    %v4260 = vadd.f32 %v4163, %v4259
    %v4261 = vpop.f32.mrb[0].mxu0
    %v4262 = vpop.f32.mrb[0].mxu0
    %v4263 = vadd.f32 %v4166, %v4262
    %v4264 = vpop.f32.mrb[0].mxu0
    %4265 = vmatprep.mubr.bf16.mxu0 %v854
    %4266 = vmatmul.mubr.bf16.gmra.mrb[0].mxu0 %v670
    %v4267 = vpop.f32.mrb[0].mxu0
    %v4268 = vadd.f32 %v4171, %v4267
    %v4269 = vpop.f32.mrb[0].mxu0
    %v4270 = vpop.f32.mrb[0].mxu0
    %v4271 = vadd.f32 %v4174, %v4270
    %v4272 = vpop.f32.mrb[0].mxu0
    %4273 = vmatprep.mubr.bf16.mxu0 %v855
    %4274 = vmatmul.mubr.bf16.gmra.mrb[0].mxu0 %v671
    %v4275 = vpop.f32.mrb[0].mxu0
    %v4276 = vadd.f32 %v4179, %v4275
    %v4277 = vpop.f32.mrb[0].mxu0
    %v4278 = vpop.f32.mrb[0].mxu0
    %v4279 = vadd.f32 %v4182, %v4278
    %v4280 = vpop.f32.mrb[0].mxu0
    %4281 = vmatprep.mubr.bf16.mxu0 %v856
    %4282 = vmatmul.mubr.bf16.gmra.mrb[0].mxu0 %v672
    %v4283 = vpop.f32.mrb[0].mxu0
    %v4284 = vadd.f32 %v4187, %v4283
    %v4285 = vpop.f32.mrb[0].mxu0
    %v4286 = vpop.f32.mrb[0].mxu0
    %v4287 = vadd.f32 %v4190, %v4286
    %v4288 = vpop.f32.mrb[0].mxu0
    %4289 = vdwg.mxu0
    %4290 = vmatprep.subr.bf16.mxu0 0
    %4291 = vmatpush1.bf16.msra.mxu0 %v3872
    %4292 = vmatprep.subr.bf16.mxu0 0
    %4293 = vmatpush1.bf16.msra.mxu0 %v3873
    %4294 = vmatprep.subr.bf16.mxu0 0
    %4295 = vmatpush1.bf16.msra.mxu0 %v3874
    %4296 = vmatprep.subr.bf16.mxu0 0
    %4297 = vmatpush1.bf16.msra.mxu0 %v3875
    %4298 = vmatprep.subr.bf16.mxu0 0
    %4299 = vmatpush1.bf16.msra.mxu0 %v3876
    %4300 = vmatprep.subr.bf16.mxu0 0
    %4301 = vmatpush1.bf16.msra.mxu0 %v3877
    %4302 = vmatprep.subr.bf16.mxu0 0
    %4303 = vmatpush1.bf16.msra.mxu0 %v3878
    %4304 = vmatprep.subr.bf16.mxu0 0
    %4305 = vmatpush1.bf16.msra.mxu0 %v3879
    %4306 = vmatprep.subr.bf16.mxu0 0
    %4307 = vmatpush1.bf16.msra.mxu0 %v3880
    %4308 = vmatprep.subr.bf16.mxu0 0
    %4309 = vmatpush1.bf16.msra.mxu0 %v3881
    %4310 = vmatprep.subr.bf16.mxu0 0
    %4311 = vmatpush1.bf16.msra.mxu0 %v3882
    %4312 = vmatprep.subr.bf16.mxu0 0
    %4313 = vmatpush1.bf16.msra.mxu0 %v3883
    %4314 = vmatprep.subr.bf16.mxu0 0
    %4315 = vmatpush1.bf16.msra.mxu0 %v3884
    %4316 = vmatprep.subr.bf16.mxu0 0
    %4317 = vmatpush1.bf16.msra.mxu0 %v3885
    %4318 = vmatprep.subr.bf16.mxu0 0
    %4319 = vmatpush1.bf16.msra.mxu0 %v3886
    %4320 = vmatprep.subr.bf16.mxu0 0
    %4321 = vmatpush1.bf16.msra.mxu0 %v3887
    %4322 = vmatprep.mubr.bf16.mxu0 %v1217
    %4323 = vmatmul.mubr.bf16.gmra.mrb[0].mxu0 %v1033
    %v4324 = vpop.f32.mrb[0].mxu0
    %v4325 = vadd.f32 %v4228, %v4324
    %v4326 = vpop.f32.mrb[0].mxu0
    %v4327 = vpop.f32.mrb[0].mxu0
    %v4328 = vadd.f32 %v4231, %v4327
    %v4329 = vpop.f32.mrb[0].mxu0
    %4330 = vmatprep.mubr.bf16.mxu0 %v1218
    %4331 = vmatmul.mubr.bf16.gmra.mrb[0].mxu0 %v1034
    %v4332 = vpop.f32.mrb[0].mxu0
    %v4333 = vadd.f32 %v4236, %v4332
    %v4334 = vpop.f32.mrb[0].mxu0
    %v4335 = vpop.f32.mrb[0].mxu0
    %v4336 = vadd.f32 %v4239, %v4335
    %v4337 = vpop.f32.mrb[0].mxu0
    %4338 = vmatprep.mubr.bf16.mxu0 %v1219
    %4339 = vmatmul.mubr.bf16.gmra.mrb[0].mxu0 %v1035
    %v4340 = vpop.f32.mrb[0].mxu0
    %v4341 = vadd.f32 %v4244, %v4340
    %v4342 = vpop.f32.mrb[0].mxu0
    %v4343 = vpop.f32.mrb[0].mxu0
    %v4344 = vadd.f32 %v4247, %v4343
    %v4345 = vpop.f32.mrb[0].mxu0
    %4346 = vmatprep.mubr.bf16.mxu0 %v1220
    %4347 = vmatmul.mubr.bf16.gmra.mrb[0].mxu0 %v1036
    %v4348 = vpop.f32.mrb[0].mxu0
    %v4349 = vadd.f32 %v4252, %v4348
    %v4350 = vpop.f32.mrb[0].mxu0
    %v4351 = vpop.f32.mrb[0].mxu0
    %v4352 = vadd.f32 %v4255, %v4351
    %v4353 = vpop.f32.mrb[0].mxu0
    %4354 = vmatprep.mubr.bf16.mxu0 %v1221
    %4355 = vmatmul.mubr.bf16.gmra.mrb[0].mxu0 %v1037
    %v4356 = vpop.f32.mrb[0].mxu0
    %v4357 = vadd.f32 %v4260, %v4356
    %v4358 = vpop.f32.mrb[0].mxu0
    %v4359 = vpop.f32.mrb[0].mxu0
    %v4360 = vadd.f32 %v4263, %v4359
    %v4361 = vpop.f32.mrb[0].mxu0
    %4362 = vmatprep.mubr.bf16.mxu0 %v1222
    %4363 = vmatmul.mubr.bf16.gmra.mrb[0].mxu0 %v1038
    %v4364 = vpop.f32.mrb[0].mxu0
    %v4365 = vadd.f32 %v4268, %v4364
    %v4366 = vpop.f32.mrb[0].mxu0
    %v4367 = vpop.f32.mrb[0].mxu0
    %v4368 = vadd.f32 %v4271, %v4367
    %v4369 = vpop.f32.mrb[0].mxu0
    %4370 = vmatprep.mubr.bf16.mxu0 %v1223
    %4371 = vmatmul.mubr.bf16.gmra.mrb[0].mxu0 %v1039
    %v4372 = vpop.f32.mrb[0].mxu0
    %v4373 = vadd.f32 %v4276, %v4372
    %v4374 = vpop.f32.mrb[0].mxu0
    %v4375 = vpop.f32.mrb[0].mxu0
    %v4376 = vadd.f32 %v4279, %v4375
    %v4377 = vpop.f32.mrb[0].mxu0
    %4378 = vmatprep.mubr.bf16.mxu0 %v1224
    %4379 = vmatmul.mubr.bf16.gmra.mrb[0].mxu0 %v1040
    %v4380 = vpop.f32.mrb[0].mxu0
    %v4381 = vadd.f32 %v4284, %v4380
    %v4382 = vpop.f32.mrb[0].mxu0
    %v4383 = vpop.f32.mrb[0].mxu0
    %v4384 = vadd.f32 %v4287, %v4383
    %v4385 = vpop.f32.mrb[0].mxu0
    %4386 = vdwg.mxu0
    %4387 = vmatprep.subr.bf16.mxu0 0
    %4388 = vmatpush1.bf16.msra.mxu0 %v3888
    %4389 = vmatprep.subr.bf16.mxu0 0
    %4390 = vmatpush1.bf16.msra.mxu0 %v3889
    %4391 = vmatprep.subr.bf16.mxu0 0
    %4392 = vmatpush1.bf16.msra.mxu0 %v3890
    %4393 = vmatprep.subr.bf16.mxu0 0
    %4394 = vmatpush1.bf16.msra.mxu0 %v3891
    %4395 = vmatprep.subr.bf16.mxu0 0
    %4396 = vmatpush1.bf16.msra.mxu0 %v3892
    %4397 = vmatprep.subr.bf16.mxu0 0
    %4398 = vmatpush1.bf16.msra.mxu0 %v3893
    %4399 = vmatprep.subr.bf16.mxu0 0
    %4400 = vmatpush1.bf16.msra.mxu0 %v3894
    %4401 = vmatprep.subr.bf16.mxu0 0
    %4402 = vmatpush1.bf16.msra.mxu0 %v3895
    %4403 = vmatprep.subr.bf16.mxu0 0
    %4404 = vmatpush1.bf16.msra.mxu0 %v3896
    %4405 = vmatprep.subr.bf16.mxu0 0
    %4406 = vmatpush1.bf16.msra.mxu0 %v3897
    %4407 = vmatprep.subr.bf16.mxu0 0
    %4408 = vmatpush1.bf16.msra.mxu0 %v3898
    %4409 = vmatprep.subr.bf16.mxu0 0
    %4410 = vmatpush1.bf16.msra.mxu0 %v3899
    %4411 = vmatprep.subr.bf16.mxu0 0
    %4412 = vmatpush1.bf16.msra.mxu0 %v3900
    %4413 = vmatprep.subr.bf16.mxu0 0
    %4414 = vmatpush1.bf16.msra.mxu0 %v3901
    %4415 = vmatprep.subr.bf16.mxu0 0
    %4416 = vmatpush1.bf16.msra.mxu0 %v3902
    %4417 = vmatprep.subr.bf16.mxu0 0
    %4418 = vmatpush1.bf16.msra.mxu0 %v3903
    %4419 = vmatprep.mubr.bf16.mxu0 %v1585
    %4420 = vmatmul.mubr.bf16.gmra.mrb[0].mxu0 %v1401
    %v4421 = vpop.f32.mrb[0].mxu0
    %v4422 = vadd.f32 %v4325, %v4421
    %v4423 = vpop.f32.mrb[0].mxu0
    %v4424 = vpop.f32.mrb[0].mxu0
    %v4425 = vadd.f32 %v4328, %v4424
    %v4426 = vpop.f32.mrb[0].mxu0
    %4427 = vmatprep.mubr.bf16.mxu0 %v1586
    %4428 = vmatmul.mubr.bf16.gmra.mrb[0].mxu0 %v1402
    %v4429 = vpop.f32.mrb[0].mxu0
    %v4430 = vadd.f32 %v4333, %v4429
    %v4431 = vpop.f32.mrb[0].mxu0
    %v4432 = vpop.f32.mrb[0].mxu0
    %v4433 = vadd.f32 %v4336, %v4432
    %v4434 = vpop.f32.mrb[0].mxu0
    %4435 = vmatprep.mubr.bf16.mxu0 %v1587
    %4436 = vmatmul.mubr.bf16.gmra.mrb[0].mxu0 %v1403
    %v4437 = vpop.f32.mrb[0].mxu0
    %v4438 = vadd.f32 %v4341, %v4437
    %v4439 = vpop.f32.mrb[0].mxu0
    %v4440 = vpop.f32.mrb[0].mxu0
    %v4441 = vadd.f32 %v4344, %v4440
    %v4442 = vpop.f32.mrb[0].mxu0
    %4443 = vmatprep.mubr.bf16.mxu0 %v1588
    %4444 = vmatmul.mubr.bf16.gmra.mrb[0].mxu0 %v1404
    %v4445 = vpop.f32.mrb[0].mxu0
    %v4446 = vadd.f32 %v4349, %v4445
    %v4447 = vpop.f32.mrb[0].mxu0
    %v4448 = vpop.f32.mrb[0].mxu0
    %v4449 = vadd.f32 %v4352, %v4448
    %v4450 = vpop.f32.mrb[0].mxu0
    %4451 = vmatprep.mubr.bf16.mxu0 %v1589
    %4452 = vmatmul.mubr.bf16.gmra.mrb[0].mxu0 %v1405
    %v4453 = vpop.f32.mrb[0].mxu0
    %v4454 = vadd.f32 %v4357, %v4453
    %v4455 = vpop.f32.mrb[0].mxu0
    %v4456 = vpop.f32.mrb[0].mxu0
    %v4457 = vadd.f32 %v4360, %v4456
    %v4458 = vpop.f32.mrb[0].mxu0
    %4459 = vmatprep.mubr.bf16.mxu0 %v1590
    %4460 = vmatmul.mubr.bf16.gmra.mrb[0].mxu0 %v1406
    %v4461 = vpop.f32.mrb[0].mxu0
    %v4462 = vadd.f32 %v4365, %v4461
    %v4463 = vpop.f32.mrb[0].mxu0
    %v4464 = vpop.f32.mrb[0].mxu0
    %v4465 = vadd.f32 %v4368, %v4464
    %v4466 = vpop.f32.mrb[0].mxu0
    %4467 = vmatprep.mubr.bf16.mxu0 %v1591
    %4468 = vmatmul.mubr.bf16.gmra.mrb[0].mxu0 %v1407
    %v4469 = vpop.f32.mrb[0].mxu0
    %v4470 = vadd.f32 %v4373, %v4469
    %v4471 = vpop.f32.mrb[0].mxu0
    %v4472 = vpop.f32.mrb[0].mxu0
    %v4473 = vadd.f32 %v4376, %v4472
    %v4474 = vpop.f32.mrb[0].mxu0
    %4475 = vmatprep.mubr.bf16.mxu0 %v1592
    %4476 = vmatmul.mubr.bf16.gmra.mrb[0].mxu0 %v1408
    %v4477 = vpop.f32.mrb[0].mxu0
    %v4478 = vadd.f32 %v4381, %v4477
    %v4479 = vpop.f32.mrb[0].mxu0
    %v4480 = vpop.f32.mrb[0].mxu0
    %v4481 = vadd.f32 %v4384, %v4480
    %v4482 = vpop.f32.mrb[0].mxu0
    %4483 = vdwg.mxu0
    %4484 = vmatprep.subr.bf16.mxu0 0
    %4485 = vmatpush1.bf16.msra.mxu0 %v3904
    %4486 = vmatprep.subr.bf16.mxu0 0
    %4487 = vmatpush1.bf16.msra.mxu0 %v3905
    %4488 = vmatprep.subr.bf16.mxu0 0
    %4489 = vmatpush1.bf16.msra.mxu0 %v3906
    %4490 = vmatprep.subr.bf16.mxu0 0
    %4491 = vmatpush1.bf16.msra.mxu0 %v3907
    %4492 = vmatprep.subr.bf16.mxu0 0
    %4493 = vmatpush1.bf16.msra.mxu0 %v3908
    %4494 = vmatprep.subr.bf16.mxu0 0
    %4495 = vmatpush1.bf16.msra.mxu0 %v3909
    %4496 = vmatprep.subr.bf16.mxu0 0
    %4497 = vmatpush1.bf16.msra.mxu0 %v3910
    %4498 = vmatprep.subr.bf16.mxu0 0
    %4499 = vmatpush1.bf16.msra.mxu0 %v3911
    %4500 = vmatprep.subr.bf16.mxu0 0
    %4501 = vmatpush1.bf16.msra.mxu0 %v3912
    %4502 = vmatprep.subr.bf16.mxu0 0
    %4503 = vmatpush1.bf16.msra.mxu0 %v3913
    %4504 = vmatprep.subr.bf16.mxu0 0
    %4505 = vmatpush1.bf16.msra.mxu0 %v3914
    %4506 = vmatprep.subr.bf16.mxu0 0
    %4507 = vmatpush1.bf16.msra.mxu0 %v3915
    %4508 = vmatprep.subr.bf16.mxu0 0
    %4509 = vmatpush1.bf16.msra.mxu0 %v3916
    %4510 = vmatprep.subr.bf16.mxu0 0
    %4511 = vmatpush1.bf16.msra.mxu0 %v3917
    %4512 = vmatprep.subr.bf16.mxu0 0
    %4513 = vmatpush1.bf16.msra.mxu0 %v3918
    %4514 = vmatprep.subr.bf16.mxu0 0
    %4515 = vmatpush1.bf16.msra.mxu0 %v3919
    %4516 = vmatprep.mubr.bf16.mxu0 %v1953
    %4517 = vmatmul.mubr.bf16.gmra.mrb[0].mxu0 %v1769
    %v4518 = vpop.f32.mrb[0].mxu0
    %v4519 = vadd.f32 %v4422, %v4518
    %v4520 = vpop.f32.mrb[0].mxu0
    %v4521 = vpop.f32.mrb[0].mxu0
    %v4522 = vadd.f32 %v4425, %v4521
    %v4523 = vpop.f32.mrb[0].mxu0
    %4524 = vmatprep.mubr.bf16.mxu0 %v1954
    %4525 = vmatmul.mubr.bf16.gmra.mrb[0].mxu0 %v1770
    %v4526 = vpop.f32.mrb[0].mxu0
    %v4527 = vadd.f32 %v4430, %v4526
    %v4528 = vpop.f32.mrb[0].mxu0
    %v4529 = vpop.f32.mrb[0].mxu0
    %v4530 = vadd.f32 %v4433, %v4529
    %v4531 = vpop.f32.mrb[0].mxu0
    %4532 = vmatprep.mubr.bf16.mxu0 %v1955
    %4533 = vmatmul.mubr.bf16.gmra.mrb[0].mxu0 %v1771
    %v4534 = vpop.f32.mrb[0].mxu0
    %v4535 = vadd.f32 %v4438, %v4534
    %v4536 = vpop.f32.mrb[0].mxu0
    %v4537 = vpop.f32.mrb[0].mxu0
    %v4538 = vadd.f32 %v4441, %v4537
    %v4539 = vpop.f32.mrb[0].mxu0
    %4540 = vmatprep.mubr.bf16.mxu0 %v1956
    %4541 = vmatmul.mubr.bf16.gmra.mrb[0].mxu0 %v1772
    %v4542 = vpop.f32.mrb[0].mxu0
    %v4543 = vadd.f32 %v4446, %v4542
    %v4544 = vpop.f32.mrb[0].mxu0
    %v4545 = vpop.f32.mrb[0].mxu0
    %v4546 = vadd.f32 %v4449, %v4545
    %v4547 = vpop.f32.mrb[0].mxu0
    %4548 = vmatprep.mubr.bf16.mxu0 %v1957
    %4549 = vmatmul.mubr.bf16.gmra.mrb[0].mxu0 %v1773
    %v4550 = vpop.f32.mrb[0].mxu0
    %v4551 = vadd.f32 %v4454, %v4550
    %v4552 = vpop.f32.mrb[0].mxu0
    %v4553 = vpop.f32.mrb[0].mxu0
    %v4554 = vadd.f32 %v4457, %v4553
    %v4555 = vpop.f32.mrb[0].mxu0
    %4556 = vmatprep.mubr.bf16.mxu0 %v1958
    %4557 = vmatmul.mubr.bf16.gmra.mrb[0].mxu0 %v1774
    %v4558 = vpop.f32.mrb[0].mxu0
    %v4559 = vadd.f32 %v4462, %v4558
    %v4560 = vpop.f32.mrb[0].mxu0
    %v4561 = vpop.f32.mrb[0].mxu0
    %v4562 = vadd.f32 %v4465, %v4561
    %v4563 = vpop.f32.mrb[0].mxu0
    %4564 = vmatprep.mubr.bf16.mxu0 %v1959
    %4565 = vmatmul.mubr.bf16.gmra.mrb[0].mxu0 %v1775
    %v4566 = vpop.f32.mrb[0].mxu0
    %v4567 = vadd.f32 %v4470, %v4566
    %v4568 = vpop.f32.mrb[0].mxu0
    %v4569 = vpop.f32.mrb[0].mxu0
    %v4570 = vadd.f32 %v4473, %v4569
    %v4571 = vpop.f32.mrb[0].mxu0
    %4572 = vmatprep.mubr.bf16.mxu0 %v1960
    %4573 = vmatmul.mubr.bf16.gmra.mrb[0].mxu0 %v1776
    %v4574 = vpop.f32.mrb[0].mxu0
    %v4575 = vadd.f32 %v4478, %v4574
    %v4576 = vpop.f32.mrb[0].mxu0
    %v4577 = vpop.f32.mrb[0].mxu0
    %v4578 = vadd.f32 %v4481, %v4577
    %v4579 = vpop.f32.mrb[0].mxu0
    %4580 = vdwg.mxu0
    %4581 = vmatprep.subr.bf16.mxu0 0
    %4582 = vmatpush1.bf16.msra.mxu0 %v3920
    %4583 = vmatprep.subr.bf16.mxu0 0
    %4584 = vmatpush1.bf16.msra.mxu0 %v3921
    %4585 = vmatprep.subr.bf16.mxu0 0
    %4586 = vmatpush1.bf16.msra.mxu0 %v3922
    %4587 = vmatprep.subr.bf16.mxu0 0
    %4588 = vmatpush1.bf16.msra.mxu0 %v3923
    %4589 = vmatprep.subr.bf16.mxu0 0
    %4590 = vmatpush1.bf16.msra.mxu0 %v3924
    %4591 = vmatprep.subr.bf16.mxu0 0
    %4592 = vmatpush1.bf16.msra.mxu0 %v3925
    %4593 = vmatprep.subr.bf16.mxu0 0
    %4594 = vmatpush1.bf16.msra.mxu0 %v3926
    %4595 = vmatprep.subr.bf16.mxu0 0
    %4596 = vmatpush1.bf16.msra.mxu0 %v3927
    %4597 = vmatprep.subr.bf16.mxu0 0
    %4598 = vmatpush1.bf16.msra.mxu0 %v3928
    %4599 = vmatprep.subr.bf16.mxu0 0
    %4600 = vmatpush1.bf16.msra.mxu0 %v3929
    %4601 = vmatprep.subr.bf16.mxu0 0
    %4602 = vmatpush1.bf16.msra.mxu0 %v3930
    %4603 = vmatprep.subr.bf16.mxu0 0
    %4604 = vmatpush1.bf16.msra.mxu0 %v3931
    %4605 = vmatprep.subr.bf16.mxu0 0
    %4606 = vmatpush1.bf16.msra.mxu0 %v3932
    %4607 = vmatprep.subr.bf16.mxu0 0
    %4608 = vmatpush1.bf16.msra.mxu0 %v3933
    %4609 = vmatprep.subr.bf16.mxu0 0
    %4610 = vmatpush1.bf16.msra.mxu0 %v3934
    %4611 = vmatprep.subr.bf16.mxu0 0
    %4612 = vmatpush1.bf16.msra.mxu0 %v3935
    %4613 = vmatprep.mubr.bf16.mxu0 %v2321
    %4614 = vmatmul.mubr.bf16.gmra.mrb[0].mxu0 %v2137
    %v4615 = vpop.f32.mrb[0].mxu0
    %v4616 = vadd.f32 %v4519, %v4615
    %v4617 = vpop.f32.mrb[0].mxu0
    %v4618 = vpop.f32.mrb[0].mxu0
    %v4619 = vadd.f32 %v4522, %v4618
    %v4620 = vpop.f32.mrb[0].mxu0
    %4621 = vmatprep.mubr.bf16.mxu0 %v2322
    %4622 = vmatmul.mubr.bf16.gmra.mrb[0].mxu0 %v2138
    %v4623 = vpop.f32.mrb[0].mxu0
    %v4624 = vadd.f32 %v4527, %v4623
    %v4625 = vpop.f32.mrb[0].mxu0
    %v4626 = vpop.f32.mrb[0].mxu0
    %v4627 = vadd.f32 %v4530, %v4626
    %v4628 = vpop.f32.mrb[0].mxu0
    %4629 = vmatprep.mubr.bf16.mxu0 %v2323
    %4630 = vmatmul.mubr.bf16.gmra.mrb[0].mxu0 %v2139
    %v4631 = vpop.f32.mrb[0].mxu0
    %v4632 = vadd.f32 %v4535, %v4631
    %v4633 = vpop.f32.mrb[0].mxu0
    %v4634 = vpop.f32.mrb[0].mxu0
    %v4635 = vadd.f32 %v4538, %v4634
    %v4636 = vpop.f32.mrb[0].mxu0
    %4637 = vmatprep.mubr.bf16.mxu0 %v2324
    %4638 = vmatmul.mubr.bf16.gmra.mrb[0].mxu0 %v2140
    %v4639 = vpop.f32.mrb[0].mxu0
    %v4640 = vadd.f32 %v4543, %v4639
    %v4641 = vpop.f32.mrb[0].mxu0
    %v4642 = vpop.f32.mrb[0].mxu0
    %v4643 = vadd.f32 %v4546, %v4642
    %v4644 = vpop.f32.mrb[0].mxu0
    %4645 = vmatprep.mubr.bf16.mxu0 %v2325
    %4646 = vmatmul.mubr.bf16.gmra.mrb[0].mxu0 %v2141
    %v4647 = vpop.f32.mrb[0].mxu0
    %v4648 = vadd.f32 %v4551, %v4647
    %v4649 = vpop.f32.mrb[0].mxu0
    %v4650 = vpop.f32.mrb[0].mxu0
    %v4651 = vadd.f32 %v4554, %v4650
    %v4652 = vpop.f32.mrb[0].mxu0
    %4653 = vmatprep.mubr.bf16.mxu0 %v2326
    %4654 = vmatmul.mubr.bf16.gmra.mrb[0].mxu0 %v2142
    %v4655 = vpop.f32.mrb[0].mxu0
    %v4656 = vadd.f32 %v4559, %v4655
    %v4657 = vpop.f32.mrb[0].mxu0
    %v4658 = vpop.f32.mrb[0].mxu0
    %v4659 = vadd.f32 %v4562, %v4658
    %v4660 = vpop.f32.mrb[0].mxu0
    %4661 = vmatprep.mubr.bf16.mxu0 %v2327
    %4662 = vmatmul.mubr.bf16.gmra.mrb[0].mxu0 %v2143
    %v4663 = vpop.f32.mrb[0].mxu0
    %v4664 = vadd.f32 %v4567, %v4663
    %v4665 = vpop.f32.mrb[0].mxu0
    %v4666 = vpop.f32.mrb[0].mxu0
    %v4667 = vadd.f32 %v4570, %v4666
    %v4668 = vpop.f32.mrb[0].mxu0
    %4669 = vmatprep.mubr.bf16.mxu0 %v2328
    %4670 = vmatmul.mubr.bf16.gmra.mrb[0].mxu0 %v2144
    %v4671 = vpop.f32.mrb[0].mxu0
    %v4672 = vadd.f32 %v4575, %v4671
    %v4673 = vpop.f32.mrb[0].mxu0
    %v4674 = vpop.f32.mrb[0].mxu0
    %v4675 = vadd.f32 %v4578, %v4674
    %v4676 = vpop.f32.mrb[0].mxu0
    %4677 = vdwg.mxu0
    %4678 = vmatprep.subr.bf16.mxu0 0
    %4679 = vmatpush1.bf16.msra.mxu0 %v3936
    %4680 = vmatprep.subr.bf16.mxu0 0
    %4681 = vmatpush1.bf16.msra.mxu0 %v3937
    %4682 = vmatprep.subr.bf16.mxu0 0
    %4683 = vmatpush1.bf16.msra.mxu0 %v3938
    %4684 = vmatprep.subr.bf16.mxu0 0
    %4685 = vmatpush1.bf16.msra.mxu0 %v3939
    %4686 = vmatprep.subr.bf16.mxu0 0
    %4687 = vmatpush1.bf16.msra.mxu0 %v3940
    %4688 = vmatprep.subr.bf16.mxu0 0
    %4689 = vmatpush1.bf16.msra.mxu0 %v3941
    %4690 = vmatprep.subr.bf16.mxu0 0
    %4691 = vmatpush1.bf16.msra.mxu0 %v3942
    %4692 = vmatprep.subr.bf16.mxu0 0
    %4693 = vmatpush1.bf16.msra.mxu0 %v3943
    %4694 = vmatprep.subr.bf16.mxu0 0
    %4695 = vmatpush1.bf16.msra.mxu0 %v3944
    %4696 = vmatprep.subr.bf16.mxu0 0
    %4697 = vmatpush1.bf16.msra.mxu0 %v3945
    %4698 = vmatprep.subr.bf16.mxu0 0
    %4699 = vmatpush1.bf16.msra.mxu0 %v3946
    %4700 = vmatprep.subr.bf16.mxu0 0
    %4701 = vmatpush1.bf16.msra.mxu0 %v3947
    %4702 = vmatprep.subr.bf16.mxu0 0
    %4703 = vmatpush1.bf16.msra.mxu0 %v3948
    %4704 = vmatprep.subr.bf16.mxu0 0
    %4705 = vmatpush1.bf16.msra.mxu0 %v3949
    %4706 = vmatprep.subr.bf16.mxu0 0
    %4707 = vmatpush1.bf16.msra.mxu0 %v3950
    %4708 = vmatprep.subr.bf16.mxu0 0
    %4709 = vmatpush1.bf16.msra.mxu0 %v3951
    %4710 = vmatprep.mubr.bf16.mxu0 %v2689
    %4711 = vmatmul.mubr.bf16.gmra.mrb[0].mxu0 %v2505
    %v4712 = vpop.f32.mrb[0].mxu0
    %v4713 = vadd.f32 %v4616, %v4712
    %v4714 = vpop.f32.mrb[0].mxu0
    %v4715 = vpop.f32.mrb[0].mxu0
    %v4716 = vadd.f32 %v4619, %v4715
    %v4717 = vpop.f32.mrb[0].mxu0
    %4718 = vmatprep.mubr.bf16.mxu0 %v2690
    %4719 = vmatmul.mubr.bf16.gmra.mrb[0].mxu0 %v2506
    %v4720 = vpop.f32.mrb[0].mxu0
    %v4721 = vadd.f32 %v4624, %v4720
    %v4722 = vpop.f32.mrb[0].mxu0
    %v4723 = vpop.f32.mrb[0].mxu0
    %v4724 = vadd.f32 %v4627, %v4723
    %v4725 = vpop.f32.mrb[0].mxu0
    %4726 = vmatprep.mubr.bf16.mxu0 %v2691
    %4727 = vmatmul.mubr.bf16.gmra.mrb[0].mxu0 %v2507
    %v4728 = vpop.f32.mrb[0].mxu0
    %v4729 = vadd.f32 %v4632, %v4728
    %v4730 = vpop.f32.mrb[0].mxu0
    %v4731 = vpop.f32.mrb[0].mxu0
    %v4732 = vadd.f32 %v4635, %v4731
    %v4733 = vpop.f32.mrb[0].mxu0
    %4734 = vmatprep.mubr.bf16.mxu0 %v2692
    %4735 = vmatmul.mubr.bf16.gmra.mrb[0].mxu0 %v2508
    %v4736 = vpop.f32.mrb[0].mxu0
    %v4737 = vadd.f32 %v4640, %v4736
    %v4738 = vpop.f32.mrb[0].mxu0
    %v4739 = vpop.f32.mrb[0].mxu0
    %v4740 = vadd.f32 %v4643, %v4739
    %v4741 = vpop.f32.mrb[0].mxu0
    %4742 = vmatprep.mubr.bf16.mxu0 %v2693
    %4743 = vmatmul.mubr.bf16.gmra.mrb[0].mxu0 %v2509
    %v4744 = vpop.f32.mrb[0].mxu0
    %v4745 = vadd.f32 %v4648, %v4744
    %v4746 = vpop.f32.mrb[0].mxu0
    %v4747 = vpop.f32.mrb[0].mxu0
    %v4748 = vadd.f32 %v4651, %v4747
    %v4749 = vpop.f32.mrb[0].mxu0
    %4750 = vmatprep.mubr.bf16.mxu0 %v2694
    %4751 = vmatmul.mubr.bf16.gmra.mrb[0].mxu0 %v2510
    %v4752 = vpop.f32.mrb[0].mxu0
    %v4753 = vadd.f32 %v4656, %v4752
    %v4754 = vpop.f32.mrb[0].mxu0
    %v4755 = vpop.f32.mrb[0].mxu0
    %v4756 = vadd.f32 %v4659, %v4755
    %v4757 = vpop.f32.mrb[0].mxu0
    %4758 = vmatprep.mubr.bf16.mxu0 %v2695
    %4759 = vmatmul.mubr.bf16.gmra.mrb[0].mxu0 %v2511
    %v4760 = vpop.f32.mrb[0].mxu0
    %v4761 = vadd.f32 %v4664, %v4760
    %v4762 = vpop.f32.mrb[0].mxu0
    %v4763 = vpop.f32.mrb[0].mxu0
    %v4764 = vadd.f32 %v4667, %v4763
    %v4765 = vpop.f32.mrb[0].mxu0
    %4766 = vmatprep.mubr.bf16.mxu0 %v2696
    %4767 = vmatmul.mubr.bf16.gmra.mrb[0].mxu0 %v2512
    %v4768 = vpop.f32.mrb[0].mxu0
    %v4769 = vadd.f32 %v4672, %v4768
    %v4770 = vpop.f32.mrb[0].mxu0
    %v4771 = vpop.f32.mrb[0].mxu0
    %v4772 = vadd.f32 %v4675, %v4771
    %v4773 = vpop.f32.mrb[0].mxu0
    %4774 = vdwg.mxu0
    %4775 = vmatprep.subr.bf16.mxu0 0
    %4776 = vmatpush1.bf16.msra.mxu0 %v3952
    %4777 = vmatprep.subr.bf16.mxu0 0
    %4778 = vmatpush1.bf16.msra.mxu0 %v3953
    %4779 = vmatprep.subr.bf16.mxu0 0
    %4780 = vmatpush1.bf16.msra.mxu0 %v3954
    %4781 = vmatprep.subr.bf16.mxu0 0
    %4782 = vmatpush1.bf16.msra.mxu0 %v3955
    %4783 = vmatprep.subr.bf16.mxu0 0
    %4784 = vmatpush1.bf16.msra.mxu0 %v3956
    %4785 = vmatprep.subr.bf16.mxu0 0
    %4786 = vmatpush1.bf16.msra.mxu0 %v3957
    %4787 = vmatprep.subr.bf16.mxu0 0
    %4788 = vmatpush1.bf16.msra.mxu0 %v3958
    %4789 = vmatprep.subr.bf16.mxu0 0
    %4790 = vmatpush1.bf16.msra.mxu0 %v3959
    %4791 = vmatprep.subr.bf16.mxu0 0
    %4792 = vmatpush1.bf16.msra.mxu0 %v3960
    %4793 = vmatprep.subr.bf16.mxu0 0
    %4794 = vmatpush1.bf16.msra.mxu0 %v3961
    %4795 = vmatprep.subr.bf16.mxu0 0
    %4796 = vmatpush1.bf16.msra.mxu0 %v3962
    %4797 = vmatprep.subr.bf16.mxu0 0
    %4798 = vmatpush1.bf16.msra.mxu0 %v3963
    %4799 = vmatprep.subr.bf16.mxu0 0
    %4800 = vmatpush1.bf16.msra.mxu0 %v3964
    %4801 = vmatprep.subr.bf16.mxu0 0
    %4802 = vmatpush1.bf16.msra.mxu0 %v3965
    %4803 = vmatprep.subr.bf16.mxu0 0
    %4804 = vmatpush1.bf16.msra.mxu0 %v3966
    %4805 = vmatprep.subr.bf16.mxu0 0
    %4806 = vmatpush1.bf16.msra.mxu0 %v3967
    %4807 = vmatprep.mubr.bf16.mxu0 %v3057
    %4808 = vmatmul.mubr.bf16.gmra.mrb[0].mxu0 %v2873
    %v4809 = vpop.f32.mrb[0].mxu0
    %v4810 = vadd.f32 %v4713, %v4809
    %v4811 = vpop.f32.mrb[0].mxu0
    %v4812 = vpop.f32.mrb[0].mxu0
    %v4813 = vadd.f32 %v4716, %v4812
    %v4814 = vpop.f32.mrb[0].mxu0
    %4815 = vmatprep.mubr.bf16.mxu0 %v3058
    %4816 = vmatmul.mubr.bf16.gmra.mrb[0].mxu0 %v2874
    %v4817 = vpop.f32.mrb[0].mxu0
    %v4818 = vadd.f32 %v4721, %v4817
    %v4819 = vpop.f32.mrb[0].mxu0
    %v4820 = vpop.f32.mrb[0].mxu0
    %v4821 = vadd.f32 %v4724, %v4820
    %v4822 = vpop.f32.mrb[0].mxu0
    %4823 = vmatprep.mubr.bf16.mxu0 %v3059
    %4824 = vmatmul.mubr.bf16.gmra.mrb[0].mxu0 %v2875
    %v4825 = vpop.f32.mrb[0].mxu0
    %v4826 = vadd.f32 %v4729, %v4825
    %v4827 = vpop.f32.mrb[0].mxu0
    %v4828 = vpop.f32.mrb[0].mxu0
    %v4829 = vadd.f32 %v4732, %v4828
    %v4830 = vpop.f32.mrb[0].mxu0
    %4831 = vmatprep.mubr.bf16.mxu0 %v3060
    %4832 = vmatmul.mubr.bf16.gmra.mrb[0].mxu0 %v2876
    %v4833 = vpop.f32.mrb[0].mxu0
    %v4834 = vadd.f32 %v4737, %v4833
    %v4835 = vpop.f32.mrb[0].mxu0
    %v4836 = vpop.f32.mrb[0].mxu0
    %v4837 = vadd.f32 %v4740, %v4836
    %v4838 = vpop.f32.mrb[0].mxu0
    %4839 = vmatprep.mubr.bf16.mxu0 %v3061
    %4840 = vmatmul.mubr.bf16.gmra.mrb[0].mxu0 %v2877
    %v4841 = vpop.f32.mrb[0].mxu0
    %v4842 = vadd.f32 %v4745, %v4841
    %v4843 = vpop.f32.mrb[0].mxu0
    %v4844 = vpop.f32.mrb[0].mxu0
    %v4845 = vadd.f32 %v4748, %v4844
    %v4846 = vpop.f32.mrb[0].mxu0
    %4847 = vmatprep.mubr.bf16.mxu0 %v3062
    %4848 = vmatmul.mubr.bf16.gmra.mrb[0].mxu0 %v2878
    %v4849 = vpop.f32.mrb[0].mxu0
    %v4850 = vadd.f32 %v4753, %v4849
    %v4851 = vpop.f32.mrb[0].mxu0
    %v4852 = vpop.f32.mrb[0].mxu0
    %v4853 = vadd.f32 %v4756, %v4852
    %v4854 = vpop.f32.mrb[0].mxu0
    %4855 = vmatprep.mubr.bf16.mxu0 %v3063
    %4856 = vmatmul.mubr.bf16.gmra.mrb[0].mxu0 %v2879
    %v4857 = vpop.f32.mrb[0].mxu0
    %v4858 = vadd.f32 %v4761, %v4857
    %v4859 = vpop.f32.mrb[0].mxu0
    %v4860 = vpop.f32.mrb[0].mxu0
    %v4861 = vadd.f32 %v4764, %v4860
    %v4862 = vpop.f32.mrb[0].mxu0
    %4863 = vmatprep.mubr.bf16.mxu0 %v3064
    %4864 = vmatmul.mubr.bf16.gmra.mrb[0].mxu0 %v2880
    %v4865 = vpop.f32.mrb[0].mxu0
    %v4866 = vadd.f32 %v4769, %v4865
    %v4867 = vpop.f32.mrb[0].mxu0
    %v4868 = vpop.f32.mrb[0].mxu0
    %v4869 = vadd.f32 %v4772, %v4868
    %v4870 = vpop.f32.mrb[0].mxu0
    %4871 = vdwg.mxu0
    %v4872 = vmax.f32 %v4810, 0.0
    %v4873 = vmax.f32 %v4813, 0.0
    %v4874 = vmax.f32 %v4818, 0.0
    %v4875 = vmax.f32 %v4821, 0.0
    %v4876 = vmax.f32 %v4826, 0.0
    %v4877 = vmax.f32 %v4829, 0.0
    %v4878 = vmax.f32 %v4834, 0.0
    %v4879 = vmax.f32 %v4837, 0.0
    %v4880 = vmax.f32 %v4842, 0.0
    %v4881 = vmax.f32 %v4845, 0.0
    %v4882 = vmax.f32 %v4850, 0.0
    %v4883 = vmax.f32 %v4853, 0.0
    %v4884 = vmax.f32 %v4858, 0.0
    %v4885 = vmax.f32 %v4861, 0.0
    %v4886 = vmax.f32 %v4866, 0.0
    %v4887 = vmax.f32 %v4869, 0.0
    %v4888 = vld [vmem:[%s4] sm:$0xff]
    %v4889 = vld [vmem:[%s4 + $0x8] sm:$0xff]
    %v4890 = vld [vmem:[%s4 + $0x10] sm:$0xff]
    %v4891 = vld [vmem:[%s4 + $0x18] sm:$0xff]
    %v4892 = vld [vmem:[%s5] sm:$0x1]
    %v4894 = vlaneseq
    %v4895 = vshrl.u32 %v4894, 7
    %v4896 = vsub.s32 0, %v4895
    %v4897 = vrot.slane %v4892, %v4896
    %vm4899 = vcmask 261120
    %v4901 = vsel %vm4899, %v4872, 0
    %v4904 = vsel %vm4899, %v4873, 0
    %v4907 = vsel %vm4899, %v4874, 0
    %v4910 = vsel %vm4899, %v4875, 0
    %v4913 = vsel %vm4899, %v4876, 0
    %v4916 = vsel %vm4899, %v4877, 0
    %v4919 = vsel %vm4899, %v4878, 0
    %v4922 = vsel %vm4899, %v4879, 0
    %v4925 = vsel %vm4899, %v4880, 0
    %v4928 = vsel %vm4899, %v4881, 0
    %v4931 = vsel %vm4899, %v4882, 0
    %v4934 = vsel %vm4899, %v4883, 0
    %v4937 = vsel %vm4899, %v4884, 0
    %v4940 = vsel %vm4899, %v4885, 0
    %v4943 = vsel %vm4899, %v4886, 0
    %v4946 = vsel %vm4899, %v4887, 0
    %4948 = vmatprep.subr.mxu0 0.0
    %4949 = vmatpush1.msra.mxu0 %v4888
    %4950 = vmatprep.subr.mxu0 0.0
    %4951 = vmatpush1.msra.mxu0 %v4889
    %4952 = vmatprep.subr.mxu0 0.0
    %4953 = vmatpush1.msra.mxu0 %v4890
    %4954 = vmatprep.subr.mxu0 0.0
    %4955 = vmatpush1.msra.mxu0 %v4891
    %4956 = vmatprep.subr.mxu0 0.0
    %4957 = vmatpush1.msra.mxu0 0.0
    %4958 = vmatprep.subr.mxu0 0.0
    %4959 = vmatpush1.msra.mxu0 0.0
    %4960 = vmatprep.subr.mxu0 0.0
    %4961 = vmatpush1.msra.mxu0 0.0
    %4962 = vmatprep.subr.mxu0 0.0
    %4963 = vmatpush1.msra.mxu0 0.0
    %4964 = vmatprep.subr.mxu0 0.0
    %4965 = vmatpush1.msra.mxu0 0.0
    %4966 = vmatprep.subr.mxu0 0.0
    %4967 = vmatpush1.msra.mxu0 0.0
    %4968 = vmatprep.subr.mxu0 0.0
    %4969 = vmatpush1.msra.mxu0 0.0
    %4970 = vmatprep.subr.mxu0 0.0
    %4971 = vmatpush1.msra.mxu0 0.0
    %4972 = vmatprep.subr.mxu0 0.0
    %4973 = vmatpush1.msra.mxu0 0.0
    %4974 = vmatprep.subr.mxu0 0.0
    %4975 = vmatpush1.msra.mxu0 0.0
    %4976 = vmatprep.subr.mxu0 0.0
    %4977 = vmatpush1.msra.mxu0 0.0
    %4978 = vmatprep.subr.mxu0 0.0
    %4979 = vmatpush1.msra.mxu0 0.0
    %4980 = vmatprep.subr.mxu0 0.0
    %4981 = vmatpush1.msra.mxu0 0.0
    %4982 = vmatprep.subr.mxu0 0.0
    %4983 = vmatpush1.msra.mxu0 0.0
    %4984 = vmatprep.subr.mxu0 0.0
    %4985 = vmatpush1.msra.mxu0 0.0
    %4986 = vmatprep.subr.mxu0 0.0
    %4987 = vmatpush1.msra.mxu0 0.0
    %4988 = vmatprep.subr.mxu0 0.0
    %4989 = vmatpush1.msra.mxu0 0.0
    %4990 = vmatprep.subr.mxu0 0.0
    %4991 = vmatpush1.msra.mxu0 0.0
    %4992 = vmatprep.subr.mxu0 0.0
    %4993 = vmatpush1.msra.mxu0 0.0
    %4994 = vmatprep.subr.mxu0 0.0
    %4995 = vmatpush1.msra.mxu0 0.0
    %4996 = vmatprep.subr.mxu0 0.0
    %4997 = vmatpush1.msra.mxu0 0.0
    %4998 = vmatprep.subr.mxu0 0.0
    %4999 = vmatpush1.msra.mxu0 0.0
    %5000 = vmatprep.subr.mxu0 0.0
    %5001 = vmatpush1.msra.mxu0 0.0
    %5002 = vmatprep.subr.mxu0 0.0
    %5003 = vmatpush1.msra.mxu0 0.0
    %5004 = vmatprep.subr.mxu0 0.0
    %5005 = vmatpush1.msra.mxu0 0.0
    %5006 = vmatprep.subr.mxu0 0.0
    %5007 = vmatpush1.msra.mxu0 0.0
    %5008 = vmatprep.subr.mxu0 0.0
    %5009 = vmatpush1.msra.mxu0 0.0
    %5010 = vmatprep.subr.mxu0 0.0
    %5011 = vmatpush1.msra.mxu0 0.0
    %5012 = vmatprep.mubr.f32.mxu0 0.0
    %5013 = vmatmul.mubr.f32.gmra.mrb[0].mxu0 %v4901
    %v5014 = vpop.f32.mrb[0].mxu0
    %v5015 = vadd.f32 %v4897, %v5014
    %v5016 = vpop.f32.mrb[0].mxu0
    %5017 = vmatprep.mubr.f32.mxu0 0.0
    %5018 = vmatmul.mubr.f32.gmra.mrb[0].mxu0 %v4904
    %v5019 = vpop.f32.mrb[0].mxu0
    %v5020 = vadd.f32 %v4897, %v5019
    %v5021 = vpop.f32.mrb[0].mxu0
    %5022 = vmatprep.mubr.f32.mxu0 0.0
    %5023 = vmatmul.mubr.f32.gmra.mrb[0].mxu0 %v4907
    %v5024 = vpop.f32.mrb[0].mxu0
    %v5025 = vadd.f32 %v4897, %v5024
    %v5026 = vpop.f32.mrb[0].mxu0
    %5027 = vmatprep.mubr.f32.mxu0 0.0
    %5028 = vmatmul.mubr.f32.gmra.mrb[0].mxu0 %v4910
    %v5029 = vpop.f32.mrb[0].mxu0
    %v5030 = vadd.f32 %v4897, %v5029
    %v5031 = vpop.f32.mrb[0].mxu0
    %5032 = vmatprep.mubr.f32.mxu0 0.0
    %5033 = vmatmul.mubr.f32.gmra.mrb[0].mxu0 %v4913
    %v5034 = vpop.f32.mrb[0].mxu0
    %v5035 = vadd.f32 %v4897, %v5034
    %v5036 = vpop.f32.mrb[0].mxu0
    %5037 = vmatprep.mubr.f32.mxu0 0.0
    %5038 = vmatmul.mubr.f32.gmra.mrb[0].mxu0 %v4916
    %v5039 = vpop.f32.mrb[0].mxu0
    %v5040 = vadd.f32 %v4897, %v5039
    %v5041 = vpop.f32.mrb[0].mxu0
    %5042 = vmatprep.mubr.f32.mxu0 0.0
    %5043 = vmatmul.mubr.f32.gmra.mrb[0].mxu0 %v4919
    %v5044 = vpop.f32.mrb[0].mxu0
    %v5045 = vadd.f32 %v4897, %v5044
    %v5046 = vpop.f32.mrb[0].mxu0
    %5047 = vmatprep.mubr.f32.mxu0 0.0
    %5048 = vmatmul.mubr.f32.gmra.mrb[0].mxu0 %v4922
    %v5049 = vpop.f32.mrb[0].mxu0
    %v5050 = vadd.f32 %v4897, %v5049
    %v5051 = vpop.f32.mrb[0].mxu0
    %5052 = vmatprep.mubr.f32.mxu0 0.0
    %5053 = vmatmul.mubr.f32.gmra.mrb[0].mxu0 %v4925
    %v5054 = vpop.f32.mrb[0].mxu0
    %v5055 = vadd.f32 %v4897, %v5054
    %v5056 = vpop.f32.mrb[0].mxu0
    %5057 = vmatprep.mubr.f32.mxu0 0.0
    %5058 = vmatmul.mubr.f32.gmra.mrb[0].mxu0 %v4928
    %v5059 = vpop.f32.mrb[0].mxu0
    %v5060 = vadd.f32 %v4897, %v5059
    %v5061 = vpop.f32.mrb[0].mxu0
    %5062 = vmatprep.mubr.f32.mxu0 0.0
    %5063 = vmatmul.mubr.f32.gmra.mrb[0].mxu0 %v4931
    %v5064 = vpop.f32.mrb[0].mxu0
    %v5065 = vadd.f32 %v4897, %v5064
    %v5066 = vpop.f32.mrb[0].mxu0
    %5067 = vmatprep.mubr.f32.mxu0 0.0
    %5068 = vmatmul.mubr.f32.gmra.mrb[0].mxu0 %v4934
    %v5069 = vpop.f32.mrb[0].mxu0
    %v5070 = vadd.f32 %v4897, %v5069
    %v5071 = vpop.f32.mrb[0].mxu0
    %5072 = vmatprep.mubr.f32.mxu0 0.0
    %5073 = vmatmul.mubr.f32.gmra.mrb[0].mxu0 %v4937
    %v5074 = vpop.f32.mrb[0].mxu0
    %v5075 = vadd.f32 %v4897, %v5074
    %v5076 = vpop.f32.mrb[0].mxu0
    %5077 = vmatprep.mubr.f32.mxu0 0.0
    %5078 = vmatmul.mubr.f32.gmra.mrb[0].mxu0 %v4940
    %v5079 = vpop.f32.mrb[0].mxu0
    %v5080 = vadd.f32 %v4897, %v5079
    %v5081 = vpop.f32.mrb[0].mxu0
    %5082 = vmatprep.mubr.f32.mxu0 0.0
    %5083 = vmatmul.mubr.f32.gmra.mrb[0].mxu0 %v4943
    %v5084 = vpop.f32.mrb[0].mxu0
    %v5085 = vadd.f32 %v4897, %v5084
    %v5086 = vpop.f32.mrb[0].mxu0
    %5087 = vmatprep.mubr.f32.mxu0 0.0
    %5088 = vmatmul.mubr.f32.gmra.mrb[0].mxu0 %v4946
    %v5089 = vpop.f32.mrb[0].mxu0
    %v5090 = vadd.f32 %v4897, %v5089
    %v5091 = vpop.f32.mrb[0].mxu0
    %5092 = vdwg.mxu0
    %v5093 = vmax.f32 %v5015, 0.0
    %v5094 = vmax.f32 %v5020, 0.0
    %v5095 = vmax.f32 %v5025, 0.0
    %v5096 = vmax.f32 %v5030, 0.0
    %v5097 = vmax.f32 %v5035, 0.0
    %v5098 = vmax.f32 %v5040, 0.0
    %v5099 = vmax.f32 %v5045, 0.0
    %v5100 = vmax.f32 %v5050, 0.0
    %v5101 = vmax.f32 %v5055, 0.0
    %v5102 = vmax.f32 %v5060, 0.0
    %v5103 = vmax.f32 %v5065, 0.0
    %v5104 = vmax.f32 %v5070, 0.0
    %v5105 = vmax.f32 %v5075, 0.0
    %v5106 = vmax.f32 %v5080, 0.0
    %v5107 = vmax.f32 %v5085, 0.0
    %v5108 = vmax.f32 %v5090, 0.0
    %v5109 = vlaneseq
    %v5110 = vshrl.u32 %v5109, 7
    %v5111 = vld [vmem:[%s58] sm:$0x1]
    %v5112 = vlaneseq
    %v5113 = vshrl.u32 %v5112, 7
    %v5114 = vsub.s32 0, %v5113
    %v5115 = vrot.slane %v5111, %v5114
    %vm5116 = vcmp.eq.s32.totalorder %v5110, %v5115
    %v5117 = vsel %vm5116, 1, 0
    %v5118 = vcvt.s32.f32 %v5117
    %5119 = vmatprep.subr.mxu0 0.0
    %5120 = vmatpush1.msra.mxu0 %v5093
    %5121 = vmatprep.subr.mxu0 0.0
    %5122 = vmatpush1.msra.mxu0 %v5094
    %5123 = vmatprep.subr.mxu0 0.0
    %5124 = vmatpush1.msra.mxu0 %v5095
    %5125 = vmatprep.subr.mxu0 0.0
    %5126 = vmatpush1.msra.mxu0 %v5096
    %5127 = vmatprep.subr.mxu0 0.0
    %5128 = vmatpush1.msra.mxu0 %v5097
    %5129 = vmatprep.subr.mxu0 0.0
    %5130 = vmatpush1.msra.mxu0 %v5098
    %5131 = vmatprep.subr.mxu0 0.0
    %5132 = vmatpush1.msra.mxu0 %v5099
    %5133 = vmatprep.subr.mxu0 0.0
    %5134 = vmatpush1.msra.mxu0 %v5100
    %5135 = vmatprep.subr.mxu0 0.0
    %5136 = vmatpush1.msra.mxu0 %v5101
    %5137 = vmatprep.subr.mxu0 0.0
    %5138 = vmatpush1.msra.mxu0 %v5102
    %5139 = vmatprep.subr.mxu0 0.0
    %5140 = vmatpush1.msra.mxu0 %v5103
    %5141 = vmatprep.subr.mxu0 0.0
    %5142 = vmatpush1.msra.mxu0 %v5104
    %5143 = vmatprep.subr.mxu0 0.0
    %5144 = vmatpush1.msra.mxu0 %v5105
    %5145 = vmatprep.subr.mxu0 0.0
    %5146 = vmatpush1.msra.mxu0 %v5106
    %5147 = vmatprep.subr.mxu0 0.0
    %5148 = vmatpush1.msra.mxu0 %v5107
    %5149 = vmatprep.subr.mxu0 0.0
    %5150 = vmatpush1.msra.mxu0 %v5108
    %5151 = vmatprep.subr.mxu0 0.0
    %5152 = vmatpush1.msra.mxu0 0.0
    %5153 = vmatprep.subr.mxu0 0.0
    %5154 = vmatpush1.msra.mxu0 0.0
    %5155 = vmatprep.subr.mxu0 0.0
    %5156 = vmatpush1.msra.mxu0 0.0
    %5157 = vmatprep.subr.mxu0 0.0
    %5158 = vmatpush1.msra.mxu0 0.0
    %5159 = vmatprep.subr.mxu0 0.0
    %5160 = vmatpush1.msra.mxu0 0.0
    %5161 = vmatprep.subr.mxu0 0.0
    %5162 = vmatpush1.msra.mxu0 0.0
    %5163 = vmatprep.subr.mxu0 0.0
    %5164 = vmatpush1.msra.mxu0 0.0
    %5165 = vmatprep.subr.mxu0 0.0
    %5166 = vmatpush1.msra.mxu0 0.0
    %5167 = vmatprep.subr.mxu0 0.0
    %5168 = vmatpush1.msra.mxu0 0.0
    %5169 = vmatprep.subr.mxu0 0.0
    %5170 = vmatpush1.msra.mxu0 0.0
    %5171 = vmatprep.subr.mxu0 0.0
    %5172 = vmatpush1.msra.mxu0 0.0
    %5173 = vmatprep.subr.mxu0 0.0
    %5174 = vmatpush1.msra.mxu0 0.0
    %5175 = vmatprep.subr.mxu0 0.0
    %5176 = vmatpush1.msra.mxu0 0.0
    %5177 = vmatprep.subr.mxu0 0.0
    %5178 = vmatpush1.msra.mxu0 0.0
    %5179 = vmatprep.subr.mxu0 0.0
    %5180 = vmatpush1.msra.mxu0 0.0
    %5181 = vmatprep.subr.mxu0 0.0
    %5182 = vmatpush1.msra.mxu0 0.0
    %5183 = vmatprep.mubr.f32.mxu0 0.0
    %5184 = vmatmul.mubr.f32.gmra.mrb[0].mxu0 %v5118
    %v5185 = vpop.f32.mrb[0].mxu0
    %v5186 = vadd.f32 0.0, %v5185
    %v5187 = vpop.f32.mrb[0].mxu0
    %5188 = vdwg.mxu0
    %v5189 = vld [vmem:[#allocation2] sm:$0x3]
    %v5190 = vadd.f32 %v5189, %v5186
    %vm5191 = vcmask 254976
    %5192 = vst.msk [vmem:[#allocation2] sm:$0x3] %vm5191, %v5190
    // Predicated region
    $region30: #{tpu_custom_call.1} parent=1 // pred_check
      _
    $region31: #{tpu_custom_call.1} parent=1 // pred_check_branch
      %5194 = sbr.rel (0) target = $region33
    $region32: #{tpu_custom_call.1} parent=1 // pred_region
      %s5196 = ssub.s32 32, 32
      %5197 = vsyncadd [#allocation3], %s5196
      %s5199 = sshll.u32 [#allocation2], 4
      %s5200 = int_to_ptr.vmem [resolvable:$true] %s5199
      %5202 = dma.vmem_to_hbm [thread:$0]  %s5200, 32, %s6, [#allocation3]
    $region33: #{tpu_custom_call.1} parent=1 // pred_fallthru
      _
    // Predicated region
    $region34: #{tpu_custom_call.1} parent=1 // pred_check
      _
    $region35: #{tpu_custom_call.1} parent=1 // pred_check_branch
      %5204 = sbr.rel (0) target = $region37
    $region36: #{tpu_custom_call.1} parent=1 // pred_region
      %5205 = dma.done [#allocation3], 32
    $region37: #{tpu_custom_call.1} parent=1 // pred_fallthru
      _
    %5206 = vsyncpa [#allocation3], 1

</llo_original>
